<compile_context>
chip_gen: v5e
topology: v5e:2x2
jax: 0.10.0
libtpu: 0.0.40
codegen_flags: <defaults>
</compile_context>

<pallas_src>
import jax
import jax.numpy as jnp
from jax import lax
from jax.experimental import pallas as pl
from jax.experimental.pallas import tpu as pltpu


def _round_up(x, m):
    return ((x + m - 1) // m) * m


def _pick_block_b(B, max_bb=4):
    """Largest divisor of B (<= max_bb), preferring an even number of grid steps."""
    cands = [d for d in range(1, min(B, max_bb) + 1) if B % d == 0]
    even = [d for d in cands if (B // d) % 2 == 0]
    return max(even) if even else max(cands)


# ----------------------------------------------------------------------------
# Fused kernel
# ----------------------------------------------------------------------------
def make_kernel(W, HWp, bblk, cinp, cout, ncls):
    """Activations are channel-major (C, HWp): flat spatial on lanes (lane-dense)."""

    def build_taps(src, m_ref, scr_ref, step, rows):
        # src: (rows, HWp).  Writes the 9 masked/rolled taps into scr_ref
        # (9*rows, HWp) at aligned static sublane offsets (rows is 8 or 16).
        for dy in range(3):
            for dx in range(3):
                t = dy * 3 + dx
                r = -((dy - 1) * W + (dx - 1)) * step          # lane shift
                tap = src if r == 0 else jnp.roll(src, r, axis=1)
                if t != 4:                                     # centre tap: mask is all-ones
                    tap = tap * m_ref[t]                       # zero-padding via border mask
                scr_ref[t * rows:(t + 1) * rows, :] = tap

    def conv_bn_relu(w_ref, scr_ref, shift_ref):
        # One wide-K bf16 matmul per layer (f32 accumulation on the MXU).
        acc = jnp.dot(w_ref[...], scr_ref[...].astype(jnp.bfloat16),
                      preferred_element_type=jnp.float32)
        return jnp.maximum(acc + shift_ref[...], 0.0)          # folded BN shift + ReLU

    def pool2x2(y, step):
        # After this, lanes whose (h, w) are multiples of 2*step hold the max of
        # their 2x2 window on the (step-strided) logical grid.
        m = jnp.maximum(y, jnp.roll(y, -step, axis=1))
        return jnp.maximum(m, jnp.roll(m, -step * W, axis=1))

    def kernel(x_ref, w1_ref, m1_ref, s1_ref, w2_ref, m2_ref, s2_ref,
               gfc_ref, fcb_ref, o_ref, tap1_scr, tap2_scr):
        lane = lax.broadcasted_iota(jnp.int32, (1, ncls), 1)
        for b in range(bblk):                                  # unrolled batch block
            x = x_ref[b]                                       # (cinp, HWp)
            # ----------------------------- layer 1 -----------------------------
            build_taps(x, m1_ref, tap1_scr, 1, cinp)
            y1 = conv_bn_relu(w1_ref, tap1_scr, s1_ref)        # (cout, HWp)
            p1 = pool2x2(y1, 1)                                # valid at even/even lanes
            # ------------------- layer 2 (uncompacted grid) --------------------
            build_taps(p1, m2_ref, tap2_scr, 2, cout)          # stride-2 taps
            y2 = conv_bn_relu(w2_ref, tap2_scr, s2_ref)        # (cout, HWp)
            p2 = pool2x2(y2, 2)                                # valid at h%4==0, w%4==0
            # --------------------------- FC (VPU/XLU) ---------------------------
            # gfc already contains the pool-2 lane selection and torch's (C,H,W)
            # flatten order; invalid/pad lanes are zero.
            out = fcb_ref[...]                                 # (1, ncls)
            for n in range(ncls):
                prod = p2 * gfc_ref[n]                         # (cout, HWp)
                s = jnp.sum(jnp.sum(prod, axis=1, keepdims=True),
                            axis=0, keepdims=True)             # (1, 1)
                out = out + jnp.where(lane == n, s, 0.0)
            o_ref[b] = out
    return kernel


def test_conv_model(x_nchw, params, block_b=None):
    """x_nchw: (B, Cin, H, W) float32 (PyTorch layout) -> (B, num_classes)."""
    B, Cin, H, W = x_nchw.shape
    Cout, K1 = params["w1"].shape
    cinp = K1 // 9
    HWp = params["mask1"].shape[-1]
    N = params["fcb"].shape[-1]
    bblk = block_b if block_b is not None else _pick_block_b(B)
    assert B % bblk == 0

    # NCHW row-major reshape is free; tiny zero-pad makes channels a sublane
    # multiple (3 -> 8) and the flat spatial axis a lane multiple (784 -> 896).
    x = x_nchw.reshape(B, Cin, H * W)
    x = jnp.pad(x, ((0, 0), (0, cinp - Cin), (0, HWp - H * W)))

    kernel = make_kernel(W, HWp, bblk, cinp, Cout, N)
    out = pl.pallas_call(
        kernel,
        out_shape=jax.ShapeDtypeStruct((B, 1, N), jnp.float32),
        grid=(B // bblk,),
        in_specs=[
            pl.BlockSpec((bblk, cinp, HWp), lambda g: (g, 0, 0)),   # x
            pl.BlockSpec((Cout, K1), lambda g: (0, 0)),             # w1 (bf16, BN folded)
            pl.BlockSpec((9, 1, HWp), lambda g: (0, 0, 0)),         # mask1 (stride-1)
            pl.BlockSpec((Cout, 1), lambda g: (0, 0)),              # shift1
            pl.BlockSpec((Cout, 9 * Cout), lambda g: (0, 0)),       # w2 (bf16, BN folded)
            pl.BlockSpec((9, 1, HWp), lambda g: (0, 0, 0)),         # mask2 (stride-2)
            pl.BlockSpec((Cout, 1), lambda g: (0, 0)),              # shift2
            pl.BlockSpec((N, Cout, HWp), lambda g: (0, 0, 0)),      # FC weight (folded)
            pl.BlockSpec((1, N), lambda g: (0, 0)),                 # FC bias
        ],
        out_specs=pl.BlockSpec((bblk, 1, N), lambda g: (g, 0, 0)),
        scratch_shapes=[
            pltpu.VMEM((9 * cinp, HWp), jnp.float32),               # layer-1 tap stack
            pltpu.VMEM((9 * Cout, HWp), jnp.float32),               # layer-2 tap stack
        ],
        compiler_params=pltpu.CompilerParams(
            dimension_semantics=("parallel",)),   # batch blocks across TCs on v7x
    )(x, params["w1"], params["mask1"], params["s1"],
      params["w2"], params["mask2"], params["s2"],
      params["gfc"], params["fcb"])
    return out.reshape(B, N)


# ----------------------------------------------------------------------------
# One-time parameter preparation (constant folding; no per-call work)
# ----------------------------------------------------------------------------
def prepare_params(raw, H=28, W=28, eps=1e-5):
    Cout, Cin = raw["w1"].shape[0], raw["w1"].shape[1]
    N = raw["fc_b"].shape[0]
    HW = H * W
    HWp = _round_up(HW, 128)
    cinp = _round_up(Cin, 8)
    H4, W4 = H // 4, W // 4

    def fold(w, b, g, be, m, v, cpad):
        scale = g / jnp.sqrt(v + eps)                        # (Cout,)
        ws = w * scale[:, None, None, None]                  # (Co, Ci, 3, 3)
        Co, Ci = ws.shape[:2]
        wt = jnp.transpose(ws, (0, 2, 3, 1)).reshape(Co, 9, Ci)   # tap t = dy*3+dx
        wt = jnp.pad(wt, ((0, 0), (0, 0), (0, cpad - Ci)))        # pad Cin to sublane mult.
        wk = wt.reshape(Co, 9 * cpad).astype(jnp.bfloat16)        # (Co, 9*cpad) bf16
        shift = (scale * (b - m) + be).reshape(-1, 1).astype(jnp.float32)
        return wk, shift

    def conv_masks(step):
        # 0/1 border masks on the padded flat lane grid; also zero the pad lanes.
        p = jnp.arange(HWp)
        hh, ww = p // W, p % W
        valid = p < HW
        ms = []
        for dy in range(3):
            for dx in range(3):
                oy, ox = (dy - 1) * step, (dx - 1) * step
                ms.append(valid & (hh + oy >= 0) & (hh + oy < H) &
                          (ww + ox >= 0) & (ww + ox < W))
        return jnp.stack(ms).astype(jnp.float32).reshape(9, 1, HWp)

    w1, s1 = fold(raw["w1"], raw["b1"], raw["g1"], raw["be1"], raw["m1"], raw["v1"], cinp)
    w2, s2 = fold(raw["w2"], raw["b2"], raw["g2"], raw["be2"], raw["m2"], raw["v2"], Cout)

    # FC weight with the pool-2 lane selection (valid lanes: h%4==0 and w%4==0)
    # and torch's (C, H, W) flatten order folded in; zero everywhere else.
    wr = raw["fc_w"].reshape(Cout, H4 * W4, N)               # feature = c*49 + h4*7 + w4
    h4, w4 = jnp.meshgrid(jnp.arange(H4), jnp.arange(W4), indexing="ij")
    pidx = (4 * h4 * W + 4 * w4).reshape(-1)                 # physical lanes of pool-2 outputs
    gfc = jnp.zeros((N, Cout, HWp), jnp.float32)
    gfc = gfc.at[:, :, pidx].set(jnp.transpose(wr, (2, 0, 1)))

    return {
        "w1": w1, "s1": s1, "mask1": conv_masks(1),
        "w2": w2, "s2": s2, "mask2": conv_masks(2),
        "gfc": gfc, "fcb": raw["fc_b"].reshape(1, N).astype(jnp.float32),
    }


def init_params(key, in_channels=3, out_channels=16, num_classes=10):
    ks = jax.random.split(key, 6)
    oc, ic = out_channels, in_channels
    return {
        # conv weights in PyTorch OIHW layout
        "w1": 0.1 * jax.random.normal(ks[0], (oc, ic, 3, 3), jnp.float32),
        "b1": 0.1 * jax.random.normal(ks[1], (oc,), jnp.float32),
        "w2": 0.1 * jax.random.normal(ks[2], (oc, oc, 3, 3), jnp.float32),
        "b2": 0.1 * jax.random.normal(ks[3], (oc,), jnp.float32),
        # BatchNorm params at PyTorch defaults (eval mode)
        "g1": jnp.ones((oc,), jnp.float32), "be1": jnp.zeros((oc,), jnp.float32),
        "m1": jnp.zeros((oc,), jnp.float32), "v1": jnp.ones((oc,), jnp.float32),
        "g2": jnp.ones((oc,), jnp.float32), "be2": jnp.zeros((oc,), jnp.float32),
        "m2": jnp.zeros((oc,), jnp.float32), "v2": jnp.ones((oc,), jnp.float32),
        # fc weight in (in_features, out_features) layout, in_features indexed in
        # torch's (C, H, W) flatten order
        "fc_w": 0.05 * jax.random.normal(ks[4], (oc * 7 * 7, num_classes), jnp.float32),
        "fc_b": 0.05 * jax.random.normal(ks[5], (num_classes,), jnp.float32),
    }


# ----------------------------------------------------------------------------
# Pure-JAX reference (mirrors the PyTorch module, eval-mode BN)
# ----------------------------------------------------------------------------
def reference_model(x, raw, eps=1e-5):
    def block(x, w, b, g, be, m, v):
        y = jax.lax.conv_general_dilated(
            x, w, window_strides=(1, 1), padding=((1, 1), (1, 1)),
            dimension_numbers=("NCHW", "OIHW", "NCHW"),
            precision=jax.lax.Precision.HIGHEST)
        y = y + b[None, :, None, None]
        scale = (g / jnp.sqrt(v + eps))[None, :, None, None]
        y = (y - m[None, :, None, None]) * scale + be[None, :, None, None]
        y = jnp.maximum(y, 0.0)
        return jax.lax.reduce_window(y, -jnp.inf, jax.lax.max,
                                     (1, 1, 2, 2), (1, 1, 2, 2), "VALID")

    y = block(x, raw["w1"], raw["b1"], raw["g1"], raw["be1"], raw["m1"], raw["v1"])
    y = block(y, raw["w2"], raw["b2"], raw["g2"], raw["be2"], raw["m2"], raw["v2"])
    return y.reshape(y.shape[0], -1) @ raw["fc_w"] + raw["fc_b"]


if __name__ == "__main__":
    key = jax.random.PRNGKey(0)
    k_x, k_p = jax.random.split(key)
    # fc expects 16*7*7 features => 28x28 spatial input (two 2x2 pools).
    x = jax.random.normal(k_x, (2, 3, 28, 28), jnp.float32)
    raw = init_params(k_p)
    params = prepare_params(raw, H=28, W=28)      # one-time constant folding

    out = jax.jit(test_conv_model)(x, params)
    out = jax.block_until_ready(out)
    assert out.shape == (2, 10), out.shape

    ref = reference_model(x, raw)
    err = float(jnp.max(jnp.abs(out - ref)))
    # convs run single-pass bf16 on the MXU (f32 accumulation) -> looser tol
    assert jnp.allclose(out, ref, atol=5e-2, rtol=2e-2), f"max abs err = {err}"
    print("KERNEL_OK")
</pallas_src>

<mosaic_0001>
module attributes {stable_mosaic.version = 11 : i64} {
  func.func @kernel(%arg0: i32, %arg1: memref<1x8x896xf32, #tpu.memory_space<vmem>>, %arg2: memref<16x72xbf16, #tpu.memory_space<vmem>>, %arg3: memref<9x1x896xf32, #tpu.memory_space<vmem>>, %arg4: memref<16x1xf32, #tpu.memory_space<vmem>>, %arg5: memref<16x144xbf16, #tpu.memory_space<vmem>>, %arg6: memref<9x1x896xf32, #tpu.memory_space<vmem>>, %arg7: memref<16x1xf32, #tpu.memory_space<vmem>>, %arg8: memref<10x16x896xf32, #tpu.memory_space<vmem>>, %arg9: memref<1x10xf32, #tpu.memory_space<vmem>>, %arg10: memref<1x1x10xf32, #tpu.memory_space<vmem>>, %arg11: memref<72x896xf32, #tpu.memory_space<vmem>>, %arg12: memref<144x896xf32, #tpu.memory_space<vmem>>) attributes {dimension_semantics = [#tpu.dimension_semantics<parallel>], iteration_bounds = array<i64: 2>, scalar_prefetch = 0 : i64, scratch_operands = 2 : i64, tpu.core_type = #tpu.core_type<tc>, window_params = [{transform_indices = @transform_0, window_bounds = array<i64: 1, 8, 896>}, {pipeline_mode = #tpu.pipeline_mode<synchronous>, transform_indices = @transform_1, window_bounds = array<i64: 16, 72>}, {pipeline_mode = #tpu.pipeline_mode<synchronous>, transform_indices = @transform_2, window_bounds = array<i64: 9, 1, 896>}, {pipeline_mode = #tpu.pipeline_mode<synchronous>, transform_indices = @transform_3, window_bounds = array<i64: 16, 1>}, {pipeline_mode = #tpu.pipeline_mode<synchronous>, transform_indices = @transform_4, window_bounds = array<i64: 16, 144>}, {pipeline_mode = #tpu.pipeline_mode<synchronous>, transform_indices = @transform_5, window_bounds = array<i64: 9, 1, 896>}, {pipeline_mode = #tpu.pipeline_mode<synchronous>, transform_indices = @transform_6, window_bounds = array<i64: 16, 1>}, {pipeline_mode = #tpu.pipeline_mode<synchronous>, transform_indices = @transform_7, window_bounds = array<i64: 10, 16, 896>}, {pipeline_mode = #tpu.pipeline_mode<synchronous>, transform_indices = @transform_8, window_bounds = array<i64: 1, 10>}, {transform_indices = @transform_9, window_bounds = array<i64: 1, 1, 10>}]} {
    %0 = tpu.iota {dimensions = array<i32: 1>} : vector<1x10xi32>
    %c0 = arith.constant 0 : index
    %c0_0 = arith.constant 0 : index
    %c0_1 = arith.constant 0 : index
    %1 = vector.load %arg1[%c0, %c0_0, %c0_1] : memref<1x8x896xf32, #tpu.memory_space<vmem>>, vector<1x8x896xf32>
    %2 = vector.shape_cast %1 : vector<1x8x896xf32> to vector<8x896xf32>
    %3 = vector.extract_strided_slice %2 {offsets = [0, 867], sizes = [8, 29], strides = [1, 1]} : vector<8x896xf32> to vector<8x29xf32>
    %4 = vector.extract_strided_slice %2 {offsets = [0, 0], sizes = [8, 867], strides = [1, 1]} : vector<8x896xf32> to vector<8x867xf32>
    %5 = tpu.concatenate %3, %4 in 1 : vector<8x29xf32>, vector<8x867xf32> -> vector<8x896xf32>
    %c0_2 = arith.constant 0 : index
    %c0_3 = arith.constant 0 : index
    %c0_4 = arith.constant 0 : index
    %6 = vector.load %arg3[%c0_2, %c0_3, %c0_4] : memref<9x1x896xf32, #tpu.memory_space<vmem>>, vector<1x1x896xf32>
    %7 = vector.shape_cast %6 : vector<1x1x896xf32> to vector<1x896xf32>
    %8 = vector.broadcast %7 : vector<1x896xf32> to vector<8x896xf32>
    %9 = arith.mulf %5, %8 : vector<8x896xf32>
    %c0_5 = arith.constant 0 : index
    %c0_6 = arith.constant 0 : index
    %10 = vector.load %arg11[%c0_5, %c0_6] : memref<72x896xf32, #tpu.memory_space<vmem>>, vector<8x896xf32>
    tpu.vector_store %arg11[%c0_5, %c0_6], %9 {strides = array<i32>} : memref<72x896xf32, #tpu.memory_space<vmem>>, vector<8x896xf32>,
    %11 = vector.extract_strided_slice %2 {offsets = [0, 868], sizes = [8, 28], strides = [1, 1]} : vector<8x896xf32> to vector<8x28xf32>
    %12 = vector.extract_strided_slice %2 {offsets = [0, 0], sizes = [8, 868], strides = [1, 1]} : vector<8x896xf32> to vector<8x868xf32>
    %13 = tpu.concatenate %11, %12 in 1 : vector<8x28xf32>, vector<8x868xf32> -> vector<8x896xf32>
    %c1 = arith.constant 1 : index
    %c0_7 = arith.constant 0 : index
    %c0_8 = arith.constant 0 : index
    %14 = vector.load %arg3[%c1, %c0_7, %c0_8] : memref<9x1x896xf32, #tpu.memory_space<vmem>>, vector<1x1x896xf32>
    %15 = vector.shape_cast %14 : vector<1x1x896xf32> to vector<1x896xf32>
    %16 = vector.broadcast %15 : vector<1x896xf32> to vector<8x896xf32>
    %17 = arith.mulf %13, %16 : vector<8x896xf32>
    %c8 = arith.constant 8 : index
    %c0_9 = arith.constant 0 : index
    %18 = vector.load %arg11[%c8, %c0_9] : memref<72x896xf32, #tpu.memory_space<vmem>>, vector<8x896xf32>
    tpu.vector_store %arg11[%c8, %c0_9], %17 {strides = array<i32>} : memref<72x896xf32, #tpu.memory_space<vmem>>, vector<8x896xf32>,
    %19 = vector.extract_strided_slice %2 {offsets = [0, 869], sizes = [8, 27], strides = [1, 1]} : vector<8x896xf32> to vector<8x27xf32>
    %20 = vector.extract_strided_slice %2 {offsets = [0, 0], sizes = [8, 869], strides = [1, 1]} : vector<8x896xf32> to vector<8x869xf32>
    %21 = tpu.concatenate %19, %20 in 1 : vector<8x27xf32>, vector<8x869xf32> -> vector<8x896xf32>
    %c2 = arith.constant 2 : index
    %c0_10 = arith.constant 0 : index
    %c0_11 = arith.constant 0 : index
    %22 = vector.load %arg3[%c2, %c0_10, %c0_11] : memref<9x1x896xf32, #tpu.memory_space<vmem>>, vector<1x1x896xf32>
    %23 = vector.shape_cast %22 : vector<1x1x896xf32> to vector<1x896xf32>
    %24 = vector.broadcast %23 : vector<1x896xf32> to vector<8x896xf32>
    %25 = arith.mulf %21, %24 : vector<8x896xf32>
    %c16 = arith.constant 16 : index
    %c0_12 = arith.constant 0 : index
    %26 = vector.load %arg11[%c16, %c0_12] : memref<72x896xf32, #tpu.memory_space<vmem>>, vector<8x896xf32>
    tpu.vector_store %arg11[%c16, %c0_12], %25 {strides = array<i32>} : memref<72x896xf32, #tpu.memory_space<vmem>>, vector<8x896xf32>,
    %27 = vector.extract_strided_slice %2 {offsets = [0, 895], sizes = [8, 1], strides = [1, 1]} : vector<8x896xf32> to vector<8x1xf32>
    %28 = vector.extract_strided_slice %2 {offsets = [0, 0], sizes = [8, 895], strides = [1, 1]} : vector<8x896xf32> to vector<8x895xf32>
    %29 = tpu.concatenate %27, %28 in 1 : vector<8x1xf32>, vector<8x895xf32> -> vector<8x896xf32>
    %c3 = arith.constant 3 : index
    %c0_13 = arith.constant 0 : index
    %c0_14 = arith.constant 0 : index
    %30 = vector.load %arg3[%c3, %c0_13, %c0_14] : memref<9x1x896xf32, #tpu.memory_space<vmem>>, vector<1x1x896xf32>
    %31 = vector.shape_cast %30 : vector<1x1x896xf32> to vector<1x896xf32>
    %32 = vector.broadcast %31 : vector<1x896xf32> to vector<8x896xf32>
    %33 = arith.mulf %29, %32 : vector<8x896xf32>
    %c24 = arith.constant 24 : index
    %c0_15 = arith.constant 0 : index
    %34 = vector.load %arg11[%c24, %c0_15] : memref<72x896xf32, #tpu.memory_space<vmem>>, vector<8x896xf32>
    tpu.vector_store %arg11[%c24, %c0_15], %33 {strides = array<i32>} : memref<72x896xf32, #tpu.memory_space<vmem>>, vector<8x896xf32>,
    %c32 = arith.constant 32 : index
    %c0_16 = arith.constant 0 : index
    %35 = vector.load %arg11[%c32, %c0_16] : memref<72x896xf32, #tpu.memory_space<vmem>>, vector<8x896xf32>
    tpu.vector_store %arg11[%c32, %c0_16], %2 {strides = array<i32>} : memref<72x896xf32, #tpu.memory_space<vmem>>, vector<8x896xf32>,
    %36 = vector.extract_strided_slice %2 {offsets = [0, 1], sizes = [8, 895], strides = [1, 1]} : vector<8x896xf32> to vector<8x895xf32>
    %37 = vector.extract_strided_slice %2 {offsets = [0, 0], sizes = [8, 1], strides = [1, 1]} : vector<8x896xf32> to vector<8x1xf32>
    %38 = tpu.concatenate %36, %37 in 1 : vector<8x895xf32>, vector<8x1xf32> -> vector<8x896xf32>
    %c5 = arith.constant 5 : index
    %c0_17 = arith.constant 0 : index
    %c0_18 = arith.constant 0 : index
    %39 = vector.load %arg3[%c5, %c0_17, %c0_18] : memref<9x1x896xf32, #tpu.memory_space<vmem>>, vector<1x1x896xf32>
    %40 = vector.shape_cast %39 : vector<1x1x896xf32> to vector<1x896xf32>
    %41 = vector.broadcast %40 : vector<1x896xf32> to vector<8x896xf32>
    %42 = arith.mulf %38, %41 : vector<8x896xf32>
    %c40 = arith.constant 40 : index
    %c0_19 = arith.constant 0 : index
    %43 = vector.load %arg11[%c40, %c0_19] : memref<72x896xf32, #tpu.memory_space<vmem>>, vector<8x896xf32>
    tpu.vector_store %arg11[%c40, %c0_19], %42 {strides = array<i32>} : memref<72x896xf32, #tpu.memory_space<vmem>>, vector<8x896xf32>,
    %44 = vector.extract_strided_slice %2 {offsets = [0, 27], sizes = [8, 869], strides = [1, 1]} : vector<8x896xf32> to vector<8x869xf32>
    %45 = vector.extract_strided_slice %2 {offsets = [0, 0], sizes = [8, 27], strides = [1, 1]} : vector<8x896xf32> to vector<8x27xf32>
    %46 = tpu.concatenate %44, %45 in 1 : vector<8x869xf32>, vector<8x27xf32> -> vector<8x896xf32>
    %c6 = arith.constant 6 : index
    %c0_20 = arith.constant 0 : index
    %c0_21 = arith.constant 0 : index
    %47 = vector.load %arg3[%c6, %c0_20, %c0_21] : memref<9x1x896xf32, #tpu.memory_space<vmem>>, vector<1x1x896xf32>
    %48 = vector.shape_cast %47 : vector<1x1x896xf32> to vector<1x896xf32>
    %49 = vector.broadcast %48 : vector<1x896xf32> to vector<8x896xf32>
    %50 = arith.mulf %46, %49 : vector<8x896xf32>
    %c48 = arith.constant 48 : index
    %c0_22 = arith.constant 0 : index
    %51 = vector.load %arg11[%c48, %c0_22] : memref<72x896xf32, #tpu.memory_space<vmem>>, vector<8x896xf32>
    tpu.vector_store %arg11[%c48, %c0_22], %50 {strides = array<i32>} : memref<72x896xf32, #tpu.memory_space<vmem>>, vector<8x896xf32>,
    %52 = vector.extract_strided_slice %2 {offsets = [0, 28], sizes = [8, 868], strides = [1, 1]} : vector<8x896xf32> to vector<8x868xf32>
    %53 = vector.extract_strided_slice %2 {offsets = [0, 0], sizes = [8, 28], strides = [1, 1]} : vector<8x896xf32> to vector<8x28xf32>
    %54 = tpu.concatenate %52, %53 in 1 : vector<8x868xf32>, vector<8x28xf32> -> vector<8x896xf32>
    %c7 = arith.constant 7 : index
    %c0_23 = arith.constant 0 : index
    %c0_24 = arith.constant 0 : index
    %55 = vector.load %arg3[%c7, %c0_23, %c0_24] : memref<9x1x896xf32, #tpu.memory_space<vmem>>, vector<1x1x896xf32>
    %56 = vector.shape_cast %55 : vector<1x1x896xf32> to vector<1x896xf32>
    %57 = vector.broadcast %56 : vector<1x896xf32> to vector<8x896xf32>
    %58 = arith.mulf %54, %57 : vector<8x896xf32>
    %c56 = arith.constant 56 : index
    %c0_25 = arith.constant 0 : index
    %59 = vector.load %arg11[%c56, %c0_25] : memref<72x896xf32, #tpu.memory_space<vmem>>, vector<8x896xf32>
    tpu.vector_store %arg11[%c56, %c0_25], %58 {strides = array<i32>} : memref<72x896xf32, #tpu.memory_space<vmem>>, vector<8x896xf32>,
    %60 = vector.extract_strided_slice %2 {offsets = [0, 29], sizes = [8, 867], strides = [1, 1]} : vector<8x896xf32> to vector<8x867xf32>
    %61 = vector.extract_strided_slice %2 {offsets = [0, 0], sizes = [8, 29], strides = [1, 1]} : vector<8x896xf32> to vector<8x29xf32>
    %62 = tpu.concatenate %60, %61 in 1 : vector<8x867xf32>, vector<8x29xf32> -> vector<8x896xf32>
    %c8_26 = arith.constant 8 : index
    %c0_27 = arith.constant 0 : index
    %c0_28 = arith.constant 0 : index
    %63 = vector.load %arg3[%c8_26, %c0_27, %c0_28] : memref<9x1x896xf32, #tpu.memory_space<vmem>>, vector<1x1x896xf32>
    %64 = vector.shape_cast %63 : vector<1x1x896xf32> to vector<1x896xf32>
    %65 = vector.broadcast %64 : vector<1x896xf32> to vector<8x896xf32>
    %66 = arith.mulf %62, %65 : vector<8x896xf32>
    %c64 = arith.constant 64 : index
    %c0_29 = arith.constant 0 : index
    %67 = vector.load %arg11[%c64, %c0_29] : memref<72x896xf32, #tpu.memory_space<vmem>>, vector<8x896xf32>
    tpu.vector_store %arg11[%c64, %c0_29], %66 {strides = array<i32>} : memref<72x896xf32, #tpu.memory_space<vmem>>, vector<8x896xf32>,
    %c0_30 = arith.constant 0 : index
    %c0_31 = arith.constant 0 : index
    %68 = vector.load %arg2[%c0_30, %c0_31] : memref<16x72xbf16, #tpu.memory_space<vmem>>, vector<16x72xbf16>
    %c0_32 = arith.constant 0 : index
    %c0_33 = arith.constant 0 : index
    %69 = vector.load %arg11[%c0_32, %c0_33] : memref<72x896xf32, #tpu.memory_space<vmem>>, vector<72x896xf32>
    %70 = arith.truncf %69 : vector<72x896xf32> to vector<72x896xbf16>
    %cst = arith.constant dense<0.000000e+00> : vector<16x896xf32>
    %71 = tpu.matmul %68, %70, %cst {dimension_numbers = #tpu.dot_dimension_numbers<[1], [0], [0], [1], [0, 0, 1, 1], [], []>} : vector<16x72xbf16>, vector<72x896xbf16>, vector<16x896xf32> -> vector<16x896xf32>
    %c0_34 = arith.constant 0 : index
    %c0_35 = arith.constant 0 : index
    %72 = vector.load %arg4[%c0_34, %c0_35] : memref<16x1xf32, #tpu.memory_space<vmem>>, vector<16x1xf32>
    %73 = vector.broadcast %72 : vector<16x1xf32> to vector<16x896xf32>
    %74 = arith.addf %71, %73 : vector<16x896xf32>
    %cst_36 = arith.constant 0.000000e+00 : f32
    %75 = vector.broadcast %cst_36 : f32 to vector<16x896xf32>
    %76 = arith.maximumf %74, %75 : vector<16x896xf32>
    %77 = vector.extract_strided_slice %76 {offsets = [0, 1], sizes = [16, 895], strides = [1, 1]} : vector<16x896xf32> to vector<16x895xf32>
    %78 = vector.extract_strided_slice %76 {offsets = [0, 0], sizes = [16, 1], strides = [1, 1]} : vector<16x896xf32> to vector<16x1xf32>
    %79 = tpu.concatenate %77, %78 in 1 : vector<16x895xf32>, vector<16x1xf32> -> vector<16x896xf32>
    %80 = arith.maximumf %76, %79 : vector<16x896xf32>
    %81 = vector.extract_strided_slice %80 {offsets = [0, 28], sizes = [16, 868], strides = [1, 1]} : vector<16x896xf32> to vector<16x868xf32>
    %82 = vector.extract_strided_slice %80 {offsets = [0, 0], sizes = [16, 28], strides = [1, 1]} : vector<16x896xf32> to vector<16x28xf32>
    %83 = tpu.concatenate %81, %82 in 1 : vector<16x868xf32>, vector<16x28xf32> -> vector<16x896xf32>
    %84 = arith.maximumf %80, %83 : vector<16x896xf32>
    %85 = vector.extract_strided_slice %84 {offsets = [0, 838], sizes = [16, 58], strides = [1, 1]} : vector<16x896xf32> to vector<16x58xf32>
    %86 = vector.extract_strided_slice %84 {offsets = [0, 0], sizes = [16, 838], strides = [1, 1]} : vector<16x896xf32> to vector<16x838xf32>
    %87 = tpu.concatenate %85, %86 in 1 : vector<16x58xf32>, vector<16x838xf32> -> vector<16x896xf32>
    %c0_37 = arith.constant 0 : index
    %c0_38 = arith.constant 0 : index
    %c0_39 = arith.constant 0 : index
    %88 = vector.load %arg6[%c0_37, %c0_38, %c0_39] : memref<9x1x896xf32, #tpu.memory_space<vmem>>, vector<1x1x896xf32>
    %89 = vector.shape_cast %88 : vector<1x1x896xf32> to vector<1x896xf32>
    %90 = vector.broadcast %89 : vector<1x896xf32> to vector<16x896xf32>
    %91 = arith.mulf %87, %90 : vector<16x896xf32>
    %c0_40 = arith.constant 0 : index
    %c0_41 = arith.constant 0 : index
    %92 = vector.load %arg12[%c0_40, %c0_41] : memref<144x896xf32, #tpu.memory_space<vmem>>, vector<16x896xf32>
    tpu.vector_store %arg12[%c0_40, %c0_41], %91 {strides = array<i32>} : memref<144x896xf32, #tpu.memory_space<vmem>>, vector<16x896xf32>,
    %93 = vector.extract_strided_slice %84 {offsets = [0, 840], sizes = [16, 56], strides = [1, 1]} : vector<16x896xf32> to vector<16x56xf32>
    %94 = vector.extract_strided_slice %84 {offsets = [0, 0], sizes = [16, 840], strides = [1, 1]} : vector<16x896xf32> to vector<16x840xf32>
    %95 = tpu.concatenate %93, %94 in 1 : vector<16x56xf32>, vector<16x840xf32> -> vector<16x896xf32>
    %c1_42 = arith.constant 1 : index
    %c0_43 = arith.constant 0 : index
    %c0_44 = arith.constant 0 : index
    %96 = vector.load %arg6[%c1_42, %c0_43, %c0_44] : memref<9x1x896xf32, #tpu.memory_space<vmem>>, vector<1x1x896xf32>
    %97 = vector.shape_cast %96 : vector<1x1x896xf32> to vector<1x896xf32>
    %98 = vector.broadcast %97 : vector<1x896xf32> to vector<16x896xf32>
    %99 = arith.mulf %95, %98 : vector<16x896xf32>
    %c16_45 = arith.constant 16 : index
    %c0_46 = arith.constant 0 : index
    %100 = vector.load %arg12[%c16_45, %c0_46] : memref<144x896xf32, #tpu.memory_space<vmem>>, vector<16x896xf32>
    tpu.vector_store %arg12[%c16_45, %c0_46], %99 {strides = array<i32>} : memref<144x896xf32, #tpu.memory_space<vmem>>, vector<16x896xf32>,
    %101 = vector.extract_strided_slice %84 {offsets = [0, 842], sizes = [16, 54], strides = [1, 1]} : vector<16x896xf32> to vector<16x54xf32>
    %102 = vector.extract_strided_slice %84 {offsets = [0, 0], sizes = [16, 842], strides = [1, 1]} : vector<16x896xf32> to vector<16x842xf32>
    %103 = tpu.concatenate %101, %102 in 1 : vector<16x54xf32>, vector<16x842xf32> -> vector<16x896xf32>
    %c2_47 = arith.constant 2 : index
    %c0_48 = arith.constant 0 : index
    %c0_49 = arith.constant 0 : index
    %104 = vector.load %arg6[%c2_47, %c0_48, %c0_49] : memref<9x1x896xf32, #tpu.memory_space<vmem>>, vector<1x1x896xf32>
    %105 = vector.shape_cast %104 : vector<1x1x896xf32> to vector<1x896xf32>
    %106 = vector.broadcast %105 : vector<1x896xf32> to vector<16x896xf32>
    %107 = arith.mulf %103, %106 : vector<16x896xf32>
    %c32_50 = arith.constant 32 : index
    %c0_51 = arith.constant 0 : index
    %108 = vector.load %arg12[%c32_50, %c0_51] : memref<144x896xf32, #tpu.memory_space<vmem>>, vector<16x896xf32>
    tpu.vector_store %arg12[%c32_50, %c0_51], %107 {strides = array<i32>} : memref<144x896xf32, #tpu.memory_space<vmem>>, vector<16x896xf32>,
    %109 = vector.extract_strided_slice %84 {offsets = [0, 894], sizes = [16, 2], strides = [1, 1]} : vector<16x896xf32> to vector<16x2xf32>
    %110 = vector.extract_strided_slice %84 {offsets = [0, 0], sizes = [16, 894], strides = [1, 1]} : vector<16x896xf32> to vector<16x894xf32>
    %111 = tpu.concatenate %109, %110 in 1 : vector<16x2xf32>, vector<16x894xf32> -> vector<16x896xf32>
    %c3_52 = arith.constant 3 : index
    %c0_53 = arith.constant 0 : index
    %c0_54 = arith.constant 0 : index
    %112 = vector.load %arg6[%c3_52, %c0_53, %c0_54] : memref<9x1x896xf32, #tpu.memory_space<vmem>>, vector<1x1x896xf32>
    %113 = vector.shape_cast %112 : vector<1x1x896xf32> to vector<1x896xf32>
    %114 = vector.broadcast %113 : vector<1x896xf32> to vector<16x896xf32>
    %115 = arith.mulf %111, %114 : vector<16x896xf32>
    %c48_55 = arith.constant 48 : index
    %c0_56 = arith.constant 0 : index
    %116 = vector.load %arg12[%c48_55, %c0_56] : memref<144x896xf32, #tpu.memory_space<vmem>>, vector<16x896xf32>
    tpu.vector_store %arg12[%c48_55, %c0_56], %115 {strides = array<i32>} : memref<144x896xf32, #tpu.memory_space<vmem>>, vector<16x896xf32>,
    %c64_57 = arith.constant 64 : index
    %c0_58 = arith.constant 0 : index
    %117 = vector.load %arg12[%c64_57, %c0_58] : memref<144x896xf32, #tpu.memory_space<vmem>>, vector<16x896xf32>
    tpu.vector_store %arg12[%c64_57, %c0_58], %84 {strides = array<i32>} : memref<144x896xf32, #tpu.memory_space<vmem>>, vector<16x896xf32>,
    %118 = vector.extract_strided_slice %84 {offsets = [0, 2], sizes = [16, 894], strides = [1, 1]} : vector<16x896xf32> to vector<16x894xf32>
    %119 = vector.extract_strided_slice %84 {offsets = [0, 0], sizes = [16, 2], strides = [1, 1]} : vector<16x896xf32> to vector<16x2xf32>
    %120 = tpu.concatenate %118, %119 in 1 : vector<16x894xf32>, vector<16x2xf32> -> vector<16x896xf32>
    %c5_59 = arith.constant 5 : index
    %c0_60 = arith.constant 0 : index
    %c0_61 = arith.constant 0 : index
    %121 = vector.load %arg6[%c5_59, %c0_60, %c0_61] : memref<9x1x896xf32, #tpu.memory_space<vmem>>, vector<1x1x896xf32>
    %122 = vector.shape_cast %121 : vector<1x1x896xf32> to vector<1x896xf32>
    %123 = vector.broadcast %122 : vector<1x896xf32> to vector<16x896xf32>
    %124 = arith.mulf %120, %123 : vector<16x896xf32>
    %c80 = arith.constant 80 : index
    %c0_62 = arith.constant 0 : index
    %125 = vector.load %arg12[%c80, %c0_62] : memref<144x896xf32, #tpu.memory_space<vmem>>, vector<16x896xf32>
    tpu.vector_store %arg12[%c80, %c0_62], %124 {strides = array<i32>} : memref<144x896xf32, #tpu.memory_space<vmem>>, vector<16x896xf32>,
    %126 = vector.extract_strided_slice %84 {offsets = [0, 54], sizes = [16, 842], strides = [1, 1]} : vector<16x896xf32> to vector<16x842xf32>
    %127 = vector.extract_strided_slice %84 {offsets = [0, 0], sizes = [16, 54], strides = [1, 1]} : vector<16x896xf32> to vector<16x54xf32>
    %128 = tpu.concatenate %126, %127 in 1 : vector<16x842xf32>, vector<16x54xf32> -> vector<16x896xf32>
    %c6_63 = arith.constant 6 : index
    %c0_64 = arith.constant 0 : index
    %c0_65 = arith.constant 0 : index
    %129 = vector.load %arg6[%c6_63, %c0_64, %c0_65] : memref<9x1x896xf32, #tpu.memory_space<vmem>>, vector<1x1x896xf32>
    %130 = vector.shape_cast %129 : vector<1x1x896xf32> to vector<1x896xf32>
    %131 = vector.broadcast %130 : vector<1x896xf32> to vector<16x896xf32>
    %132 = arith.mulf %128, %131 : vector<16x896xf32>
    %c96 = arith.constant 96 : index
    %c0_66 = arith.constant 0 : index
    %133 = vector.load %arg12[%c96, %c0_66] : memref<144x896xf32, #tpu.memory_space<vmem>>, vector<16x896xf32>
    tpu.vector_store %arg12[%c96, %c0_66], %132 {strides = array<i32>} : memref<144x896xf32, #tpu.memory_space<vmem>>, vector<16x896xf32>,
    %134 = vector.extract_strided_slice %84 {offsets = [0, 56], sizes = [16, 840], strides = [1, 1]} : vector<16x896xf32> to vector<16x840xf32>
    %135 = vector.extract_strided_slice %84 {offsets = [0, 0], sizes = [16, 56], strides = [1, 1]} : vector<16x896xf32> to vector<16x56xf32>
    %136 = tpu.concatenate %134, %135 in 1 : vector<16x840xf32>, vector<16x56xf32> -> vector<16x896xf32>
    %c7_67 = arith.constant 7 : index
    %c0_68 = arith.constant 0 : index
    %c0_69 = arith.constant 0 : index
    %137 = vector.load %arg6[%c7_67, %c0_68, %c0_69] : memref<9x1x896xf32, #tpu.memory_space<vmem>>, vector<1x1x896xf32>
    %138 = vector.shape_cast %137 : vector<1x1x896xf32> to vector<1x896xf32>
    %139 = vector.broadcast %138 : vector<1x896xf32> to vector<16x896xf32>
    %140 = arith.mulf %136, %139 : vector<16x896xf32>
    %c112 = arith.constant 112 : index
    %c0_70 = arith.constant 0 : index
    %141 = vector.load %arg12[%c112, %c0_70] : memref<144x896xf32, #tpu.memory_space<vmem>>, vector<16x896xf32>
    tpu.vector_store %arg12[%c112, %c0_70], %140 {strides = array<i32>} : memref<144x896xf32, #tpu.memory_space<vmem>>, vector<16x896xf32>,
    %142 = vector.extract_strided_slice %84 {offsets = [0, 58], sizes = [16, 838], strides = [1, 1]} : vector<16x896xf32> to vector<16x838xf32>
    %143 = vector.extract_strided_slice %84 {offsets = [0, 0], sizes = [16, 58], strides = [1, 1]} : vector<16x896xf32> to vector<16x58xf32>
    %144 = tpu.concatenate %142, %143 in 1 : vector<16x838xf32>, vector<16x58xf32> -> vector<16x896xf32>
    %c8_71 = arith.constant 8 : index
    %c0_72 = arith.constant 0 : index
    %c0_73 = arith.constant 0 : index
    %145 = vector.load %arg6[%c8_71, %c0_72, %c0_73] : memref<9x1x896xf32, #tpu.memory_space<vmem>>, vector<1x1x896xf32>
    %146 = vector.shape_cast %145 : vector<1x1x896xf32> to vector<1x896xf32>
    %147 = vector.broadcast %146 : vector<1x896xf32> to vector<16x896xf32>
    %148 = arith.mulf %144, %147 : vector<16x896xf32>
    %c128 = arith.constant 128 : index
    %c0_74 = arith.constant 0 : index
    %149 = vector.load %arg12[%c128, %c0_74] : memref<144x896xf32, #tpu.memory_space<vmem>>, vector<16x896xf32>
    tpu.vector_store %arg12[%c128, %c0_74], %148 {strides = array<i32>} : memref<144x896xf32, #tpu.memory_space<vmem>>, vector<16x896xf32>,
    %c0_75 = arith.constant 0 : index
    %c0_76 = arith.constant 0 : index
    %150 = vector.load %arg5[%c0_75, %c0_76] : memref<16x144xbf16, #tpu.memory_space<vmem>>, vector<16x144xbf16>
    %c0_77 = arith.constant 0 : index
    %c0_78 = arith.constant 0 : index
    %151 = vector.load %arg12[%c0_77, %c0_78] : memref<144x896xf32, #tpu.memory_space<vmem>>, vector<144x896xf32>
    %152 = arith.truncf %151 : vector<144x896xf32> to vector<144x896xbf16>
    %cst_79 = arith.constant dense<0.000000e+00> : vector<16x896xf32>
    %153 = tpu.matmul %150, %152, %cst_79 {dimension_numbers = #tpu.dot_dimension_numbers<[1], [0], [0], [1], [0, 0, 1, 1], [], []>} : vector<16x144xbf16>, vector<144x896xbf16>, vector<16x896xf32> -> vector<16x896xf32>
    %c0_80 = arith.constant 0 : index
    %c0_81 = arith.constant 0 : index
    %154 = vector.load %arg7[%c0_80, %c0_81] : memref<16x1xf32, #tpu.memory_space<vmem>>, vector<16x1xf32>
    %155 = vector.broadcast %154 : vector<16x1xf32> to vector<16x896xf32>
    %156 = arith.addf %153, %155 : vector<16x896xf32>
    %cst_82 = arith.constant 0.000000e+00 : f32
    %157 = vector.broadcast %cst_82 : f32 to vector<16x896xf32>
    %158 = arith.maximumf %156, %157 : vector<16x896xf32>
    %159 = vector.extract_strided_slice %158 {offsets = [0, 2], sizes = [16, 894], strides = [1, 1]} : vector<16x896xf32> to vector<16x894xf32>
    %160 = vector.extract_strided_slice %158 {offsets = [0, 0], sizes = [16, 2], strides = [1, 1]} : vector<16x896xf32> to vector<16x2xf32>
    %161 = tpu.concatenate %159, %160 in 1 : vector<16x894xf32>, vector<16x2xf32> -> vector<16x896xf32>
    %162 = arith.maximumf %158, %161 : vector<16x896xf32>
    %163 = vector.extract_strided_slice %162 {offsets = [0, 56], sizes = [16, 840], strides = [1, 1]} : vector<16x896xf32> to vector<16x840xf32>
    %164 = vector.extract_strided_slice %162 {offsets = [0, 0], sizes = [16, 56], strides = [1, 1]} : vector<16x896xf32> to vector<16x56xf32>
    %165 = tpu.concatenate %163, %164 in 1 : vector<16x840xf32>, vector<16x56xf32> -> vector<16x896xf32>
    %166 = arith.maximumf %162, %165 : vector<16x896xf32>
    %c0_83 = arith.constant 0 : index
    %c0_84 = arith.constant 0 : index
    %167 = vector.load %arg9[%c0_83, %c0_84] : memref<1x10xf32, #tpu.memory_space<vmem>>, vector<1x10xf32>
    %c0_85 = arith.constant 0 : index
    %c0_86 = arith.constant 0 : index
    %c0_87 = arith.constant 0 : index
    %168 = vector.load %arg8[%c0_85, %c0_86, %c0_87] : memref<10x16x896xf32, #tpu.memory_space<vmem>>, vector<1x16x896xf32>
    %169 = vector.shape_cast %168 : vector<1x16x896xf32> to vector<16x896xf32>
    %170 = arith.mulf %166, %169 : vector<16x896xf32>
    %cst_88 = arith.constant dense<0.000000e+00> : vector<16xf32>
    %171 = vector.multi_reduction <add>, %170, %cst_88 [1] : vector<16x896xf32> to vector<16xf32>
    %172 = vector.shape_cast %171 : vector<16xf32> to vector<16x1xf32>
    %cst_89 = arith.constant dense<0.000000e+00> : vector<1xf32>
    %173 = vector.multi_reduction <add>, %172, %cst_89 [0] : vector<16x1xf32> to vector<1xf32>
    %174 = vector.shape_cast %173 : vector<1xf32> to vector<1x1xf32>
    %c0_i32 = arith.constant 0 : i32
    %175 = vector.broadcast %c0_i32 : i32 to vector<1x10xi32>
    %176 = arith.cmpi eq, %0, %175 : vector<1x10xi32>
    %cst_90 = arith.constant 0.000000e+00 : f32
    %177 = vector.shape_cast %174 : vector<1x1xf32> to vector<1x1xf32>
    %178 = vector.broadcast %177 : vector<1x1xf32> to vector<1x10xf32>
    %179 = vector.broadcast %cst_90 : f32 to vector<1x10xf32>
    %180 = arith.select %176, %178, %179 : vector<1x10xi1>, vector<1x10xf32>
    %181 = arith.addf %167, %180 : vector<1x10xf32>
    %c1_91 = arith.constant 1 : index
    %c0_92 = arith.constant 0 : index
    %c0_93 = arith.constant 0 : index
    %182 = vector.load %arg8[%c1_91, %c0_92, %c0_93] : memref<10x16x896xf32, #tpu.memory_space<vmem>>, vector<1x16x896xf32>
    %183 = vector.shape_cast %182 : vector<1x16x896xf32> to vector<16x896xf32>
    %184 = arith.mulf %166, %183 : vector<16x896xf32>
    %cst_94 = arith.constant dense<0.000000e+00> : vector<16xf32>
    %185 = vector.multi_reduction <add>, %184, %cst_94 [1] : vector<16x896xf32> to vector<16xf32>
    %186 = vector.shape_cast %185 : vector<16xf32> to vector<16x1xf32>
    %cst_95 = arith.constant dense<0.000000e+00> : vector<1xf32>
    %187 = vector.multi_reduction <add>, %186, %cst_95 [0] : vector<16x1xf32> to vector<1xf32>
    %188 = vector.shape_cast %187 : vector<1xf32> to vector<1x1xf32>
    %c1_i32 = arith.constant 1 : i32
    %189 = vector.broadcast %c1_i32 : i32 to vector<1x10xi32>
    %190 = arith.cmpi eq, %0, %189 : vector<1x10xi32>
    %cst_96 = arith.constant 0.000000e+00 : f32
    %191 = vector.shape_cast %188 : vector<1x1xf32> to vector<1x1xf32>
    %192 = vector.broadcast %191 : vector<1x1xf32> to vector<1x10xf32>
    %193 = vector.broadcast %cst_96 : f32 to vector<1x10xf32>
    %194 = arith.select %190, %192, %193 : vector<1x10xi1>, vector<1x10xf32>
    %195 = arith.addf %181, %194 : vector<1x10xf32>
    %c2_97 = arith.constant 2 : index
    %c0_98 = arith.constant 0 : index
    %c0_99 = arith.constant 0 : index
    %196 = vector.load %arg8[%c2_97, %c0_98, %c0_99] : memref<10x16x896xf32, #tpu.memory_space<vmem>>, vector<1x16x896xf32>
    %197 = vector.shape_cast %196 : vector<1x16x896xf32> to vector<16x896xf32>
    %198 = arith.mulf %166, %197 : vector<16x896xf32>
    %cst_100 = arith.constant dense<0.000000e+00> : vector<16xf32>
    %199 = vector.multi_reduction <add>, %198, %cst_100 [1] : vector<16x896xf32> to vector<16xf32>
    %200 = vector.shape_cast %199 : vector<16xf32> to vector<16x1xf32>
    %cst_101 = arith.constant dense<0.000000e+00> : vector<1xf32>
    %201 = vector.multi_reduction <add>, %200, %cst_101 [0] : vector<16x1xf32> to vector<1xf32>
    %202 = vector.shape_cast %201 : vector<1xf32> to vector<1x1xf32>
    %c2_i32 = arith.constant 2 : i32
    %203 = vector.broadcast %c2_i32 : i32 to vector<1x10xi32>
    %204 = arith.cmpi eq, %0, %203 : vector<1x10xi32>
    %cst_102 = arith.constant 0.000000e+00 : f32
    %205 = vector.shape_cast %202 : vector<1x1xf32> to vector<1x1xf32>
    %206 = vector.broadcast %205 : vector<1x1xf32> to vector<1x10xf32>
    %207 = vector.broadcast %cst_102 : f32 to vector<1x10xf32>
    %208 = arith.select %204, %206, %207 : vector<1x10xi1>, vector<1x10xf32>
    %209 = arith.addf %195, %208 : vector<1x10xf32>
    %c3_103 = arith.constant 3 : index
    %c0_104 = arith.constant 0 : index
    %c0_105 = arith.constant 0 : index
    %210 = vector.load %arg8[%c3_103, %c0_104, %c0_105] : memref<10x16x896xf32, #tpu.memory_space<vmem>>, vector<1x16x896xf32>
    %211 = vector.shape_cast %210 : vector<1x16x896xf32> to vector<16x896xf32>
    %212 = arith.mulf %166, %211 : vector<16x896xf32>
    %cst_106 = arith.constant dense<0.000000e+00> : vector<16xf32>
    %213 = vector.multi_reduction <add>, %212, %cst_106 [1] : vector<16x896xf32> to vector<16xf32>
    %214 = vector.shape_cast %213 : vector<16xf32> to vector<16x1xf32>
    %cst_107 = arith.constant dense<0.000000e+00> : vector<1xf32>
    %215 = vector.multi_reduction <add>, %214, %cst_107 [0] : vector<16x1xf32> to vector<1xf32>
    %216 = vector.shape_cast %215 : vector<1xf32> to vector<1x1xf32>
    %c3_i32 = arith.constant 3 : i32
    %217 = vector.broadcast %c3_i32 : i32 to vector<1x10xi32>
    %218 = arith.cmpi eq, %0, %217 : vector<1x10xi32>
    %cst_108 = arith.constant 0.000000e+00 : f32
    %219 = vector.shape_cast %216 : vector<1x1xf32> to vector<1x1xf32>
    %220 = vector.broadcast %219 : vector<1x1xf32> to vector<1x10xf32>
    %221 = vector.broadcast %cst_108 : f32 to vector<1x10xf32>
    %222 = arith.select %218, %220, %221 : vector<1x10xi1>, vector<1x10xf32>
    %223 = arith.addf %209, %222 : vector<1x10xf32>
    %c4 = arith.constant 4 : index
    %c0_109 = arith.constant 0 : index
    %c0_110 = arith.constant 0 : index
    %224 = vector.load %arg8[%c4, %c0_109, %c0_110] : memref<10x16x896xf32, #tpu.memory_space<vmem>>, vector<1x16x896xf32>
    %225 = vector.shape_cast %224 : vector<1x16x896xf32> to vector<16x896xf32>
    %226 = arith.mulf %166, %225 : vector<16x896xf32>
    %cst_111 = arith.constant dense<0.000000e+00> : vector<16xf32>
    %227 = vector.multi_reduction <add>, %226, %cst_111 [1] : vector<16x896xf32> to vector<16xf32>
    %228 = vector.shape_cast %227 : vector<16xf32> to vector<16x1xf32>
    %cst_112 = arith.constant dense<0.000000e+00> : vector<1xf32>
    %229 = vector.multi_reduction <add>, %228, %cst_112 [0] : vector<16x1xf32> to vector<1xf32>
    %230 = vector.shape_cast %229 : vector<1xf32> to vector<1x1xf32>
    %c4_i32 = arith.constant 4 : i32
    %231 = vector.broadcast %c4_i32 : i32 to vector<1x10xi32>
    %232 = arith.cmpi eq, %0, %231 : vector<1x10xi32>
    %cst_113 = arith.constant 0.000000e+00 : f32
    %233 = vector.shape_cast %230 : vector<1x1xf32> to vector<1x1xf32>
    %234 = vector.broadcast %233 : vector<1x1xf32> to vector<1x10xf32>
    %235 = vector.broadcast %cst_113 : f32 to vector<1x10xf32>
    %236 = arith.select %232, %234, %235 : vector<1x10xi1>, vector<1x10xf32>
    %237 = arith.addf %223, %236 : vector<1x10xf32>
    %c5_114 = arith.constant 5 : index
    %c0_115 = arith.constant 0 : index
    %c0_116 = arith.constant 0 : index
    %238 = vector.load %arg8[%c5_114, %c0_115, %c0_116] : memref<10x16x896xf32, #tpu.memory_space<vmem>>, vector<1x16x896xf32>
    %239 = vector.shape_cast %238 : vector<1x16x896xf32> to vector<16x896xf32>
    %240 = arith.mulf %166, %239 : vector<16x896xf32>
    %cst_117 = arith.constant dense<0.000000e+00> : vector<16xf32>
    %241 = vector.multi_reduction <add>, %240, %cst_117 [1] : vector<16x896xf32> to vector<16xf32>
    %242 = vector.shape_cast %241 : vector<16xf32> to vector<16x1xf32>
    %cst_118 = arith.constant dense<0.000000e+00> : vector<1xf32>
    %243 = vector.multi_reduction <add>, %242, %cst_118 [0] : vector<16x1xf32> to vector<1xf32>
    %244 = vector.shape_cast %243 : vector<1xf32> to vector<1x1xf32>
    %c5_i32 = arith.constant 5 : i32
    %245 = vector.broadcast %c5_i32 : i32 to vector<1x10xi32>
    %246 = arith.cmpi eq, %0, %245 : vector<1x10xi32>
    %cst_119 = arith.constant 0.000000e+00 : f32
    %247 = vector.shape_cast %244 : vector<1x1xf32> to vector<1x1xf32>
    %248 = vector.broadcast %247 : vector<1x1xf32> to vector<1x10xf32>
    %249 = vector.broadcast %cst_119 : f32 to vector<1x10xf32>
    %250 = arith.select %246, %248, %249 : vector<1x10xi1>, vector<1x10xf32>
    %251 = arith.addf %237, %250 : vector<1x10xf32>
    %c6_120 = arith.constant 6 : index
    %c0_121 = arith.constant 0 : index
    %c0_122 = arith.constant 0 : index
    %252 = vector.load %arg8[%c6_120, %c0_121, %c0_122] : memref<10x16x896xf32, #tpu.memory_space<vmem>>, vector<1x16x896xf32>
    %253 = vector.shape_cast %252 : vector<1x16x896xf32> to vector<16x896xf32>
    %254 = arith.mulf %166, %253 : vector<16x896xf32>
    %cst_123 = arith.constant dense<0.000000e+00> : vector<16xf32>
    %255 = vector.multi_reduction <add>, %254, %cst_123 [1] : vector<16x896xf32> to vector<16xf32>
    %256 = vector.shape_cast %255 : vector<16xf32> to vector<16x1xf32>
    %cst_124 = arith.constant dense<0.000000e+00> : vector<1xf32>
    %257 = vector.multi_reduction <add>, %256, %cst_124 [0] : vector<16x1xf32> to vector<1xf32>
    %258 = vector.shape_cast %257 : vector<1xf32> to vector<1x1xf32>
    %c6_i32 = arith.constant 6 : i32
    %259 = vector.broadcast %c6_i32 : i32 to vector<1x10xi32>
    %260 = arith.cmpi eq, %0, %259 : vector<1x10xi32>
    %cst_125 = arith.constant 0.000000e+00 : f32
    %261 = vector.shape_cast %258 : vector<1x1xf32> to vector<1x1xf32>
    %262 = vector.broadcast %261 : vector<1x1xf32> to vector<1x10xf32>
    %263 = vector.broadcast %cst_125 : f32 to vector<1x10xf32>
    %264 = arith.select %260, %262, %263 : vector<1x10xi1>, vector<1x10xf32>
    %265 = arith.addf %251, %264 : vector<1x10xf32>
    %c7_126 = arith.constant 7 : index
    %c0_127 = arith.constant 0 : index
    %c0_128 = arith.constant 0 : index
    %266 = vector.load %arg8[%c7_126, %c0_127, %c0_128] : memref<10x16x896xf32, #tpu.memory_space<vmem>>, vector<1x16x896xf32>
    %267 = vector.shape_cast %266 : vector<1x16x896xf32> to vector<16x896xf32>
    %268 = arith.mulf %166, %267 : vector<16x896xf32>
    %cst_129 = arith.constant dense<0.000000e+00> : vector<16xf32>
    %269 = vector.multi_reduction <add>, %268, %cst_129 [1] : vector<16x896xf32> to vector<16xf32>
    %270 = vector.shape_cast %269 : vector<16xf32> to vector<16x1xf32>
    %cst_130 = arith.constant dense<0.000000e+00> : vector<1xf32>
    %271 = vector.multi_reduction <add>, %270, %cst_130 [0] : vector<16x1xf32> to vector<1xf32>
    %272 = vector.shape_cast %271 : vector<1xf32> to vector<1x1xf32>
    %c7_i32 = arith.constant 7 : i32
    %273 = vector.broadcast %c7_i32 : i32 to vector<1x10xi32>
    %274 = arith.cmpi eq, %0, %273 : vector<1x10xi32>
    %cst_131 = arith.constant 0.000000e+00 : f32
    %275 = vector.shape_cast %272 : vector<1x1xf32> to vector<1x1xf32>
    %276 = vector.broadcast %275 : vector<1x1xf32> to vector<1x10xf32>
    %277 = vector.broadcast %cst_131 : f32 to vector<1x10xf32>
    %278 = arith.select %274, %276, %277 : vector<1x10xi1>, vector<1x10xf32>
    %279 = arith.addf %265, %278 : vector<1x10xf32>
    %c8_132 = arith.constant 8 : index
    %c0_133 = arith.constant 0 : index
    %c0_134 = arith.constant 0 : index
    %280 = vector.load %arg8[%c8_132, %c0_133, %c0_134] : memref<10x16x896xf32, #tpu.memory_space<vmem>>, vector<1x16x896xf32>
    %281 = vector.shape_cast %280 : vector<1x16x896xf32> to vector<16x896xf32>
    %282 = arith.mulf %166, %281 : vector<16x896xf32>
    %cst_135 = arith.constant dense<0.000000e+00> : vector<16xf32>
    %283 = vector.multi_reduction <add>, %282, %cst_135 [1] : vector<16x896xf32> to vector<16xf32>
    %284 = vector.shape_cast %283 : vector<16xf32> to vector<16x1xf32>
    %cst_136 = arith.constant dense<0.000000e+00> : vector<1xf32>
    %285 = vector.multi_reduction <add>, %284, %cst_136 [0] : vector<16x1xf32> to vector<1xf32>
    %286 = vector.shape_cast %285 : vector<1xf32> to vector<1x1xf32>
    %c8_i32 = arith.constant 8 : i32
    %287 = vector.broadcast %c8_i32 : i32 to vector<1x10xi32>
    %288 = arith.cmpi eq, %0, %287 : vector<1x10xi32>
    %cst_137 = arith.constant 0.000000e+00 : f32
    %289 = vector.shape_cast %286 : vector<1x1xf32> to vector<1x1xf32>
    %290 = vector.broadcast %289 : vector<1x1xf32> to vector<1x10xf32>
    %291 = vector.broadcast %cst_137 : f32 to vector<1x10xf32>
    %292 = arith.select %288, %290, %291 : vector<1x10xi1>, vector<1x10xf32>
    %293 = arith.addf %279, %292 : vector<1x10xf32>
    %c9 = arith.constant 9 : index
    %c0_138 = arith.constant 0 : index
    %c0_139 = arith.constant 0 : index
    %294 = vector.load %arg8[%c9, %c0_138, %c0_139] : memref<10x16x896xf32, #tpu.memory_space<vmem>>, vector<1x16x896xf32>
    %295 = vector.shape_cast %294 : vector<1x16x896xf32> to vector<16x896xf32>
    %296 = arith.mulf %166, %295 : vector<16x896xf32>
    %cst_140 = arith.constant dense<0.000000e+00> : vector<16xf32>
    %297 = vector.multi_reduction <add>, %296, %cst_140 [1] : vector<16x896xf32> to vector<16xf32>
    %298 = vector.shape_cast %297 : vector<16xf32> to vector<16x1xf32>
    %cst_141 = arith.constant dense<0.000000e+00> : vector<1xf32>
    %299 = vector.multi_reduction <add>, %298, %cst_141 [0] : vector<16x1xf32> to vector<1xf32>
    %300 = vector.shape_cast %299 : vector<1xf32> to vector<1x1xf32>
    %c9_i32 = arith.constant 9 : i32
    %301 = vector.broadcast %c9_i32 : i32 to vector<1x10xi32>
    %302 = arith.cmpi eq, %0, %301 : vector<1x10xi32>
    %cst_142 = arith.constant 0.000000e+00 : f32
    %303 = vector.shape_cast %300 : vector<1x1xf32> to vector<1x1xf32>
    %304 = vector.broadcast %303 : vector<1x1xf32> to vector<1x10xf32>
    %305 = vector.broadcast %cst_142 : f32 to vector<1x10xf32>
    %306 = arith.select %302, %304, %305 : vector<1x10xi1>, vector<1x10xf32>
    %307 = arith.addf %293, %306 : vector<1x10xf32>
    %c0_143 = arith.constant 0 : index
    %c0_144 = arith.constant 0 : index
    %c0_145 = arith.constant 0 : index
    %308 = vector.load %arg10[%c0_143, %c0_144, %c0_145] : memref<1x1x10xf32, #tpu.memory_space<vmem>>, vector<1x1x10xf32>
    %309 = vector.shape_cast %308 : vector<1x1x10xf32> to vector<1x10xf32>
    %310 = vector.shape_cast %307 : vector<1x10xf32> to vector<1x1x10xf32>
    tpu.vector_store %arg10[%c0_143, %c0_144, %c0_145], %310 {strides = array<i32>} : memref<1x1x10xf32, #tpu.memory_space<vmem>>, vector<1x1x10xf32>,
    return
  }
  func.func @transform_0(%arg0: i32) -> (i32, i32, i32) {
    %c0_i32 = arith.constant 0 : i32
    %c0_i32_0 = arith.constant 0 : i32
    %c0_i32_1 = arith.constant 0 : i32
    return %arg0, %c0_i32, %c0_i32_0 : i32, i32, i32
  }
  func.func @transform_1(%arg0: i32) -> (i32, i32) {
    %c0_i32 = arith.constant 0 : i32
    %c0_i32_0 = arith.constant 0 : i32
    %c0_i32_1 = arith.constant 0 : i32
    return %c0_i32, %c0_i32_0 : i32, i32
  }
  func.func @transform_2(%arg0: i32) -> (i32, i32, i32) {
    %c0_i32 = arith.constant 0 : i32
    %c0_i32_0 = arith.constant 0 : i32
    %c0_i32_1 = arith.constant 0 : i32
    %c0_i32_2 = arith.constant 0 : i32
    return %c0_i32, %c0_i32_0, %c0_i32_1 : i32, i32, i32
  }
  func.func @transform_3(%arg0: i32) -> (i32, i32) {
    %c0_i32 = arith.constant 0 : i32
    %c0_i32_0 = arith.constant 0 : i32
    %c0_i32_1 = arith.constant 0 : i32
    return %c0_i32, %c0_i32_0 : i32, i32
  }
  func.func @transform_4(%arg0: i32) -> (i32, i32) {
    %c0_i32 = arith.constant 0 : i32
    %c0_i32_0 = arith.constant 0 : i32
    %c0_i32_1 = arith.constant 0 : i32
    return %c0_i32, %c0_i32_0 : i32, i32
  }
  func.func @transform_5(%arg0: i32) -> (i32, i32, i32) {
    %c0_i32 = arith.constant 0 : i32
    %c0_i32_0 = arith.constant 0 : i32
    %c0_i32_1 = arith.constant 0 : i32
    %c0_i32_2 = arith.constant 0 : i32
    return %c0_i32, %c0_i32_0, %c0_i32_1 : i32, i32, i32
  }
  func.func @transform_6(%arg0: i32) -> (i32, i32) {
    %c0_i32 = arith.constant 0 : i32
    %c0_i32_0 = arith.constant 0 : i32
    %c0_i32_1 = arith.constant 0 : i32
    return %c0_i32, %c0_i32_0 : i32, i32
  }
  func.func @transform_7(%arg0: i32) -> (i32, i32, i32) {
    %c0_i32 = arith.constant 0 : i32
    %c0_i32_0 = arith.constant 0 : i32
    %c0_i32_1 = arith.constant 0 : i32
    %c0_i32_2 = arith.constant 0 : i32
    return %c0_i32, %c0_i32_0, %c0_i32_1 : i32, i32, i32
  }
  func.func @transform_8(%arg0: i32) -> (i32, i32) {
    %c0_i32 = arith.constant 0 : i32
    %c0_i32_0 = arith.constant 0 : i32
    %c0_i32_1 = arith.constant 0 : i32
    return %c0_i32, %c0_i32_0 : i32, i32
  }
  func.func @transform_9(%arg0: i32) -> (i32, i32, i32) {
    %c0_i32 = arith.constant 0 : i32
    %c0_i32_0 = arith.constant 0 : i32
    %c0_i32_1 = arith.constant 0 : i32
    return %arg0, %c0_i32, %c0_i32_0 : i32, i32, i32
  }
}

</mosaic_0001>

<llo_original>
// kernel: test_conv_model.1
$region0: #{test_conv_model.1}
  #allocation0 [shape = 'u32[]', space=smem, size = 0x4, offset = 0x4, fixed_abs, tag = 'smem constant byte address 0x4 - core index']
  #allocation1 [shape = 'u32[72,128]{1,0:T(1,128)}', space=vmem, size = 0x9000, scoped, tag = 'internal scratch']
  #allocation2 [shape = 'f32[72,896]{1,0:T(8,128)}', space=vmem, size = 0x3f000, scoped, tag = 'scratch operand']
  #allocation3 [shape = 'f32[144,896]{1,0:T(8,128)}', space=vmem, size = 0x7e000, scoped, tag = 'scratch operand']
  %s0 = inlined_call_operand.vmem [shape: f32[2,8,896], index: 0, kind: input, shape index: {}]
  %s1 = inlined_call_operand.vmem [shape: bf16[16,72], index: 1, kind: input, shape index: {}]
  %s2 = inlined_call_operand.vmem [shape: f32[9,1,896], index: 2, kind: input, shape index: {}]
  %s3 = inlined_call_operand.vmem [shape: f32[16,1], index: 3, kind: input, shape index: {}]
  %s4 = inlined_call_operand.vmem [shape: bf16[16,144], index: 4, kind: input, shape index: {}]
  %s5 = inlined_call_operand.vmem [shape: f32[9,1,896], index: 5, kind: input, shape index: {}]
  %s6 = inlined_call_operand.vmem [shape: f32[16,1], index: 6, kind: input, shape index: {}]
  %s7 = inlined_call_operand.hbm [shape: f32[10,16,896], index: 7, kind: input, shape index: {}]
  %s8 = inlined_call_operand.vmem [shape: f32[1,10], index: 8, kind: input, shape index: {}]
  %s9 = inlined_call_operand.hbm [shape: f32[2,1,10], index: 9, kind: output, shape index: {}]
  %s10 = sld [smem:[#allocation0]]
  $region73: #{test_conv_model.1} parent=0
    _
  %s12 = ssub.s32 1, %s10
  %s13 = scalar_select 0, %s12, %s10
  $region1: #{test_conv_model.1} parent=0
    #allocation4 [shape = 'u8[573440]{0}', space=vmem, size = 0x8c000, scoped, tag = 'input window, operand 7, single buffered']
    #allocation5 [shape = 's32[2]{0}', space=sflag, size = 0x8, scoped, tag = 'scoped memory for test_conv_model.1']
    #allocation6 [shape = 's32[2]{0}', space=sflag, size = 0x8, scoped, tag = 'scoped memory for test_conv_model.1']
    #allocation7 [shape = 'u8[1024]{0}', space=vmem, size = 0x400, scoped, tag = 'output window, operand 0']
    %14 = vsyncpa [#allocation5], 0
    %15 = vsyncpa [#allocation6], 0
    %s16 = scalar_lea.sflag [#allocation6], 1
    %17 = vsyncpa %s16, 0
    loop: start=0, step=1, limit=4
    $region2: #{test_conv_model.1} parent=1 // loop_pre_header
      _
    $region3: #{test_conv_model.1} parent=1 // loop_header
      %s19 = sphi 0, %s23
      %p20 = scmp.ge.s32.totalorder %s19, 4
      %s29 = sphi 0, %s31
      %s32 = sphi 0, %s29
      %s33 = sphi 0, %s32
      %s49 = sphi 0, %s33
      %s53 = sphi 0, %s53
      %s55 = sphi 0, %s53
      %s56 = sphi 0, %s55
      %s70 = sphi 0, %s56
      %s74 = sphi 0, %s74
      %s76 = sphi 0, %s74
      %s77 = sphi 0, %s76
      %s91 = sphi 0, %s77
      %s95 = sphi 0, %s95
      %s97 = sphi 0, %s95
      %s98 = sphi 0, %s97
      %s112 = sphi 0, %s98
      %s116 = sphi 0, %s116
      %s118 = sphi 0, %s116
      %s119 = sphi 0, %s118
      %s133 = sphi 0, %s119
      %s137 = sphi 0, %s137
      %s139 = sphi 0, %s137
      %s140 = sphi 0, %s139
      %s154 = sphi 0, %s140
      %s158 = sphi 0, %s158
      %s160 = sphi 0, %s158
      %s161 = sphi 0, %s160
      %s175 = sphi 0, %s161
      %s179 = sphi 0, %s179
      %s181 = sphi 0, %s179
      %s182 = sphi 0, %s181
      %s196 = sphi 0, %s182
      %s200 = sphi 0, %s200
      %s202 = sphi 0, %s200
      %s203 = sphi 0, %s202
      %s217 = sphi 0, %s203
      %s223 = sphi 0, %s225
      %s226 = sphi 0, %s223
      %s227 = sphi 0, %s226
      %s243 = sphi 0, %s227
    $region4: #{test_conv_model.1} parent=1 // loop_header_branch
      %22 = sbr.rel (%p20) target = $region8
    $region5: #{test_conv_model.1} parent=1 // loop_body
      %s24 = ssub.s32 %s19, 1
      %s25 = ssub.s32 %s19, 2
      %s26 = sadd.s32 %s19, 1
      %s27 = ssub.s32 %s19, %s26
      %p28 = scmp.eq.s32.totalorder %s27, 0
      %s30 = sadd.s32 %s29, 1
      %s31 = scalar_select %p28, %s29, %s30
      %p34 = pneg %p28
      %p35 = scmp.eq.s32.totalorder %s19, 1
      %p36 = por %p34, %p35
      %p37 = scmp.ne.s32.totalorder %s29, %s32
      %p38 = scmp.eq.s32.totalorder %s19, 0
      %p39 = por %p37, %p38
      %p40 = scmp.ne.s32.totalorder %s29, %s32
      %p41 = scmp.eq.s32.totalorder %s24, 1
      %p42 = por %p40, %p41
      %p43 = scmp.ne.s32.totalorder %s32, %s33
      %p44 = scmp.eq.s32.totalorder %s24, 0
      %p45 = por %p43, %p44
      %p46 = scmp.ne.s32.totalorder %s32, %s33
      %p47 = scmp.eq.s32.totalorder %s25, 1
      %p48 = por %p46, %p47
      %p50 = scmp.ne.s32.totalorder %s33, %s49
      %p51 = scmp.eq.s32.totalorder %s25, 0
      %p52 = por %p50, %p51
      %s54 = sadd.s32 %s53, 1
      %p57 = scmp.eq.s32.totalorder %s19, 1
      %p58 = scmp.ne.s32.totalorder %s53, %s55
      %p59 = scmp.eq.s32.totalorder %s19, 0
      %p60 = por %p58, %p59
      %p61 = scmp.ne.s32.totalorder %s53, %s55
      %p62 = scmp.eq.s32.totalorder %s24, 1
      %p63 = por %p61, %p62
      %p64 = scmp.ne.s32.totalorder %s55, %s56
      %p65 = scmp.eq.s32.totalorder %s24, 0
      %p66 = por %p64, %p65
      %p67 = scmp.ne.s32.totalorder %s55, %s56
      %p68 = scmp.eq.s32.totalorder %s25, 1
      %p69 = por %p67, %p68
      %p71 = scmp.ne.s32.totalorder %s56, %s70
      %p72 = scmp.eq.s32.totalorder %s25, 0
      %p73 = por %p71, %p72
      %s75 = sadd.s32 %s74, 1
      %p78 = scmp.eq.s32.totalorder %s19, 1
      %p79 = scmp.ne.s32.totalorder %s74, %s76
      %p80 = scmp.eq.s32.totalorder %s19, 0
      %p81 = por %p79, %p80
      %p82 = scmp.ne.s32.totalorder %s74, %s76
      %p83 = scmp.eq.s32.totalorder %s24, 1
      %p84 = por %p82, %p83
      %p85 = scmp.ne.s32.totalorder %s76, %s77
      %p86 = scmp.eq.s32.totalorder %s24, 0
      %p87 = por %p85, %p86
      %p88 = scmp.ne.s32.totalorder %s76, %s77
      %p89 = scmp.eq.s32.totalorder %s25, 1
      %p90 = por %p88, %p89
      %p92 = scmp.ne.s32.totalorder %s77, %s91
      %p93 = scmp.eq.s32.totalorder %s25, 0
      %p94 = por %p92, %p93
      %s96 = sadd.s32 %s95, 1
      %p99 = scmp.eq.s32.totalorder %s19, 1
      %p100 = scmp.ne.s32.totalorder %s95, %s97
      %p101 = scmp.eq.s32.totalorder %s19, 0
      %p102 = por %p100, %p101
      %p103 = scmp.ne.s32.totalorder %s95, %s97
      %p104 = scmp.eq.s32.totalorder %s24, 1
      %p105 = por %p103, %p104
      %p106 = scmp.ne.s32.totalorder %s97, %s98
      %p107 = scmp.eq.s32.totalorder %s24, 0
      %p108 = por %p106, %p107
      %p109 = scmp.ne.s32.totalorder %s97, %s98
      %p110 = scmp.eq.s32.totalorder %s25, 1
      %p111 = por %p109, %p110
      %p113 = scmp.ne.s32.totalorder %s98, %s112
      %p114 = scmp.eq.s32.totalorder %s25, 0
      %p115 = por %p113, %p114
      %s117 = sadd.s32 %s116, 1
      %p120 = scmp.eq.s32.totalorder %s19, 1
      %p121 = scmp.ne.s32.totalorder %s116, %s118
      %p122 = scmp.eq.s32.totalorder %s19, 0
      %p123 = por %p121, %p122
      %p124 = scmp.ne.s32.totalorder %s116, %s118
      %p125 = scmp.eq.s32.totalorder %s24, 1
      %p126 = por %p124, %p125
      %p127 = scmp.ne.s32.totalorder %s118, %s119
      %p128 = scmp.eq.s32.totalorder %s24, 0
      %p129 = por %p127, %p128
      %p130 = scmp.ne.s32.totalorder %s118, %s119
      %p131 = scmp.eq.s32.totalorder %s25, 1
      %p132 = por %p130, %p131
      %p134 = scmp.ne.s32.totalorder %s119, %s133
      %p135 = scmp.eq.s32.totalorder %s25, 0
      %p136 = por %p134, %p135
      %s138 = sadd.s32 %s137, 1
      %p141 = scmp.eq.s32.totalorder %s19, 1
      %p142 = scmp.ne.s32.totalorder %s137, %s139
      %p143 = scmp.eq.s32.totalorder %s19, 0
      %p144 = por %p142, %p143
      %p145 = scmp.ne.s32.totalorder %s137, %s139
      %p146 = scmp.eq.s32.totalorder %s24, 1
      %p147 = por %p145, %p146
      %p148 = scmp.ne.s32.totalorder %s139, %s140
      %p149 = scmp.eq.s32.totalorder %s24, 0
      %p150 = por %p148, %p149
      %p151 = scmp.ne.s32.totalorder %s139, %s140
      %p152 = scmp.eq.s32.totalorder %s25, 1
      %p153 = por %p151, %p152
      %p155 = scmp.ne.s32.totalorder %s140, %s154
      %p156 = scmp.eq.s32.totalorder %s25, 0
      %p157 = por %p155, %p156
      %s159 = sadd.s32 %s158, 1
      %p162 = scmp.eq.s32.totalorder %s19, 1
      %p163 = scmp.ne.s32.totalorder %s158, %s160
      %p164 = scmp.eq.s32.totalorder %s19, 0
      %p165 = por %p163, %p164
      %p166 = scmp.ne.s32.totalorder %s158, %s160
      %p167 = scmp.eq.s32.totalorder %s24, 1
      %p168 = por %p166, %p167
      %p169 = scmp.ne.s32.totalorder %s160, %s161
      %p170 = scmp.eq.s32.totalorder %s24, 0
      %p171 = por %p169, %p170
      %p172 = scmp.ne.s32.totalorder %s160, %s161
      %p173 = scmp.eq.s32.totalorder %s25, 1
      %p174 = por %p172, %p173
      %p176 = scmp.ne.s32.totalorder %s161, %s175
      %p177 = scmp.eq.s32.totalorder %s25, 0
      %p178 = por %p176, %p177
      %s180 = sadd.s32 %s179, 1
      %p183 = scmp.eq.s32.totalorder %s19, 1
      %p184 = scmp.ne.s32.totalorder %s179, %s181
      %p185 = scmp.eq.s32.totalorder %s19, 0
      %p186 = por %p184, %p185
      %p187 = scmp.ne.s32.totalorder %s179, %s181
      %p188 = scmp.eq.s32.totalorder %s24, 1
      %p189 = por %p187, %p188
      %p190 = scmp.ne.s32.totalorder %s181, %s182
      %p191 = scmp.eq.s32.totalorder %s24, 0
      %p192 = por %p190, %p191
      %p193 = scmp.ne.s32.totalorder %s181, %s182
      %p194 = scmp.eq.s32.totalorder %s25, 1
      %p195 = por %p193, %p194
      %p197 = scmp.ne.s32.totalorder %s182, %s196
      %p198 = scmp.eq.s32.totalorder %s25, 0
      %p199 = por %p197, %p198
      %s201 = sadd.s32 %s200, 1
      %p204 = scmp.eq.s32.totalorder %s19, 1
      %p205 = scmp.ne.s32.totalorder %s200, %s202
      %p206 = scmp.eq.s32.totalorder %s19, 0
      %p207 = por %p205, %p206
      %p208 = scmp.ne.s32.totalorder %s200, %s202
      %p209 = scmp.eq.s32.totalorder %s24, 1
      %p210 = por %p208, %p209
      %p211 = scmp.ne.s32.totalorder %s202, %s203
      %p212 = scmp.eq.s32.totalorder %s24, 0
      %p213 = por %p211, %p212
      %p214 = scmp.ne.s32.totalorder %s202, %s203
      %p215 = scmp.eq.s32.totalorder %s25, 1
      %p216 = por %p214, %p215
      %p218 = scmp.ne.s32.totalorder %s203, %s217
      %p219 = scmp.eq.s32.totalorder %s25, 0
      %p220 = por %p218, %p219
      %s221 = ssub.s32 %s19, %s26
      %p222 = scmp.eq.s32.totalorder %s221, 0
      %s224 = sadd.s32 %s223, 1
      %s225 = scalar_select %p222, %s223, %s224
      %p228 = pneg %p222
      %p229 = scmp.eq.s32.totalorder %s19, 1
      %p230 = por %p228, %p229
      %p231 = scmp.ne.s32.totalorder %s223, %s226
      %p232 = scmp.eq.s32.totalorder %s19, 0
      %p233 = por %p231, %p232
      %p234 = scmp.ne.s32.totalorder %s223, %s226
      %p235 = scmp.eq.s32.totalorder %s24, 1
      %p236 = por %p234, %p235
      %p237 = scmp.ne.s32.totalorder %s226, %s227
      %p238 = scmp.eq.s32.totalorder %s24, 0
      %p239 = por %p237, %p238
      %p240 = scmp.ne.s32.totalorder %s226, %s227
      %p241 = scmp.eq.s32.totalorder %s25, 1
      %p242 = por %p240, %p241
      %p244 = scmp.ne.s32.totalorder %s227, %s243
      %p245 = scmp.eq.s32.totalorder %s25, 0
      %p246 = por %p244, %p245
      %p247 = scmp.le.s32.totalorder 1, %s19
      %p248 = scmp.lt.s32.totalorder %s19, 3
      %p249 = pnand %p247, %p248
      %p250 = pneg %p249
      // Predicated region
      $region9: #{test_conv_model.1} parent=5 // pred_check
        _
      $region10: #{test_conv_model.1} parent=5 // pred_check_branch
        %252 = sbr.rel (%p249) target = $region12
      $region11: #{test_conv_model.1} parent=5 // pred_region
        %s253 = ssub.s32 %s19, 1
        // Predicated region
        $region13: #{test_conv_model.1} parent=11 // pred_check
          %p254 = pneg %p66
        $region14: #{test_conv_model.1} parent=11 // pred_check_branch
          %256 = sbr.rel (%p254) target = $region16
        $region15: #{test_conv_model.1} parent=11 // pred_region
          _
        $region16: #{test_conv_model.1} parent=11 // pred_fallthru
          _
        // Predicated region
        $region17: #{test_conv_model.1} parent=11 // pred_check
          %p257 = pneg %p87
        $region18: #{test_conv_model.1} parent=11 // pred_check_branch
          %259 = sbr.rel (%p257) target = $region20
        $region19: #{test_conv_model.1} parent=11 // pred_region
          _
        $region20: #{test_conv_model.1} parent=11 // pred_fallthru
          _
        // Predicated region
        $region21: #{test_conv_model.1} parent=11 // pred_check
          %p260 = pneg %p108
        $region22: #{test_conv_model.1} parent=11 // pred_check_branch
          %262 = sbr.rel (%p260) target = $region24
        $region23: #{test_conv_model.1} parent=11 // pred_region
          _
        $region24: #{test_conv_model.1} parent=11 // pred_fallthru
          _
        // Predicated region
        $region25: #{test_conv_model.1} parent=11 // pred_check
          %p263 = pneg %p129
        $region26: #{test_conv_model.1} parent=11 // pred_check_branch
          %265 = sbr.rel (%p263) target = $region28
        $region27: #{test_conv_model.1} parent=11 // pred_region
          _
        $region28: #{test_conv_model.1} parent=11 // pred_fallthru
          _
        // Predicated region
        $region29: #{test_conv_model.1} parent=11 // pred_check
          %p266 = pneg %p150
        $region30: #{test_conv_model.1} parent=11 // pred_check_branch
          %268 = sbr.rel (%p266) target = $region32
        $region31: #{test_conv_model.1} parent=11 // pred_region
          _
        $region32: #{test_conv_model.1} parent=11 // pred_fallthru
          _
        // Predicated region
        $region33: #{test_conv_model.1} parent=11 // pred_check
          %p269 = pneg %p171
        $region34: #{test_conv_model.1} parent=11 // pred_check_branch
          %271 = sbr.rel (%p269) target = $region36
        $region35: #{test_conv_model.1} parent=11 // pred_region
          _
        $region36: #{test_conv_model.1} parent=11 // pred_fallthru
          _
        // Predicated region
        $region37: #{test_conv_model.1} parent=11 // pred_check
          %p272 = pneg %p192
        $region38: #{test_conv_model.1} parent=11 // pred_check_branch
          %274 = sbr.rel (%p272) target = $region40
        $region39: #{test_conv_model.1} parent=11 // pred_region
          %276 = vsyncadd [#allocation5], 0
          %s277 = sshll.u32 %s7, 4
          %s278 = int_to_ptr.hbm [resolvable:$true] %s277
          %s279 = sshll.u32 [#allocation4], 4
          %s280 = int_to_ptr.vmem [resolvable:$true] %s279
          %285 = dma.hbm_to_vmem [thread:$0]  %s278, 17920, %s280, [#allocation5], 896, 896, 56
        $region40: #{test_conv_model.1} parent=11 // pred_fallthru
          _
        // Predicated region
        $region41: #{test_conv_model.1} parent=11 // pred_check
          %p286 = pneg %p213
        $region42: #{test_conv_model.1} parent=11 // pred_check_branch
          %288 = sbr.rel (%p286) target = $region44
        $region43: #{test_conv_model.1} parent=11 // pred_region
          _
        $region44: #{test_conv_model.1} parent=11 // pred_fallthru
          _
      $region12: #{test_conv_model.1} parent=5 // pred_fallthru
        _
      %p289 = scmp.lt.s32.totalorder %s19, 2
      // Predicated region
      $region45: #{test_conv_model.1} parent=5 // pred_check
        %p290 = pneg %p289
      $region46: #{test_conv_model.1} parent=5 // pred_check_branch
        %292 = sbr.rel (%p290) target = $region48
      $region47: #{test_conv_model.1} parent=5 // pred_region
        // Predicated region
        $region49: #{test_conv_model.1} parent=47 // pred_check
          %p293 = pneg %p39
        $region50: #{test_conv_model.1} parent=47 // pred_check_branch
          %295 = sbr.rel (%p293) target = $region52
        $region51: #{test_conv_model.1} parent=47 // pred_region
          %p296 = scmp.lt.s32.totalorder %s19, 1
          %s297 = scalar_select %p296, %s19, 1
          %s298 = smul.addr %s297, 7
          %s299 = smul.addr %s298, 8
          %s300 = scalar_lea.vmem %s0, %s299
        $region52: #{test_conv_model.1} parent=47 // pred_fallthru
          _
      $region48: #{test_conv_model.1} parent=5 // pred_fallthru
        _
      %p301 = scmp.le.s32.totalorder 1, %s19
      %p302 = scmp.lt.s32.totalorder %s19, 3
      %p303 = pnand %p301, %p302
      %p304 = pneg %p303
      // Predicated region
      $region53: #{test_conv_model.1} parent=5 // pred_check
        _
      $region54: #{test_conv_model.1} parent=5 // pred_check_branch
        %306 = sbr.rel (%p303) target = $region56
      $region55: #{test_conv_model.1} parent=5 // pred_region
        %s307 = ssub.s32 %s19, 1
        // Predicated region
        $region57: #{test_conv_model.1} parent=55 // pred_check
          %p308 = pneg %p192
        $region58: #{test_conv_model.1} parent=55 // pred_check_branch
          %310 = sbr.rel (%p308) target = $region60
        $region59: #{test_conv_model.1} parent=55 // pred_region
          %312 = dma.done [#allocation5], 17920
        $region60: #{test_conv_model.1} parent=55 // pred_fallthru
          _
        %p313 = scmp.lt.s32.totalorder %s24, 1
        %s314 = scalar_select %p313, %s24, 1
        %s315 = smul.addr %s314, 7
        %s316 = smul.addr %s315, 8
        %s317 = scalar_lea.vmem %s0, %s316
        %p318 = pneg %p45
        %p319 = pneg %p42
        %p320 = pneg %p66
        %p321 = pneg %p63
        %p322 = pneg %p87
        %p323 = pneg %p84
        %p324 = pneg %p108
        %p325 = pneg %p105
        %p326 = pneg %p129
        %p327 = pneg %p126
        %p328 = pneg %p150
        %p329 = pneg %p147
        %p330 = pneg %p171
        %p331 = pneg %p168
        %p332 = pneg %p192
        %p333 = pneg %p189
        %p334 = pneg %p213
        %p335 = pneg %p210
        %p336 = pneg %p239
        %p337 = pneg %p236
        %s338 = sand.u32 %s226, 1
        %s339 = scalar_lea.sflag [#allocation6], %s338
        %s340 = sand.u32 %s226, 1
        %s341 = scalar_lea.vmem [#allocation7], %s340
        %p342 = scmp.lt.s32.totalorder %s24, 1
        %s343 = scalar_select %p342, %s24, 1
        %s344 = smul.addr %s343, 7
        %s345 = smul.addr %s344, 8
        %s346 = scalar_lea.vmem %s0, %s345
        %v348 = vlaneseq
        %v349 = vand.u32 %v348, 127
        %v350 = vld [vmem:[%s346] sm:$0xff]
        %v351 = vld [vmem:[%s346 + $0x8] sm:$0xff]
        %v352 = vld [vmem:[%s346 + $0x10] sm:$0xff]
        %v353 = vld [vmem:[%s346 + $0x18] sm:$0xff]
        %v354 = vld [vmem:[%s346 + $0x20] sm:$0xff]
        %v355 = vld [vmem:[%s346 + $0x28] sm:$0xff]
        %v356 = vld [vmem:[%s346 + $0x30] sm:$0xff]
        %358 = vrot.lane.b32.xlu0 %v356, 29
        %v359 = vpop.permute.xlu0 %358
        %367 = vrot.lane.b32.xlu0 %v350, 29
        %v368 = vpop.permute.xlu0 %367
        %369 = vrot.lane.b32.xlu0 %v351, 29
        %v370 = vpop.permute.xlu0 %369
        %371 = vrot.lane.b32.xlu0 %v352, 29
        %v372 = vpop.permute.xlu0 %371
        %373 = vrot.lane.b32.xlu0 %v353, 29
        %v374 = vpop.permute.xlu0 %373
        %375 = vrot.lane.b32.xlu0 %v354, 29
        %v376 = vpop.permute.xlu0 %375
        %377 = vrot.lane.b32.xlu0 %v355, 29
        %v378 = vpop.permute.xlu0 %377
        %vm379 = vcmask 236544
        %v380 = vsel %vm379, %v368, %v370
        %v381 = vsel %vm379, %v370, %v372
        %v382 = vsel %vm379, %v372, %v374
        %v383 = vsel %vm379, %v374, %v376
        %v384 = vsel %vm379, %v376, %v378
        %v385 = vsel %vm379, %v378, %v359
        %v393 = vsel %vm379, %v359, %v368
        %v394 = vld [vmem:[%s2] sm:$0xff]
        %v396 = vperm.slane %v394, 0
        %v397 = vperm.slane %v394, 1
        %v398 = vperm.slane %v394, 2
        %v399 = vperm.slane %v394, 3
        %v400 = vperm.slane %v394, 4
        %v401 = vperm.slane %v394, 5
        %v402 = vperm.slane %v394, 6
        %v410 = vmul.f32 %v393, %v396
        %v411 = vmul.f32 %v380, %v397
        %v412 = vmul.f32 %v381, %v398
        %v413 = vmul.f32 %v382, %v399
        %v414 = vmul.f32 %v383, %v400
        %v415 = vmul.f32 %v384, %v401
        %v416 = vmul.f32 %v385, %v402
        %417 = vst [vmem:[#allocation2] sm:$0xff] %v410
        %418 = vst [vmem:[#allocation2 + $0x8] sm:$0xff] %v411
        %419 = vst [vmem:[#allocation2 + $0x10] sm:$0xff] %v412
        %420 = vst [vmem:[#allocation2 + $0x18] sm:$0xff] %v413
        %421 = vst [vmem:[#allocation2 + $0x20] sm:$0xff] %v414
        %422 = vst [vmem:[#allocation2 + $0x28] sm:$0xff] %v415
        %423 = vst [vmem:[#allocation2 + $0x30] sm:$0xff] %v416
        %424 = vrot.lane.b32.xlu0 %v356, 28
        %v425 = vpop.permute.xlu0 %424
        %427 = vrot.lane.b32.xlu0 %v350, 28
        %v428 = vpop.permute.xlu0 %427
        %429 = vrot.lane.b32.xlu0 %v351, 28
        %v430 = vpop.permute.xlu0 %429
        %431 = vrot.lane.b32.xlu0 %v352, 28
        %v432 = vpop.permute.xlu0 %431
        %433 = vrot.lane.b32.xlu0 %v353, 28
        %v434 = vpop.permute.xlu0 %433
        %435 = vrot.lane.b32.xlu0 %v354, 28
        %v436 = vpop.permute.xlu0 %435
        %437 = vrot.lane.b32.xlu0 %v355, 28
        %v438 = vpop.permute.xlu0 %437
        %vm439 = vcmask 228352
        %v440 = vsel %vm439, %v428, %v430
        %v441 = vsel %vm439, %v430, %v432
        %v442 = vsel %vm439, %v432, %v434
        %v443 = vsel %vm439, %v434, %v436
        %v444 = vsel %vm439, %v436, %v438
        %v445 = vsel %vm439, %v438, %v425
        %v453 = vsel %vm439, %v425, %v428
        %s454 = scalar_lea.vmem %s2, 7
        %v455 = vld [vmem:[%s454] sm:$0xff]
        %v457 = vperm.slane %v455, 0
        %v458 = vperm.slane %v455, 1
        %v459 = vperm.slane %v455, 2
        %v460 = vperm.slane %v455, 3
        %v461 = vperm.slane %v455, 4
        %v462 = vperm.slane %v455, 5
        %v463 = vperm.slane %v455, 6
        %v471 = vmul.f32 %v453, %v457
        %v472 = vmul.f32 %v440, %v458
        %v473 = vmul.f32 %v441, %v459
        %v474 = vmul.f32 %v442, %v460
        %v475 = vmul.f32 %v443, %v461
        %v476 = vmul.f32 %v444, %v462
        %v477 = vmul.f32 %v445, %v463
        %478 = vst [vmem:[#allocation2 + $0x38] sm:$0xff] %v471
        %479 = vst [vmem:[#allocation2 + $0x40] sm:$0xff] %v472
        %480 = vst [vmem:[#allocation2 + $0x48] sm:$0xff] %v473
        %481 = vst [vmem:[#allocation2 + $0x50] sm:$0xff] %v474
        %482 = vst [vmem:[#allocation2 + $0x58] sm:$0xff] %v475
        %483 = vst [vmem:[#allocation2 + $0x60] sm:$0xff] %v476
        %484 = vst [vmem:[#allocation2 + $0x68] sm:$0xff] %v477
        %485 = vrot.lane.b32.xlu0 %v356, 27
        %v486 = vpop.permute.xlu0 %485
        %488 = vrot.lane.b32.xlu0 %v350, 27
        %v489 = vpop.permute.xlu0 %488
        %490 = vrot.lane.b32.xlu0 %v351, 27
        %v491 = vpop.permute.xlu0 %490
        %492 = vrot.lane.b32.xlu0 %v352, 27
        %v493 = vpop.permute.xlu0 %492
        %494 = vrot.lane.b32.xlu0 %v353, 27
        %v495 = vpop.permute.xlu0 %494
        %496 = vrot.lane.b32.xlu0 %v354, 27
        %v497 = vpop.permute.xlu0 %496
        %498 = vrot.lane.b32.xlu0 %v355, 27
        %v499 = vpop.permute.xlu0 %498
        %vm500 = vcmask 220160
        %v501 = vsel %vm500, %v489, %v491
        %v502 = vsel %vm500, %v491, %v493
        %v503 = vsel %vm500, %v493, %v495
        %v504 = vsel %vm500, %v495, %v497
        %v505 = vsel %vm500, %v497, %v499
        %v506 = vsel %vm500, %v499, %v486
        %v514 = vsel %vm500, %v486, %v489
        %s515 = scalar_lea.vmem %s2, 14
        %v516 = vld [vmem:[%s515] sm:$0xff]
        %v518 = vperm.slane %v516, 0
        %v519 = vperm.slane %v516, 1
        %v520 = vperm.slane %v516, 2
        %v521 = vperm.slane %v516, 3
        %v522 = vperm.slane %v516, 4
        %v523 = vperm.slane %v516, 5
        %v524 = vperm.slane %v516, 6
        %v532 = vmul.f32 %v514, %v518
        %v533 = vmul.f32 %v501, %v519
        %v534 = vmul.f32 %v502, %v520
        %v535 = vmul.f32 %v503, %v521
        %v536 = vmul.f32 %v504, %v522
        %v537 = vmul.f32 %v505, %v523
        %v538 = vmul.f32 %v506, %v524
        %539 = vst [vmem:[#allocation2 + $0x70] sm:$0xff] %v532
        %540 = vst [vmem:[#allocation2 + $0x78] sm:$0xff] %v533
        %541 = vst [vmem:[#allocation2 + $0x80] sm:$0xff] %v534
        %542 = vst [vmem:[#allocation2 + $0x88] sm:$0xff] %v535
        %543 = vst [vmem:[#allocation2 + $0x90] sm:$0xff] %v536
        %544 = vst [vmem:[#allocation2 + $0x98] sm:$0xff] %v537
        %545 = vst [vmem:[#allocation2 + $0xa0] sm:$0xff] %v538
        %546 = vrot.lane.b32.xlu0 %v356, 1
        %v547 = vpop.permute.xlu0 %546
        %549 = vrot.lane.b32.xlu0 %v350, 1
        %v550 = vpop.permute.xlu0 %549
        %551 = vrot.lane.b32.xlu0 %v351, 1
        %v552 = vpop.permute.xlu0 %551
        %553 = vrot.lane.b32.xlu0 %v352, 1
        %v554 = vpop.permute.xlu0 %553
        %555 = vrot.lane.b32.xlu0 %v353, 1
        %v556 = vpop.permute.xlu0 %555
        %557 = vrot.lane.b32.xlu0 %v354, 1
        %v558 = vpop.permute.xlu0 %557
        %559 = vrot.lane.b32.xlu0 %v355, 1
        %v560 = vpop.permute.xlu0 %559
        %vm561 = vcmask 7168
        %v562 = vsel %vm561, %v550, %v552
        %v563 = vsel %vm561, %v552, %v554
        %v564 = vsel %vm561, %v554, %v556
        %v565 = vsel %vm561, %v556, %v558
        %v566 = vsel %vm561, %v558, %v560
        %v567 = vsel %vm561, %v560, %v547
        %v575 = vsel %vm561, %v547, %v550
        %s576 = scalar_lea.vmem %s2, 21
        %v577 = vld [vmem:[%s576] sm:$0xff]
        %v579 = vperm.slane %v577, 0
        %v580 = vperm.slane %v577, 1
        %v581 = vperm.slane %v577, 2
        %v582 = vperm.slane %v577, 3
        %v583 = vperm.slane %v577, 4
        %v584 = vperm.slane %v577, 5
        %v585 = vperm.slane %v577, 6
        %v593 = vmul.f32 %v575, %v579
        %v594 = vmul.f32 %v562, %v580
        %v595 = vmul.f32 %v563, %v581
        %v596 = vmul.f32 %v564, %v582
        %v597 = vmul.f32 %v565, %v583
        %v598 = vmul.f32 %v566, %v584
        %v599 = vmul.f32 %v567, %v585
        %600 = vst [vmem:[#allocation2 + $0xa8] sm:$0xff] %v593
        %601 = vst [vmem:[#allocation2 + $0xb0] sm:$0xff] %v594
        %602 = vst [vmem:[#allocation2 + $0xb8] sm:$0xff] %v595
        %603 = vst [vmem:[#allocation2 + $0xc0] sm:$0xff] %v596
        %604 = vst [vmem:[#allocation2 + $0xc8] sm:$0xff] %v597
        %605 = vst [vmem:[#allocation2 + $0xd0] sm:$0xff] %v598
        %606 = vst [vmem:[#allocation2 + $0xd8] sm:$0xff] %v599
        %607 = vst [vmem:[#allocation2 + $0xe0] sm:$0xff] %v350
        %608 = vst [vmem:[#allocation2 + $0xe8] sm:$0xff] %v351
        %609 = vst [vmem:[#allocation2 + $0xf0] sm:$0xff] %v352
        %610 = vst [vmem:[#allocation2 + $0xf8] sm:$0xff] %v353
        %611 = vst [vmem:[#allocation2 + $0x100] sm:$0xff] %v354
        %612 = vst [vmem:[#allocation2 + $0x108] sm:$0xff] %v355
        %613 = vst [vmem:[#allocation2 + $0x110] sm:$0xff] %v356
        %614 = vrot.lane.b32.xlu0 %v350, 127
        %v615 = vpop.permute.xlu0 %614
        %616 = vrot.lane.b32.xlu0 %v351, 127
        %v617 = vpop.permute.xlu0 %616
        %618 = vrot.lane.b32.xlu0 %v352, 127
        %v619 = vpop.permute.xlu0 %618
        %620 = vrot.lane.b32.xlu0 %v353, 127
        %v621 = vpop.permute.xlu0 %620
        %622 = vrot.lane.b32.xlu0 %v354, 127
        %v623 = vpop.permute.xlu0 %622
        %624 = vrot.lane.b32.xlu0 %v355, 127
        %v625 = vpop.permute.xlu0 %624
        %626 = vrot.lane.b32.xlu0 %v356, 127
        %v627 = vpop.permute.xlu0 %626
        %vm628 = vcmask 1039360
        %v629 = vsel %vm628, %v615, %v617
        %v630 = vsel %vm628, %v617, %v619
        %v631 = vsel %vm628, %v619, %v621
        %v632 = vsel %vm628, %v621, %v623
        %v633 = vsel %vm628, %v623, %v625
        %v634 = vsel %vm628, %v625, %v627
        %v643 = vsel %vm628, %v627, %v615
        %s644 = scalar_lea.vmem %s2, 35
        %v645 = vld [vmem:[%s644] sm:$0xff]
        %v647 = vperm.slane %v645, 0
        %v648 = vperm.slane %v645, 1
        %v649 = vperm.slane %v645, 2
        %v650 = vperm.slane %v645, 3
        %v651 = vperm.slane %v645, 4
        %v652 = vperm.slane %v645, 5
        %v653 = vperm.slane %v645, 6
        %v661 = vmul.f32 %v629, %v647
        %v662 = vmul.f32 %v630, %v648
        %v663 = vmul.f32 %v631, %v649
        %v664 = vmul.f32 %v632, %v650
        %v665 = vmul.f32 %v633, %v651
        %v666 = vmul.f32 %v634, %v652
        %v667 = vmul.f32 %v643, %v653
        %668 = vst [vmem:[#allocation2 + $0x118] sm:$0xff] %v661
        %669 = vst [vmem:[#allocation2 + $0x120] sm:$0xff] %v662
        %670 = vst [vmem:[#allocation2 + $0x128] sm:$0xff] %v663
        %671 = vst [vmem:[#allocation2 + $0x130] sm:$0xff] %v664
        %672 = vst [vmem:[#allocation2 + $0x138] sm:$0xff] %v665
        %673 = vst [vmem:[#allocation2 + $0x140] sm:$0xff] %v666
        %674 = vst [vmem:[#allocation2 + $0x148] sm:$0xff] %v667
        %675 = vrot.lane.b32.xlu0 %v350, 101
        %v676 = vpop.permute.xlu0 %675
        %677 = vrot.lane.b32.xlu0 %v351, 101
        %v678 = vpop.permute.xlu0 %677
        %679 = vrot.lane.b32.xlu0 %v352, 101
        %v680 = vpop.permute.xlu0 %679
        %681 = vrot.lane.b32.xlu0 %v353, 101
        %v682 = vpop.permute.xlu0 %681
        %683 = vrot.lane.b32.xlu0 %v354, 101
        %v684 = vpop.permute.xlu0 %683
        %685 = vrot.lane.b32.xlu0 %v355, 101
        %v686 = vpop.permute.xlu0 %685
        %687 = vrot.lane.b32.xlu0 %v356, 101
        %v688 = vpop.permute.xlu0 %687
        %vm689 = vcmask 826368
        %v690 = vsel %vm689, %v676, %v678
        %v691 = vsel %vm689, %v678, %v680
        %v692 = vsel %vm689, %v680, %v682
        %v693 = vsel %vm689, %v682, %v684
        %v694 = vsel %vm689, %v684, %v686
        %v695 = vsel %vm689, %v686, %v688
        %v704 = vsel %vm689, %v688, %v676
        %s705 = scalar_lea.vmem %s2, 42
        %v706 = vld [vmem:[%s705] sm:$0xff]
        %v708 = vperm.slane %v706, 0
        %v709 = vperm.slane %v706, 1
        %v710 = vperm.slane %v706, 2
        %v711 = vperm.slane %v706, 3
        %v712 = vperm.slane %v706, 4
        %v713 = vperm.slane %v706, 5
        %v714 = vperm.slane %v706, 6
        %v722 = vmul.f32 %v690, %v708
        %v723 = vmul.f32 %v691, %v709
        %v724 = vmul.f32 %v692, %v710
        %v725 = vmul.f32 %v693, %v711
        %v726 = vmul.f32 %v694, %v712
        %v727 = vmul.f32 %v695, %v713
        %v728 = vmul.f32 %v704, %v714
        %729 = vst [vmem:[#allocation2 + $0x150] sm:$0xff] %v722
        %730 = vst [vmem:[#allocation2 + $0x158] sm:$0xff] %v723
        %731 = vst [vmem:[#allocation2 + $0x160] sm:$0xff] %v724
        %732 = vst [vmem:[#allocation2 + $0x168] sm:$0xff] %v725
        %733 = vst [vmem:[#allocation2 + $0x170] sm:$0xff] %v726
        %734 = vst [vmem:[#allocation2 + $0x178] sm:$0xff] %v727
        %735 = vst [vmem:[#allocation2 + $0x180] sm:$0xff] %v728
        %736 = vrot.lane.b32.xlu0 %v350, 100
        %v737 = vpop.permute.xlu0 %736
        %738 = vrot.lane.b32.xlu0 %v351, 100
        %v739 = vpop.permute.xlu0 %738
        %740 = vrot.lane.b32.xlu0 %v352, 100
        %v741 = vpop.permute.xlu0 %740
        %742 = vrot.lane.b32.xlu0 %v353, 100
        %v743 = vpop.permute.xlu0 %742
        %744 = vrot.lane.b32.xlu0 %v354, 100
        %v745 = vpop.permute.xlu0 %744
        %746 = vrot.lane.b32.xlu0 %v355, 100
        %v747 = vpop.permute.xlu0 %746
        %748 = vrot.lane.b32.xlu0 %v356, 100
        %v749 = vpop.permute.xlu0 %748
        %vm750 = vcmask 818176
        %v751 = vsel %vm750, %v737, %v739
        %v752 = vsel %vm750, %v739, %v741
        %v753 = vsel %vm750, %v741, %v743
        %v754 = vsel %vm750, %v743, %v745
        %v755 = vsel %vm750, %v745, %v747
        %v756 = vsel %vm750, %v747, %v749
        %v765 = vsel %vm750, %v749, %v737
        %s766 = scalar_lea.vmem %s2, 49
        %v767 = vld [vmem:[%s766] sm:$0xff]
        %v769 = vperm.slane %v767, 0
        %v770 = vperm.slane %v767, 1
        %v771 = vperm.slane %v767, 2
        %v772 = vperm.slane %v767, 3
        %v773 = vperm.slane %v767, 4
        %v774 = vperm.slane %v767, 5
        %v775 = vperm.slane %v767, 6
        %v783 = vmul.f32 %v751, %v769
        %v784 = vmul.f32 %v752, %v770
        %v785 = vmul.f32 %v753, %v771
        %v786 = vmul.f32 %v754, %v772
        %v787 = vmul.f32 %v755, %v773
        %v788 = vmul.f32 %v756, %v774
        %v789 = vmul.f32 %v765, %v775
        %790 = vst [vmem:[#allocation2 + $0x188] sm:$0xff] %v783
        %791 = vst [vmem:[#allocation2 + $0x190] sm:$0xff] %v784
        %792 = vst [vmem:[#allocation2 + $0x198] sm:$0xff] %v785
        %793 = vst [vmem:[#allocation2 + $0x1a0] sm:$0xff] %v786
        %794 = vst [vmem:[#allocation2 + $0x1a8] sm:$0xff] %v787
        %795 = vst [vmem:[#allocation2 + $0x1b0] sm:$0xff] %v788
        %796 = vst [vmem:[#allocation2 + $0x1b8] sm:$0xff] %v789
        %797 = vrot.lane.b32.xlu0 %v350, 99
        %v798 = vpop.permute.xlu0 %797
        %799 = vrot.lane.b32.xlu0 %v351, 99
        %v800 = vpop.permute.xlu0 %799
        %801 = vrot.lane.b32.xlu0 %v352, 99
        %v802 = vpop.permute.xlu0 %801
        %803 = vrot.lane.b32.xlu0 %v353, 99
        %v804 = vpop.permute.xlu0 %803
        %805 = vrot.lane.b32.xlu0 %v354, 99
        %v806 = vpop.permute.xlu0 %805
        %807 = vrot.lane.b32.xlu0 %v355, 99
        %v808 = vpop.permute.xlu0 %807
        %809 = vrot.lane.b32.xlu0 %v356, 99
        %v810 = vpop.permute.xlu0 %809
        %vm811 = vcmask 809984
        %v812 = vsel %vm811, %v798, %v800
        %v813 = vsel %vm811, %v800, %v802
        %v814 = vsel %vm811, %v802, %v804
        %v815 = vsel %vm811, %v804, %v806
        %v816 = vsel %vm811, %v806, %v808
        %v817 = vsel %vm811, %v808, %v810
        %v826 = vsel %vm811, %v810, %v798
        %s827 = scalar_lea.vmem %s2, 56
        %v828 = vld [vmem:[%s827] sm:$0xff]
        %v830 = vperm.slane %v828, 0
        %v831 = vperm.slane %v828, 1
        %v832 = vperm.slane %v828, 2
        %v833 = vperm.slane %v828, 3
        %v834 = vperm.slane %v828, 4
        %v835 = vperm.slane %v828, 5
        %v836 = vperm.slane %v828, 6
        %v844 = vmul.f32 %v812, %v830
        %v845 = vmul.f32 %v813, %v831
        %v846 = vmul.f32 %v814, %v832
        %v847 = vmul.f32 %v815, %v833
        %v848 = vmul.f32 %v816, %v834
        %v849 = vmul.f32 %v817, %v835
        %v850 = vmul.f32 %v826, %v836
        %851 = vst [vmem:[#allocation2 + $0x1c0] sm:$0xff] %v844
        %852 = vst [vmem:[#allocation2 + $0x1c8] sm:$0xff] %v845
        %853 = vst [vmem:[#allocation2 + $0x1d0] sm:$0xff] %v846
        %854 = vst [vmem:[#allocation2 + $0x1d8] sm:$0xff] %v847
        %855 = vst [vmem:[#allocation2 + $0x1e0] sm:$0xff] %v848
        %856 = vst [vmem:[#allocation2 + $0x1e8] sm:$0xff] %v849
        %857 = vst [vmem:[#allocation2 + $0x1f0] sm:$0xff] %v850
        %v858 = vld [vmem:[%s1] sm:$0xf]
        %v859 = vld [vmem:[%s1 + $0x4] sm:$0xf]
        %v860 = vld [vmem:[#allocation2] sm:$0xff]
        %v861 = vld [vmem:[#allocation2 + $0x8] sm:$0xff]
        %v862 = vld [vmem:[#allocation2 + $0x10] sm:$0xff]
        %v863 = vld [vmem:[#allocation2 + $0x18] sm:$0xff]
        %v864 = vld [vmem:[#allocation2 + $0x20] sm:$0xff]
        %v865 = vld [vmem:[#allocation2 + $0x28] sm:$0xff]
        %v866 = vld [vmem:[#allocation2 + $0x30] sm:$0xff]
        %v867 = vld [vmem:[#allocation2 + $0x38] sm:$0xff]
        %v868 = vld [vmem:[#allocation2 + $0x40] sm:$0xff]
        %v869 = vld [vmem:[#allocation2 + $0x48] sm:$0xff]
        %v870 = vld [vmem:[#allocation2 + $0x50] sm:$0xff]
        %v871 = vld [vmem:[#allocation2 + $0x58] sm:$0xff]
        %v872 = vld [vmem:[#allocation2 + $0x60] sm:$0xff]
        %v873 = vld [vmem:[#allocation2 + $0x68] sm:$0xff]
        %v874 = vld [vmem:[#allocation2 + $0x70] sm:$0xff]
        %v875 = vld [vmem:[#allocation2 + $0x78] sm:$0xff]
        %v876 = vld [vmem:[#allocation2 + $0x80] sm:$0xff]
        %v877 = vld [vmem:[#allocation2 + $0x88] sm:$0xff]
        %v878 = vld [vmem:[#allocation2 + $0x90] sm:$0xff]
        %v879 = vld [vmem:[#allocation2 + $0x98] sm:$0xff]
        %v880 = vld [vmem:[#allocation2 + $0xa0] sm:$0xff]
        %v881 = vld [vmem:[#allocation2 + $0xa8] sm:$0xff]
        %v882 = vld [vmem:[#allocation2 + $0xb0] sm:$0xff]
        %v883 = vld [vmem:[#allocation2 + $0xb8] sm:$0xff]
        %v884 = vld [vmem:[#allocation2 + $0xc0] sm:$0xff]
        %v885 = vld [vmem:[#allocation2 + $0xc8] sm:$0xff]
        %v886 = vld [vmem:[#allocation2 + $0xd0] sm:$0xff]
        %v887 = vld [vmem:[#allocation2 + $0xd8] sm:$0xff]
        %v888 = vld [vmem:[#allocation2 + $0xe0] sm:$0xff]
        %v889 = vld [vmem:[#allocation2 + $0xe8] sm:$0xff]
        %v890 = vld [vmem:[#allocation2 + $0xf0] sm:$0xff]
        %v891 = vld [vmem:[#allocation2 + $0xf8] sm:$0xff]
        %v892 = vld [vmem:[#allocation2 + $0x100] sm:$0xff]
        %v893 = vld [vmem:[#allocation2 + $0x108] sm:$0xff]
        %v894 = vld [vmem:[#allocation2 + $0x110] sm:$0xff]
        %v895 = vld [vmem:[#allocation2 + $0x118] sm:$0xff]
        %v896 = vld [vmem:[#allocation2 + $0x120] sm:$0xff]
        %v897 = vld [vmem:[#allocation2 + $0x128] sm:$0xff]
        %v898 = vld [vmem:[#allocation2 + $0x130] sm:$0xff]
        %v899 = vld [vmem:[#allocation2 + $0x138] sm:$0xff]
        %v900 = vld [vmem:[#allocation2 + $0x140] sm:$0xff]
        %v901 = vld [vmem:[#allocation2 + $0x148] sm:$0xff]
        %v902 = vld [vmem:[#allocation2 + $0x150] sm:$0xff]
        %v903 = vld [vmem:[#allocation2 + $0x158] sm:$0xff]
        %v904 = vld [vmem:[#allocation2 + $0x160] sm:$0xff]
        %v905 = vld [vmem:[#allocation2 + $0x168] sm:$0xff]
        %v906 = vld [vmem:[#allocation2 + $0x170] sm:$0xff]
        %v907 = vld [vmem:[#allocation2 + $0x178] sm:$0xff]
        %v908 = vld [vmem:[#allocation2 + $0x180] sm:$0xff]
        %v909 = vld [vmem:[#allocation2 + $0x188] sm:$0xff]
        %v910 = vld [vmem:[#allocation2 + $0x190] sm:$0xff]
        %v911 = vld [vmem:[#allocation2 + $0x198] sm:$0xff]
        %v912 = vld [vmem:[#allocation2 + $0x1a0] sm:$0xff]
        %v913 = vld [vmem:[#allocation2 + $0x1a8] sm:$0xff]
        %v914 = vld [vmem:[#allocation2 + $0x1b0] sm:$0xff]
        %v915 = vld [vmem:[#allocation2 + $0x1b8] sm:$0xff]
        %v916 = vld [vmem:[#allocation2 + $0x1c0] sm:$0xff]
        %v917 = vld [vmem:[#allocation2 + $0x1c8] sm:$0xff]
        %v918 = vld [vmem:[#allocation2 + $0x1d0] sm:$0xff]
        %v919 = vld [vmem:[#allocation2 + $0x1d8] sm:$0xff]
        %v920 = vld [vmem:[#allocation2 + $0x1e0] sm:$0xff]
        %v921 = vld [vmem:[#allocation2 + $0x1e8] sm:$0xff]
        %v922 = vld [vmem:[#allocation2 + $0x1f0] sm:$0xff]
        %v923 = vpack.c.bf16 %v867, %v860
        %v924 = vpack.c.bf16 %v868, %v861
        %v925 = vpack.c.bf16 %v869, %v862
        %v926 = vpack.c.bf16 %v870, %v863
        %v927 = vpack.c.bf16 %v871, %v864
        %v928 = vpack.c.bf16 %v872, %v865
        %v929 = vpack.c.bf16 %v873, %v866
        %v930 = vpack.c.bf16 %v881, %v874
        %v931 = vpack.c.bf16 %v882, %v875
        %v932 = vpack.c.bf16 %v883, %v876
        %v933 = vpack.c.bf16 %v884, %v877
        %v934 = vpack.c.bf16 %v885, %v878
        %v935 = vpack.c.bf16 %v886, %v879
        %v936 = vpack.c.bf16 %v887, %v880
        %v937 = vpack.c.bf16 %v895, %v888
        %v938 = vpack.c.bf16 %v896, %v889
        %v939 = vpack.c.bf16 %v897, %v890
        %v940 = vpack.c.bf16 %v898, %v891
        %v941 = vpack.c.bf16 %v899, %v892
        %v942 = vpack.c.bf16 %v900, %v893
        %v943 = vpack.c.bf16 %v901, %v894
        %v944 = vpack.c.bf16 %v909, %v902
        %v945 = vpack.c.bf16 %v910, %v903
        %v946 = vpack.c.bf16 %v911, %v904
        %v947 = vpack.c.bf16 %v912, %v905
        %v948 = vpack.c.bf16 %v913, %v906
        %v949 = vpack.c.bf16 %v914, %v907
        %v950 = vpack.c.bf16 %v915, %v908
        %v951 = vpack.c.bf16 %v916, %v916
        %v952 = vpack.c.bf16 %v917, %v917
        %v953 = vpack.c.bf16 %v918, %v918
        %v954 = vpack.c.bf16 %v919, %v919
        %v955 = vpack.c.bf16 %v920, %v920
        %v956 = vpack.c.bf16 %v921, %v921
        %v957 = vpack.c.bf16 %v922, %v922
        %v958 = vld [vmem:[%s3] sm:$0xff]
        %v959 = vld [vmem:[%s3 + $0x8] sm:$0xff]
        %961 = vset.pattern.permute.xlu0 0
        %962 = vperm.xlu0 %961, %v958
        %v963 = vpop.permute.xlu0 %962
        %966 = vset.pattern.permute.xlu0 0
        %967 = vperm.xlu0 %966, %v959
        %v968 = vpop.permute.xlu0 %967
        %v972 = vunpack.c.l.b16 %v858
        %v973 = vunpack.c.l.b16 %v859
        %v974 = vpack.c.b16 %v973, %v972
        %vm975 = vcmask 588800
        %v977 = vsel %vm975, %v974, 0
        %vm979 = vcmask 1043456
        %v981 = vsel %vm979, %v951, 0
        %v984 = vsel %vm979, %v952, 0
        %v987 = vsel %vm979, %v953, 0
        %v990 = vsel %vm979, %v954, 0
        %v993 = vsel %vm979, %v955, 0
        %v996 = vsel %vm979, %v956, 0
        %v999 = vsel %vm979, %v957, 0
        %1001 = vmatpush.bf16.msra.mxu0 0
        %1002 = vmatpush.bf16.msra.mxu0 0
        %1003 = vmatpush.bf16.msra.mxu0 0
        %1004 = vmatpush.bf16.msra.mxu0 %v981
        %1005 = vmatpush.bf16.msra.mxu0 %v944
        %1006 = vmatpush.bf16.msra.mxu0 %v937
        %1007 = vmatpush.bf16.msra.mxu0 %v930
        %1008 = vmatpush.bf16.msra.mxu0 %v923
        %1009 = vmatmul.bf16.gmra.mxu0 %v977
        %v1010 = vpop.f32.mrf.mxu0
        %v1011 = vadd.f32 %v963, %v1010
        %v1012 = vpop.f32.mrf.mxu0
        %v1013 = vadd.f32 %v968, %v1012
        %1014 = vdwg.mxu0
        %1015 = vmatpush.bf16.msra.mxu0 0
        %1016 = vmatpush.bf16.msra.mxu0 0
        %1017 = vmatpush.bf16.msra.mxu0 0
        %1018 = vmatpush.bf16.msra.mxu0 %v984
        %1019 = vmatpush.bf16.msra.mxu0 %v945
        %1020 = vmatpush.bf16.msra.mxu0 %v938
        %1021 = vmatpush.bf16.msra.mxu0 %v931
        %1022 = vmatpush.bf16.msra.mxu0 %v924
        %1023 = vmatmul.bf16.gmra.mxu0 %v977
        %v1024 = vpop.f32.mrf.mxu0
        %v1025 = vadd.f32 %v963, %v1024
        %v1026 = vpop.f32.mrf.mxu0
        %v1027 = vadd.f32 %v968, %v1026
        %1028 = vdwg.mxu0
        %1029 = vmatpush.bf16.msra.mxu0 0
        %1030 = vmatpush.bf16.msra.mxu0 0
        %1031 = vmatpush.bf16.msra.mxu0 0
        %1032 = vmatpush.bf16.msra.mxu0 %v987
        %1033 = vmatpush.bf16.msra.mxu0 %v946
        %1034 = vmatpush.bf16.msra.mxu0 %v939
        %1035 = vmatpush.bf16.msra.mxu0 %v932
        %1036 = vmatpush.bf16.msra.mxu0 %v925
        %1037 = vmatmul.bf16.gmra.mxu0 %v977
        %v1038 = vpop.f32.mrf.mxu0
        %v1039 = vadd.f32 %v963, %v1038
        %v1040 = vpop.f32.mrf.mxu0
        %v1041 = vadd.f32 %v968, %v1040
        %1042 = vdwg.mxu0
        %1043 = vmatpush.bf16.msra.mxu0 0
        %1044 = vmatpush.bf16.msra.mxu0 0
        %1045 = vmatpush.bf16.msra.mxu0 0
        %1046 = vmatpush.bf16.msra.mxu0 %v990
        %1047 = vmatpush.bf16.msra.mxu0 %v947
        %1048 = vmatpush.bf16.msra.mxu0 %v940
        %1049 = vmatpush.bf16.msra.mxu0 %v933
        %1050 = vmatpush.bf16.msra.mxu0 %v926
        %1051 = vmatmul.bf16.gmra.mxu0 %v977
        %v1052 = vpop.f32.mrf.mxu0
        %v1053 = vadd.f32 %v963, %v1052
        %v1054 = vpop.f32.mrf.mxu0
        %v1055 = vadd.f32 %v968, %v1054
        %1056 = vdwg.mxu0
        %1057 = vmatpush.bf16.msra.mxu0 0
        %1058 = vmatpush.bf16.msra.mxu0 0
        %1059 = vmatpush.bf16.msra.mxu0 0
        %1060 = vmatpush.bf16.msra.mxu0 %v993
        %1061 = vmatpush.bf16.msra.mxu0 %v948
        %1062 = vmatpush.bf16.msra.mxu0 %v941
        %1063 = vmatpush.bf16.msra.mxu0 %v934
        %1064 = vmatpush.bf16.msra.mxu0 %v927
        %1065 = vmatmul.bf16.gmra.mxu0 %v977
        %v1066 = vpop.f32.mrf.mxu0
        %v1067 = vadd.f32 %v963, %v1066
        %v1068 = vpop.f32.mrf.mxu0
        %v1069 = vadd.f32 %v968, %v1068
        %1070 = vdwg.mxu0
        %1071 = vmatpush.bf16.msra.mxu0 0
        %1072 = vmatpush.bf16.msra.mxu0 0
        %1073 = vmatpush.bf16.msra.mxu0 0
        %1074 = vmatpush.bf16.msra.mxu0 %v996
        %1075 = vmatpush.bf16.msra.mxu0 %v949
        %1076 = vmatpush.bf16.msra.mxu0 %v942
        %1077 = vmatpush.bf16.msra.mxu0 %v935
        %1078 = vmatpush.bf16.msra.mxu0 %v928
        %1079 = vmatmul.bf16.gmra.mxu0 %v977
        %v1080 = vpop.f32.mrf.mxu0
        %v1081 = vadd.f32 %v963, %v1080
        %v1082 = vpop.f32.mrf.mxu0
        %v1083 = vadd.f32 %v968, %v1082
        %1084 = vdwg.mxu0
        %1085 = vmatpush.bf16.msra.mxu0 0
        %1086 = vmatpush.bf16.msra.mxu0 0
        %1087 = vmatpush.bf16.msra.mxu0 0
        %1088 = vmatpush.bf16.msra.mxu0 %v999
        %1089 = vmatpush.bf16.msra.mxu0 %v950
        %1090 = vmatpush.bf16.msra.mxu0 %v943
        %1091 = vmatpush.bf16.msra.mxu0 %v936
        %1092 = vmatpush.bf16.msra.mxu0 %v929
        %1093 = vmatmul.bf16.gmra.mxu0 %v977
        %v1094 = vpop.f32.mrf.mxu0
        %v1095 = vadd.f32 %v963, %v1094
        %v1096 = vpop.f32.mrf.mxu0
        %v1097 = vadd.f32 %v968, %v1096
        %1098 = vdwg.mxu0
        %v1099 = vmax.f32 %v1011, 0.0
        %v1100 = vmax.f32 %v1025, 0.0
        %v1101 = vmax.f32 %v1039, 0.0
        %v1102 = vmax.f32 %v1053, 0.0
        %v1103 = vmax.f32 %v1067, 0.0
        %v1104 = vmax.f32 %v1081, 0.0
        %v1105 = vmax.f32 %v1095, 0.0
        %v1106 = vmax.f32 %v1013, 0.0
        %v1107 = vmax.f32 %v1027, 0.0
        %v1108 = vmax.f32 %v1041, 0.0
        %v1109 = vmax.f32 %v1055, 0.0
        %v1110 = vmax.f32 %v1069, 0.0
        %v1111 = vmax.f32 %v1083, 0.0
        %v1112 = vmax.f32 %v1097, 0.0
        %1127 = vrot.lane.b32.xlu0 %v1099, 127
        %v1128 = vpop.permute.xlu0 %1127
        %1129 = vrot.lane.b32.xlu0 %v1100, 127
        %v1130 = vpop.permute.xlu0 %1129
        %1131 = vrot.lane.b32.xlu0 %v1101, 127
        %v1132 = vpop.permute.xlu0 %1131
        %1133 = vrot.lane.b32.xlu0 %v1102, 127
        %v1134 = vpop.permute.xlu0 %1133
        %1135 = vrot.lane.b32.xlu0 %v1103, 127
        %v1136 = vpop.permute.xlu0 %1135
        %1137 = vrot.lane.b32.xlu0 %v1104, 127
        %v1138 = vpop.permute.xlu0 %1137
        %1139 = vrot.lane.b32.xlu0 %v1105, 127
        %v1140 = vpop.permute.xlu0 %1139
        %1141 = vrot.lane.b32.xlu0 %v1106, 127
        %v1142 = vpop.permute.xlu0 %1141
        %1143 = vrot.lane.b32.xlu0 %v1107, 127
        %v1144 = vpop.permute.xlu0 %1143
        %1145 = vrot.lane.b32.xlu0 %v1108, 127
        %v1146 = vpop.permute.xlu0 %1145
        %1147 = vrot.lane.b32.xlu0 %v1109, 127
        %v1148 = vpop.permute.xlu0 %1147
        %1149 = vrot.lane.b32.xlu0 %v1110, 127
        %v1150 = vpop.permute.xlu0 %1149
        %1151 = vrot.lane.b32.xlu0 %v1111, 127
        %v1152 = vpop.permute.xlu0 %1151
        %1153 = vrot.lane.b32.xlu0 %v1112, 127
        %v1154 = vpop.permute.xlu0 %1153
        %v1155 = vsel %vm628, %v1128, %v1130
        %v1156 = vsel %vm628, %v1130, %v1132
        %v1157 = vsel %vm628, %v1132, %v1134
        %v1158 = vsel %vm628, %v1134, %v1136
        %v1159 = vsel %vm628, %v1136, %v1138
        %v1160 = vsel %vm628, %v1138, %v1140
        %v1161 = vsel %vm628, %v1142, %v1144
        %v1162 = vsel %vm628, %v1144, %v1146
        %v1163 = vsel %vm628, %v1146, %v1148
        %v1164 = vsel %vm628, %v1148, %v1150
        %v1165 = vsel %vm628, %v1150, %v1152
        %v1166 = vsel %vm628, %v1152, %v1154
        %v1183 = vsel %vm628, %v1140, %v1128
        %v1184 = vsel %vm628, %v1154, %v1142
        %v1185 = vmax.f32 %v1099, %v1155
        %v1186 = vmax.f32 %v1100, %v1156
        %v1187 = vmax.f32 %v1101, %v1157
        %v1188 = vmax.f32 %v1102, %v1158
        %v1189 = vmax.f32 %v1103, %v1159
        %v1190 = vmax.f32 %v1104, %v1160
        %v1191 = vmax.f32 %v1105, %v1183
        %v1192 = vmax.f32 %v1106, %v1161
        %v1193 = vmax.f32 %v1107, %v1162
        %v1194 = vmax.f32 %v1108, %v1163
        %v1195 = vmax.f32 %v1109, %v1164
        %v1196 = vmax.f32 %v1110, %v1165
        %v1197 = vmax.f32 %v1111, %v1166
        %v1198 = vmax.f32 %v1112, %v1184
        %1213 = vrot.lane.b32.xlu0 %v1185, 100
        %v1214 = vpop.permute.xlu0 %1213
        %1215 = vrot.lane.b32.xlu0 %v1186, 100
        %v1216 = vpop.permute.xlu0 %1215
        %1217 = vrot.lane.b32.xlu0 %v1187, 100
        %v1218 = vpop.permute.xlu0 %1217
        %1219 = vrot.lane.b32.xlu0 %v1188, 100
        %v1220 = vpop.permute.xlu0 %1219
        %1221 = vrot.lane.b32.xlu0 %v1189, 100
        %v1222 = vpop.permute.xlu0 %1221
        %1223 = vrot.lane.b32.xlu0 %v1190, 100
        %v1224 = vpop.permute.xlu0 %1223
        %1225 = vrot.lane.b32.xlu0 %v1191, 100
        %v1226 = vpop.permute.xlu0 %1225
        %1227 = vrot.lane.b32.xlu0 %v1192, 100
        %v1228 = vpop.permute.xlu0 %1227
        %1229 = vrot.lane.b32.xlu0 %v1193, 100
        %v1230 = vpop.permute.xlu0 %1229
        %1231 = vrot.lane.b32.xlu0 %v1194, 100
        %v1232 = vpop.permute.xlu0 %1231
        %1233 = vrot.lane.b32.xlu0 %v1195, 100
        %v1234 = vpop.permute.xlu0 %1233
        %1235 = vrot.lane.b32.xlu0 %v1196, 100
        %v1236 = vpop.permute.xlu0 %1235
        %1237 = vrot.lane.b32.xlu0 %v1197, 100
        %v1238 = vpop.permute.xlu0 %1237
        %1239 = vrot.lane.b32.xlu0 %v1198, 100
        %v1240 = vpop.permute.xlu0 %1239
        %v1241 = vsel %vm750, %v1214, %v1216
        %v1242 = vsel %vm750, %v1216, %v1218
        %v1243 = vsel %vm750, %v1218, %v1220
        %v1244 = vsel %vm750, %v1220, %v1222
        %v1245 = vsel %vm750, %v1222, %v1224
        %v1246 = vsel %vm750, %v1224, %v1226
        %v1247 = vsel %vm750, %v1228, %v1230
        %v1248 = vsel %vm750, %v1230, %v1232
        %v1249 = vsel %vm750, %v1232, %v1234
        %v1250 = vsel %vm750, %v1234, %v1236
        %v1251 = vsel %vm750, %v1236, %v1238
        %v1252 = vsel %vm750, %v1238, %v1240
        %v1269 = vsel %vm750, %v1226, %v1214
        %v1270 = vsel %vm750, %v1240, %v1228
        %v1271 = vmax.f32 %v1185, %v1241
        %v1272 = vmax.f32 %v1186, %v1242
        %v1273 = vmax.f32 %v1187, %v1243
        %v1274 = vmax.f32 %v1188, %v1244
        %v1275 = vmax.f32 %v1189, %v1245
        %v1276 = vmax.f32 %v1190, %v1246
        %v1277 = vmax.f32 %v1191, %v1269
        %v1278 = vmax.f32 %v1192, %v1247
        %v1279 = vmax.f32 %v1193, %v1248
        %v1280 = vmax.f32 %v1194, %v1249
        %v1281 = vmax.f32 %v1195, %v1250
        %v1282 = vmax.f32 %v1196, %v1251
        %v1283 = vmax.f32 %v1197, %v1252
        %v1284 = vmax.f32 %v1198, %v1270
        %1287 = vrot.lane.b32.xlu0 %v1277, 58
        %v1288 = vpop.permute.xlu0 %1287
        %1289 = vrot.lane.b32.xlu0 %v1284, 58
        %v1290 = vpop.permute.xlu0 %1289
        %1305 = vrot.lane.b32.xlu0 %v1271, 58
        %v1306 = vpop.permute.xlu0 %1305
        %1307 = vrot.lane.b32.xlu0 %v1272, 58
        %v1308 = vpop.permute.xlu0 %1307
        %1309 = vrot.lane.b32.xlu0 %v1273, 58
        %v1310 = vpop.permute.xlu0 %1309
        %1311 = vrot.lane.b32.xlu0 %v1274, 58
        %v1312 = vpop.permute.xlu0 %1311
        %1313 = vrot.lane.b32.xlu0 %v1275, 58
        %v1314 = vpop.permute.xlu0 %1313
        %1315 = vrot.lane.b32.xlu0 %v1276, 58
        %v1316 = vpop.permute.xlu0 %1315
        %1317 = vrot.lane.b32.xlu0 %v1278, 58
        %v1318 = vpop.permute.xlu0 %1317
        %1319 = vrot.lane.b32.xlu0 %v1279, 58
        %v1320 = vpop.permute.xlu0 %1319
        %1321 = vrot.lane.b32.xlu0 %v1280, 58
        %v1322 = vpop.permute.xlu0 %1321
        %1323 = vrot.lane.b32.xlu0 %v1281, 58
        %v1324 = vpop.permute.xlu0 %1323
        %1325 = vrot.lane.b32.xlu0 %v1282, 58
        %v1326 = vpop.permute.xlu0 %1325
        %1327 = vrot.lane.b32.xlu0 %v1283, 58
        %v1328 = vpop.permute.xlu0 %1327
        %vm1329 = vcmask 474112
        %v1330 = vsel %vm1329, %v1306, %v1308
        %v1331 = vsel %vm1329, %v1308, %v1310
        %v1332 = vsel %vm1329, %v1310, %v1312
        %v1333 = vsel %vm1329, %v1312, %v1314
        %v1334 = vsel %vm1329, %v1314, %v1316
        %v1335 = vsel %vm1329, %v1316, %v1288
        %v1336 = vsel %vm1329, %v1318, %v1320
        %v1337 = vsel %vm1329, %v1320, %v1322
        %v1338 = vsel %vm1329, %v1322, %v1324
        %v1339 = vsel %vm1329, %v1324, %v1326
        %v1340 = vsel %vm1329, %v1326, %v1328
        %v1341 = vsel %vm1329, %v1328, %v1290
        %v1356 = vsel %vm1329, %v1288, %v1306
        %v1357 = vsel %vm1329, %v1290, %v1318
        %v1358 = vld [vmem:[%s5] sm:$0xff]
        %v1360 = vperm.slane %v1358, 0
        %v1361 = vperm.slane %v1358, 1
        %v1362 = vperm.slane %v1358, 2
        %v1363 = vperm.slane %v1358, 3
        %v1364 = vperm.slane %v1358, 4
        %v1365 = vperm.slane %v1358, 5
        %v1366 = vperm.slane %v1358, 6
        %v1374 = vmul.f32 %v1356, %v1360
        %v1375 = vmul.f32 %v1330, %v1361
        %v1376 = vmul.f32 %v1331, %v1362
        %v1377 = vmul.f32 %v1332, %v1363
        %v1378 = vmul.f32 %v1333, %v1364
        %v1379 = vmul.f32 %v1334, %v1365
        %v1380 = vmul.f32 %v1335, %v1366
        %v1381 = vmul.f32 %v1357, %v1360
        %v1382 = vmul.f32 %v1336, %v1361
        %v1383 = vmul.f32 %v1337, %v1362
        %v1384 = vmul.f32 %v1338, %v1363
        %v1385 = vmul.f32 %v1339, %v1364
        %v1386 = vmul.f32 %v1340, %v1365
        %v1387 = vmul.f32 %v1341, %v1366
        %1388 = vst [vmem:[#allocation3] sm:$0xff] %v1374
        %1389 = vst [vmem:[#allocation3 + $0x8] sm:$0xff] %v1375
        %1390 = vst [vmem:[#allocation3 + $0x10] sm:$0xff] %v1376
        %1391 = vst [vmem:[#allocation3 + $0x18] sm:$0xff] %v1377
        %1392 = vst [vmem:[#allocation3 + $0x20] sm:$0xff] %v1378
        %1393 = vst [vmem:[#allocation3 + $0x28] sm:$0xff] %v1379
        %1394 = vst [vmem:[#allocation3 + $0x30] sm:$0xff] %v1380
        %1395 = vst [vmem:[#allocation3 + $0x38] sm:$0xff] %v1381
        %1396 = vst [vmem:[#allocation3 + $0x40] sm:$0xff] %v1382
        %1397 = vst [vmem:[#allocation3 + $0x48] sm:$0xff] %v1383
        %1398 = vst [vmem:[#allocation3 + $0x50] sm:$0xff] %v1384
        %1399 = vst [vmem:[#allocation3 + $0x58] sm:$0xff] %v1385
        %1400 = vst [vmem:[#allocation3 + $0x60] sm:$0xff] %v1386
        %1401 = vst [vmem:[#allocation3 + $0x68] sm:$0xff] %v1387
        %1402 = vrot.lane.b32.xlu0 %v1277, 56
        %v1403 = vpop.permute.xlu0 %1402
        %1404 = vrot.lane.b32.xlu0 %v1284, 56
        %v1405 = vpop.permute.xlu0 %1404
        %1408 = vrot.lane.b32.xlu0 %v1271, 56
        %v1409 = vpop.permute.xlu0 %1408
        %1410 = vrot.lane.b32.xlu0 %v1272, 56
        %v1411 = vpop.permute.xlu0 %1410
        %1412 = vrot.lane.b32.xlu0 %v1273, 56
        %v1413 = vpop.permute.xlu0 %1412
        %1414 = vrot.lane.b32.xlu0 %v1274, 56
        %v1415 = vpop.permute.xlu0 %1414
        %1416 = vrot.lane.b32.xlu0 %v1275, 56
        %v1417 = vpop.permute.xlu0 %1416
        %1418 = vrot.lane.b32.xlu0 %v1276, 56
        %v1419 = vpop.permute.xlu0 %1418
        %1420 = vrot.lane.b32.xlu0 %v1278, 56
        %v1421 = vpop.permute.xlu0 %1420
        %1422 = vrot.lane.b32.xlu0 %v1279, 56
        %v1423 = vpop.permute.xlu0 %1422
        %1424 = vrot.lane.b32.xlu0 %v1280, 56
        %v1425 = vpop.permute.xlu0 %1424
        %1426 = vrot.lane.b32.xlu0 %v1281, 56
        %v1427 = vpop.permute.xlu0 %1426
        %1428 = vrot.lane.b32.xlu0 %v1282, 56
        %v1429 = vpop.permute.xlu0 %1428
        %1430 = vrot.lane.b32.xlu0 %v1283, 56
        %v1431 = vpop.permute.xlu0 %1430
        %vm1432 = vcmask 457728
        %v1433 = vsel %vm1432, %v1409, %v1411
        %v1434 = vsel %vm1432, %v1411, %v1413
        %v1435 = vsel %vm1432, %v1413, %v1415
        %v1436 = vsel %vm1432, %v1415, %v1417
        %v1437 = vsel %vm1432, %v1417, %v1419
        %v1438 = vsel %vm1432, %v1419, %v1403
        %v1439 = vsel %vm1432, %v1421, %v1423
        %v1440 = vsel %vm1432, %v1423, %v1425
        %v1441 = vsel %vm1432, %v1425, %v1427
        %v1442 = vsel %vm1432, %v1427, %v1429
        %v1443 = vsel %vm1432, %v1429, %v1431
        %v1444 = vsel %vm1432, %v1431, %v1405
        %v1459 = vsel %vm1432, %v1403, %v1409
        %v1460 = vsel %vm1432, %v1405, %v1421
        %s1461 = scalar_lea.vmem %s5, 7
        %v1462 = vld [vmem:[%s1461] sm:$0xff]
        %v1464 = vperm.slane %v1462, 0
        %v1465 = vperm.slane %v1462, 1
        %v1466 = vperm.slane %v1462, 2
        %v1467 = vperm.slane %v1462, 3
        %v1468 = vperm.slane %v1462, 4
        %v1469 = vperm.slane %v1462, 5
        %v1470 = vperm.slane %v1462, 6
        %v1478 = vmul.f32 %v1459, %v1464
        %v1479 = vmul.f32 %v1433, %v1465
        %v1480 = vmul.f32 %v1434, %v1466
        %v1481 = vmul.f32 %v1435, %v1467
        %v1482 = vmul.f32 %v1436, %v1468
        %v1483 = vmul.f32 %v1437, %v1469
        %v1484 = vmul.f32 %v1438, %v1470
        %v1485 = vmul.f32 %v1460, %v1464
        %v1486 = vmul.f32 %v1439, %v1465
        %v1487 = vmul.f32 %v1440, %v1466
        %v1488 = vmul.f32 %v1441, %v1467
        %v1489 = vmul.f32 %v1442, %v1468
        %v1490 = vmul.f32 %v1443, %v1469
        %v1491 = vmul.f32 %v1444, %v1470
        %1492 = vst [vmem:[#allocation3 + $0x70] sm:$0xff] %v1478
        %1493 = vst [vmem:[#allocation3 + $0x78] sm:$0xff] %v1479
        %1494 = vst [vmem:[#allocation3 + $0x80] sm:$0xff] %v1480
        %1495 = vst [vmem:[#allocation3 + $0x88] sm:$0xff] %v1481
        %1496 = vst [vmem:[#allocation3 + $0x90] sm:$0xff] %v1482
        %1497 = vst [vmem:[#allocation3 + $0x98] sm:$0xff] %v1483
        %1498 = vst [vmem:[#allocation3 + $0xa0] sm:$0xff] %v1484
        %1499 = vst [vmem:[#allocation3 + $0xa8] sm:$0xff] %v1485
        %1500 = vst [vmem:[#allocation3 + $0xb0] sm:$0xff] %v1486
        %1501 = vst [vmem:[#allocation3 + $0xb8] sm:$0xff] %v1487
        %1502 = vst [vmem:[#allocation3 + $0xc0] sm:$0xff] %v1488
        %1503 = vst [vmem:[#allocation3 + $0xc8] sm:$0xff] %v1489
        %1504 = vst [vmem:[#allocation3 + $0xd0] sm:$0xff] %v1490
        %1505 = vst [vmem:[#allocation3 + $0xd8] sm:$0xff] %v1491
        %1506 = vrot.lane.b32.xlu0 %v1277, 54
        %v1507 = vpop.permute.xlu0 %1506
        %1508 = vrot.lane.b32.xlu0 %v1284, 54
        %v1509 = vpop.permute.xlu0 %1508
        %1512 = vrot.lane.b32.xlu0 %v1271, 54
        %v1513 = vpop.permute.xlu0 %1512
        %1514 = vrot.lane.b32.xlu0 %v1272, 54
        %v1515 = vpop.permute.xlu0 %1514
        %1516 = vrot.lane.b32.xlu0 %v1273, 54
        %v1517 = vpop.permute.xlu0 %1516
        %1518 = vrot.lane.b32.xlu0 %v1274, 54
        %v1519 = vpop.permute.xlu0 %1518
        %1520 = vrot.lane.b32.xlu0 %v1275, 54
        %v1521 = vpop.permute.xlu0 %1520
        %1522 = vrot.lane.b32.xlu0 %v1276, 54
        %v1523 = vpop.permute.xlu0 %1522
        %1524 = vrot.lane.b32.xlu0 %v1278, 54
        %v1525 = vpop.permute.xlu0 %1524
        %1526 = vrot.lane.b32.xlu0 %v1279, 54
        %v1527 = vpop.permute.xlu0 %1526
        %1528 = vrot.lane.b32.xlu0 %v1280, 54
        %v1529 = vpop.permute.xlu0 %1528
        %1530 = vrot.lane.b32.xlu0 %v1281, 54
        %v1531 = vpop.permute.xlu0 %1530
        %1532 = vrot.lane.b32.xlu0 %v1282, 54
        %v1533 = vpop.permute.xlu0 %1532
        %1534 = vrot.lane.b32.xlu0 %v1283, 54
        %v1535 = vpop.permute.xlu0 %1534
        %vm1536 = vcmask 441344
        %v1537 = vsel %vm1536, %v1513, %v1515
        %v1538 = vsel %vm1536, %v1515, %v1517
        %v1539 = vsel %vm1536, %v1517, %v1519
        %v1540 = vsel %vm1536, %v1519, %v1521
        %v1541 = vsel %vm1536, %v1521, %v1523
        %v1542 = vsel %vm1536, %v1523, %v1507
        %v1543 = vsel %vm1536, %v1525, %v1527
        %v1544 = vsel %vm1536, %v1527, %v1529
        %v1545 = vsel %vm1536, %v1529, %v1531
        %v1546 = vsel %vm1536, %v1531, %v1533
        %v1547 = vsel %vm1536, %v1533, %v1535
        %v1548 = vsel %vm1536, %v1535, %v1509
        %v1563 = vsel %vm1536, %v1507, %v1513
        %v1564 = vsel %vm1536, %v1509, %v1525
        %s1565 = scalar_lea.vmem %s5, 14
        %v1566 = vld [vmem:[%s1565] sm:$0xff]
        %v1568 = vperm.slane %v1566, 0
        %v1569 = vperm.slane %v1566, 1
        %v1570 = vperm.slane %v1566, 2
        %v1571 = vperm.slane %v1566, 3
        %v1572 = vperm.slane %v1566, 4
        %v1573 = vperm.slane %v1566, 5
        %v1574 = vperm.slane %v1566, 6
        %v1582 = vmul.f32 %v1563, %v1568
        %v1583 = vmul.f32 %v1537, %v1569
        %v1584 = vmul.f32 %v1538, %v1570
        %v1585 = vmul.f32 %v1539, %v1571
        %v1586 = vmul.f32 %v1540, %v1572
        %v1587 = vmul.f32 %v1541, %v1573
        %v1588 = vmul.f32 %v1542, %v1574
        %v1589 = vmul.f32 %v1564, %v1568
        %v1590 = vmul.f32 %v1543, %v1569
        %v1591 = vmul.f32 %v1544, %v1570
        %v1592 = vmul.f32 %v1545, %v1571
        %v1593 = vmul.f32 %v1546, %v1572
        %v1594 = vmul.f32 %v1547, %v1573
        %v1595 = vmul.f32 %v1548, %v1574
        %1596 = vst [vmem:[#allocation3 + $0xe0] sm:$0xff] %v1582
        %1597 = vst [vmem:[#allocation3 + $0xe8] sm:$0xff] %v1583
        %1598 = vst [vmem:[#allocation3 + $0xf0] sm:$0xff] %v1584
        %1599 = vst [vmem:[#allocation3 + $0xf8] sm:$0xff] %v1585
        %1600 = vst [vmem:[#allocation3 + $0x100] sm:$0xff] %v1586
        %1601 = vst [vmem:[#allocation3 + $0x108] sm:$0xff] %v1587
        %1602 = vst [vmem:[#allocation3 + $0x110] sm:$0xff] %v1588
        %1603 = vst [vmem:[#allocation3 + $0x118] sm:$0xff] %v1589
        %1604 = vst [vmem:[#allocation3 + $0x120] sm:$0xff] %v1590
        %1605 = vst [vmem:[#allocation3 + $0x128] sm:$0xff] %v1591
        %1606 = vst [vmem:[#allocation3 + $0x130] sm:$0xff] %v1592
        %1607 = vst [vmem:[#allocation3 + $0x138] sm:$0xff] %v1593
        %1608 = vst [vmem:[#allocation3 + $0x140] sm:$0xff] %v1594
        %1609 = vst [vmem:[#allocation3 + $0x148] sm:$0xff] %v1595
        %1610 = vrot.lane.b32.xlu0 %v1277, 2
        %v1611 = vpop.permute.xlu0 %1610
        %1612 = vrot.lane.b32.xlu0 %v1284, 2
        %v1613 = vpop.permute.xlu0 %1612
        %1616 = vrot.lane.b32.xlu0 %v1271, 2
        %v1617 = vpop.permute.xlu0 %1616
        %1618 = vrot.lane.b32.xlu0 %v1272, 2
        %v1619 = vpop.permute.xlu0 %1618
        %1620 = vrot.lane.b32.xlu0 %v1273, 2
        %v1621 = vpop.permute.xlu0 %1620
        %1622 = vrot.lane.b32.xlu0 %v1274, 2
        %v1623 = vpop.permute.xlu0 %1622
        %1624 = vrot.lane.b32.xlu0 %v1275, 2
        %v1625 = vpop.permute.xlu0 %1624
        %1626 = vrot.lane.b32.xlu0 %v1276, 2
        %v1627 = vpop.permute.xlu0 %1626
        %1628 = vrot.lane.b32.xlu0 %v1278, 2
        %v1629 = vpop.permute.xlu0 %1628
        %1630 = vrot.lane.b32.xlu0 %v1279, 2
        %v1631 = vpop.permute.xlu0 %1630
        %1632 = vrot.lane.b32.xlu0 %v1280, 2
        %v1633 = vpop.permute.xlu0 %1632
        %1634 = vrot.lane.b32.xlu0 %v1281, 2
        %v1635 = vpop.permute.xlu0 %1634
        %1636 = vrot.lane.b32.xlu0 %v1282, 2
        %v1637 = vpop.permute.xlu0 %1636
        %1638 = vrot.lane.b32.xlu0 %v1283, 2
        %v1639 = vpop.permute.xlu0 %1638
        %vm1640 = vcmask 15360
        %v1641 = vsel %vm1640, %v1617, %v1619
        %v1642 = vsel %vm1640, %v1619, %v1621
        %v1643 = vsel %vm1640, %v1621, %v1623
        %v1644 = vsel %vm1640, %v1623, %v1625
        %v1645 = vsel %vm1640, %v1625, %v1627
        %v1646 = vsel %vm1640, %v1627, %v1611
        %v1647 = vsel %vm1640, %v1629, %v1631
        %v1648 = vsel %vm1640, %v1631, %v1633
        %v1649 = vsel %vm1640, %v1633, %v1635
        %v1650 = vsel %vm1640, %v1635, %v1637
        %v1651 = vsel %vm1640, %v1637, %v1639
        %v1652 = vsel %vm1640, %v1639, %v1613
        %v1667 = vsel %vm1640, %v1611, %v1617
        %v1668 = vsel %vm1640, %v1613, %v1629
        %s1669 = scalar_lea.vmem %s5, 21
        %v1670 = vld [vmem:[%s1669] sm:$0xff]
        %v1672 = vperm.slane %v1670, 0
        %v1673 = vperm.slane %v1670, 1
        %v1674 = vperm.slane %v1670, 2
        %v1675 = vperm.slane %v1670, 3
        %v1676 = vperm.slane %v1670, 4
        %v1677 = vperm.slane %v1670, 5
        %v1678 = vperm.slane %v1670, 6
        %v1686 = vmul.f32 %v1667, %v1672
        %v1687 = vmul.f32 %v1641, %v1673
        %v1688 = vmul.f32 %v1642, %v1674
        %v1689 = vmul.f32 %v1643, %v1675
        %v1690 = vmul.f32 %v1644, %v1676
        %v1691 = vmul.f32 %v1645, %v1677
        %v1692 = vmul.f32 %v1646, %v1678
        %v1693 = vmul.f32 %v1668, %v1672
        %v1694 = vmul.f32 %v1647, %v1673
        %v1695 = vmul.f32 %v1648, %v1674
        %v1696 = vmul.f32 %v1649, %v1675
        %v1697 = vmul.f32 %v1650, %v1676
        %v1698 = vmul.f32 %v1651, %v1677
        %v1699 = vmul.f32 %v1652, %v1678
        %1700 = vst [vmem:[#allocation3 + $0x150] sm:$0xff] %v1686
        %1701 = vst [vmem:[#allocation3 + $0x158] sm:$0xff] %v1687
        %1702 = vst [vmem:[#allocation3 + $0x160] sm:$0xff] %v1688
        %1703 = vst [vmem:[#allocation3 + $0x168] sm:$0xff] %v1689
        %1704 = vst [vmem:[#allocation3 + $0x170] sm:$0xff] %v1690
        %1705 = vst [vmem:[#allocation3 + $0x178] sm:$0xff] %v1691
        %1706 = vst [vmem:[#allocation3 + $0x180] sm:$0xff] %v1692
        %1707 = vst [vmem:[#allocation3 + $0x188] sm:$0xff] %v1693
        %1708 = vst [vmem:[#allocation3 + $0x190] sm:$0xff] %v1694
        %1709 = vst [vmem:[#allocation3 + $0x198] sm:$0xff] %v1695
        %1710 = vst [vmem:[#allocation3 + $0x1a0] sm:$0xff] %v1696
        %1711 = vst [vmem:[#allocation3 + $0x1a8] sm:$0xff] %v1697
        %1712 = vst [vmem:[#allocation3 + $0x1b0] sm:$0xff] %v1698
        %1713 = vst [vmem:[#allocation3 + $0x1b8] sm:$0xff] %v1699
        %1714 = vst [vmem:[#allocation3 + $0x1c0] sm:$0xff] %v1271
        %1715 = vst [vmem:[#allocation3 + $0x1c8] sm:$0xff] %v1272
        %1716 = vst [vmem:[#allocation3 + $0x1d0] sm:$0xff] %v1273
        %1717 = vst [vmem:[#allocation3 + $0x1d8] sm:$0xff] %v1274
        %1718 = vst [vmem:[#allocation3 + $0x1e0] sm:$0xff] %v1275
        %1719 = vst [vmem:[#allocation3 + $0x1e8] sm:$0xff] %v1276
        %1720 = vst [vmem:[#allocation3 + $0x1f0] sm:$0xff] %v1277
        %1721 = vst [vmem:[#allocation3 + $0x1f8] sm:$0xff] %v1278
        %1722 = vst [vmem:[#allocation3 + $0x200] sm:$0xff] %v1279
        %1723 = vst [vmem:[#allocation3 + $0x208] sm:$0xff] %v1280
        %1724 = vst [vmem:[#allocation3 + $0x210] sm:$0xff] %v1281
        %1725 = vst [vmem:[#allocation3 + $0x218] sm:$0xff] %v1282
        %1726 = vst [vmem:[#allocation3 + $0x220] sm:$0xff] %v1283
        %1727 = vst [vmem:[#allocation3 + $0x228] sm:$0xff] %v1284
        %1728 = vrot.lane.b32.xlu0 %v1271, 126
        %v1729 = vpop.permute.xlu0 %1728
        %1730 = vrot.lane.b32.xlu0 %v1272, 126
        %v1731 = vpop.permute.xlu0 %1730
        %1732 = vrot.lane.b32.xlu0 %v1273, 126
        %v1733 = vpop.permute.xlu0 %1732
        %1734 = vrot.lane.b32.xlu0 %v1274, 126
        %v1735 = vpop.permute.xlu0 %1734
        %1736 = vrot.lane.b32.xlu0 %v1275, 126
        %v1737 = vpop.permute.xlu0 %1736
        %1738 = vrot.lane.b32.xlu0 %v1276, 126
        %v1739 = vpop.permute.xlu0 %1738
        %1740 = vrot.lane.b32.xlu0 %v1277, 126
        %v1741 = vpop.permute.xlu0 %1740
        %1742 = vrot.lane.b32.xlu0 %v1278, 126
        %v1743 = vpop.permute.xlu0 %1742
        %1744 = vrot.lane.b32.xlu0 %v1279, 126
        %v1745 = vpop.permute.xlu0 %1744
        %1746 = vrot.lane.b32.xlu0 %v1280, 126
        %v1747 = vpop.permute.xlu0 %1746
        %1748 = vrot.lane.b32.xlu0 %v1281, 126
        %v1749 = vpop.permute.xlu0 %1748
        %1750 = vrot.lane.b32.xlu0 %v1282, 126
        %v1751 = vpop.permute.xlu0 %1750
        %1752 = vrot.lane.b32.xlu0 %v1283, 126
        %v1753 = vpop.permute.xlu0 %1752
        %1754 = vrot.lane.b32.xlu0 %v1284, 126
        %v1755 = vpop.permute.xlu0 %1754
        %vm1756 = vcmask 1031168
        %v1757 = vsel %vm1756, %v1729, %v1731
        %v1758 = vsel %vm1756, %v1731, %v1733
        %v1759 = vsel %vm1756, %v1733, %v1735
        %v1760 = vsel %vm1756, %v1735, %v1737
        %v1761 = vsel %vm1756, %v1737, %v1739
        %v1762 = vsel %vm1756, %v1739, %v1741
        %v1763 = vsel %vm1756, %v1743, %v1745
        %v1764 = vsel %vm1756, %v1745, %v1747
        %v1765 = vsel %vm1756, %v1747, %v1749
        %v1766 = vsel %vm1756, %v1749, %v1751
        %v1767 = vsel %vm1756, %v1751, %v1753
        %v1768 = vsel %vm1756, %v1753, %v1755
        %v1785 = vsel %vm1756, %v1741, %v1729
        %v1786 = vsel %vm1756, %v1755, %v1743
        %s1787 = scalar_lea.vmem %s5, 35
        %v1788 = vld [vmem:[%s1787] sm:$0xff]
        %v1790 = vperm.slane %v1788, 0
        %v1791 = vperm.slane %v1788, 1
        %v1792 = vperm.slane %v1788, 2
        %v1793 = vperm.slane %v1788, 3
        %v1794 = vperm.slane %v1788, 4
        %v1795 = vperm.slane %v1788, 5
        %v1796 = vperm.slane %v1788, 6
        %v1804 = vmul.f32 %v1757, %v1790
        %v1805 = vmul.f32 %v1758, %v1791
        %v1806 = vmul.f32 %v1759, %v1792
        %v1807 = vmul.f32 %v1760, %v1793
        %v1808 = vmul.f32 %v1761, %v1794
        %v1809 = vmul.f32 %v1762, %v1795
        %v1810 = vmul.f32 %v1785, %v1796
        %v1811 = vmul.f32 %v1763, %v1790
        %v1812 = vmul.f32 %v1764, %v1791
        %v1813 = vmul.f32 %v1765, %v1792
        %v1814 = vmul.f32 %v1766, %v1793
        %v1815 = vmul.f32 %v1767, %v1794
        %v1816 = vmul.f32 %v1768, %v1795
        %v1817 = vmul.f32 %v1786, %v1796
        %1818 = vst [vmem:[#allocation3 + $0x230] sm:$0xff] %v1804
        %1819 = vst [vmem:[#allocation3 + $0x238] sm:$0xff] %v1805
        %1820 = vst [vmem:[#allocation3 + $0x240] sm:$0xff] %v1806
        %1821 = vst [vmem:[#allocation3 + $0x248] sm:$0xff] %v1807
        %1822 = vst [vmem:[#allocation3 + $0x250] sm:$0xff] %v1808
        %1823 = vst [vmem:[#allocation3 + $0x258] sm:$0xff] %v1809
        %1824 = vst [vmem:[#allocation3 + $0x260] sm:$0xff] %v1810
        %1825 = vst [vmem:[#allocation3 + $0x268] sm:$0xff] %v1811
        %1826 = vst [vmem:[#allocation3 + $0x270] sm:$0xff] %v1812
        %1827 = vst [vmem:[#allocation3 + $0x278] sm:$0xff] %v1813
        %1828 = vst [vmem:[#allocation3 + $0x280] sm:$0xff] %v1814
        %1829 = vst [vmem:[#allocation3 + $0x288] sm:$0xff] %v1815
        %1830 = vst [vmem:[#allocation3 + $0x290] sm:$0xff] %v1816
        %1831 = vst [vmem:[#allocation3 + $0x298] sm:$0xff] %v1817
        %1832 = vrot.lane.b32.xlu0 %v1271, 74
        %v1833 = vpop.permute.xlu0 %1832
        %1834 = vrot.lane.b32.xlu0 %v1272, 74
        %v1835 = vpop.permute.xlu0 %1834
        %1836 = vrot.lane.b32.xlu0 %v1273, 74
        %v1837 = vpop.permute.xlu0 %1836
        %1838 = vrot.lane.b32.xlu0 %v1274, 74
        %v1839 = vpop.permute.xlu0 %1838
        %1840 = vrot.lane.b32.xlu0 %v1275, 74
        %v1841 = vpop.permute.xlu0 %1840
        %1842 = vrot.lane.b32.xlu0 %v1276, 74
        %v1843 = vpop.permute.xlu0 %1842
        %1844 = vrot.lane.b32.xlu0 %v1277, 74
        %v1845 = vpop.permute.xlu0 %1844
        %1846 = vrot.lane.b32.xlu0 %v1278, 74
        %v1847 = vpop.permute.xlu0 %1846
        %1848 = vrot.lane.b32.xlu0 %v1279, 74
        %v1849 = vpop.permute.xlu0 %1848
        %1850 = vrot.lane.b32.xlu0 %v1280, 74
        %v1851 = vpop.permute.xlu0 %1850
        %1852 = vrot.lane.b32.xlu0 %v1281, 74
        %v1853 = vpop.permute.xlu0 %1852
        %1854 = vrot.lane.b32.xlu0 %v1282, 74
        %v1855 = vpop.permute.xlu0 %1854
        %1856 = vrot.lane.b32.xlu0 %v1283, 74
        %v1857 = vpop.permute.xlu0 %1856
        %1858 = vrot.lane.b32.xlu0 %v1284, 74
        %v1859 = vpop.permute.xlu0 %1858
        %vm1860 = vcmask 605184
        %v1861 = vsel %vm1860, %v1833, %v1835
        %v1862 = vsel %vm1860, %v1835, %v1837
        %v1863 = vsel %vm1860, %v1837, %v1839
        %v1864 = vsel %vm1860, %v1839, %v1841
        %v1865 = vsel %vm1860, %v1841, %v1843
        %v1866 = vsel %vm1860, %v1843, %v1845
        %v1867 = vsel %vm1860, %v1847, %v1849
        %v1868 = vsel %vm1860, %v1849, %v1851
        %v1869 = vsel %vm1860, %v1851, %v1853
        %v1870 = vsel %vm1860, %v1853, %v1855
        %v1871 = vsel %vm1860, %v1855, %v1857
        %v1872 = vsel %vm1860, %v1857, %v1859
        %v1889 = vsel %vm1860, %v1845, %v1833
        %v1890 = vsel %vm1860, %v1859, %v1847
        %s1891 = scalar_lea.vmem %s5, 42
        %v1892 = vld [vmem:[%s1891] sm:$0xff]
        %v1894 = vperm.slane %v1892, 0
        %v1895 = vperm.slane %v1892, 1
        %v1896 = vperm.slane %v1892, 2
        %v1897 = vperm.slane %v1892, 3
        %v1898 = vperm.slane %v1892, 4
        %v1899 = vperm.slane %v1892, 5
        %v1900 = vperm.slane %v1892, 6
        %v1908 = vmul.f32 %v1861, %v1894
        %v1909 = vmul.f32 %v1862, %v1895
        %v1910 = vmul.f32 %v1863, %v1896
        %v1911 = vmul.f32 %v1864, %v1897
        %v1912 = vmul.f32 %v1865, %v1898
        %v1913 = vmul.f32 %v1866, %v1899
        %v1914 = vmul.f32 %v1889, %v1900
        %v1915 = vmul.f32 %v1867, %v1894
        %v1916 = vmul.f32 %v1868, %v1895
        %v1917 = vmul.f32 %v1869, %v1896
        %v1918 = vmul.f32 %v1870, %v1897
        %v1919 = vmul.f32 %v1871, %v1898
        %v1920 = vmul.f32 %v1872, %v1899
        %v1921 = vmul.f32 %v1890, %v1900
        %1922 = vst [vmem:[#allocation3 + $0x2a0] sm:$0xff] %v1908
        %1923 = vst [vmem:[#allocation3 + $0x2a8] sm:$0xff] %v1909
        %1924 = vst [vmem:[#allocation3 + $0x2b0] sm:$0xff] %v1910
        %1925 = vst [vmem:[#allocation3 + $0x2b8] sm:$0xff] %v1911
        %1926 = vst [vmem:[#allocation3 + $0x2c0] sm:$0xff] %v1912
        %1927 = vst [vmem:[#allocation3 + $0x2c8] sm:$0xff] %v1913
        %1928 = vst [vmem:[#allocation3 + $0x2d0] sm:$0xff] %v1914
        %1929 = vst [vmem:[#allocation3 + $0x2d8] sm:$0xff] %v1915
        %1930 = vst [vmem:[#allocation3 + $0x2e0] sm:$0xff] %v1916
        %1931 = vst [vmem:[#allocation3 + $0x2e8] sm:$0xff] %v1917
        %1932 = vst [vmem:[#allocation3 + $0x2f0] sm:$0xff] %v1918
        %1933 = vst [vmem:[#allocation3 + $0x2f8] sm:$0xff] %v1919
        %1934 = vst [vmem:[#allocation3 + $0x300] sm:$0xff] %v1920
        %1935 = vst [vmem:[#allocation3 + $0x308] sm:$0xff] %v1921
        %1936 = vrot.lane.b32.xlu0 %v1271, 72
        %v1937 = vpop.permute.xlu0 %1936
        %1938 = vrot.lane.b32.xlu0 %v1272, 72
        %v1939 = vpop.permute.xlu0 %1938
        %1940 = vrot.lane.b32.xlu0 %v1273, 72
        %v1941 = vpop.permute.xlu0 %1940
        %1942 = vrot.lane.b32.xlu0 %v1274, 72
        %v1943 = vpop.permute.xlu0 %1942
        %1944 = vrot.lane.b32.xlu0 %v1275, 72
        %v1945 = vpop.permute.xlu0 %1944
        %1946 = vrot.lane.b32.xlu0 %v1276, 72
        %v1947 = vpop.permute.xlu0 %1946
        %1948 = vrot.lane.b32.xlu0 %v1277, 72
        %v1949 = vpop.permute.xlu0 %1948
        %1950 = vrot.lane.b32.xlu0 %v1278, 72
        %v1951 = vpop.permute.xlu0 %1950
        %1952 = vrot.lane.b32.xlu0 %v1279, 72
        %v1953 = vpop.permute.xlu0 %1952
        %1954 = vrot.lane.b32.xlu0 %v1280, 72
        %v1955 = vpop.permute.xlu0 %1954
        %1956 = vrot.lane.b32.xlu0 %v1281, 72
        %v1957 = vpop.permute.xlu0 %1956
        %1958 = vrot.lane.b32.xlu0 %v1282, 72
        %v1959 = vpop.permute.xlu0 %1958
        %1960 = vrot.lane.b32.xlu0 %v1283, 72
        %v1961 = vpop.permute.xlu0 %1960
        %1962 = vrot.lane.b32.xlu0 %v1284, 72
        %v1963 = vpop.permute.xlu0 %1962
        %v1964 = vsel %vm975, %v1937, %v1939
        %v1965 = vsel %vm975, %v1939, %v1941
        %v1966 = vsel %vm975, %v1941, %v1943
        %v1967 = vsel %vm975, %v1943, %v1945
        %v1968 = vsel %vm975, %v1945, %v1947
        %v1969 = vsel %vm975, %v1947, %v1949
        %v1970 = vsel %vm975, %v1951, %v1953
        %v1971 = vsel %vm975, %v1953, %v1955
        %v1972 = vsel %vm975, %v1955, %v1957
        %v1973 = vsel %vm975, %v1957, %v1959
        %v1974 = vsel %vm975, %v1959, %v1961
        %v1975 = vsel %vm975, %v1961, %v1963
        %v1992 = vsel %vm975, %v1949, %v1937
        %v1993 = vsel %vm975, %v1963, %v1951
        %s1994 = scalar_lea.vmem %s5, 49
        %v1995 = vld [vmem:[%s1994] sm:$0xff]
        %v1997 = vperm.slane %v1995, 0
        %v1998 = vperm.slane %v1995, 1
        %v1999 = vperm.slane %v1995, 2
        %v2000 = vperm.slane %v1995, 3
        %v2001 = vperm.slane %v1995, 4
        %v2002 = vperm.slane %v1995, 5
        %v2003 = vperm.slane %v1995, 6
        %v2011 = vmul.f32 %v1964, %v1997
        %v2012 = vmul.f32 %v1965, %v1998
        %v2013 = vmul.f32 %v1966, %v1999
        %v2014 = vmul.f32 %v1967, %v2000
        %v2015 = vmul.f32 %v1968, %v2001
        %v2016 = vmul.f32 %v1969, %v2002
        %v2017 = vmul.f32 %v1992, %v2003
        %v2018 = vmul.f32 %v1970, %v1997
        %v2019 = vmul.f32 %v1971, %v1998
        %v2020 = vmul.f32 %v1972, %v1999
        %v2021 = vmul.f32 %v1973, %v2000
        %v2022 = vmul.f32 %v1974, %v2001
        %v2023 = vmul.f32 %v1975, %v2002
        %v2024 = vmul.f32 %v1993, %v2003
        %2025 = vst [vmem:[#allocation3 + $0x310] sm:$0xff] %v2011
        %2026 = vst [vmem:[#allocation3 + $0x318] sm:$0xff] %v2012
        %2027 = vst [vmem:[#allocation3 + $0x320] sm:$0xff] %v2013
        %2028 = vst [vmem:[#allocation3 + $0x328] sm:$0xff] %v2014
        %2029 = vst [vmem:[#allocation3 + $0x330] sm:$0xff] %v2015
        %2030 = vst [vmem:[#allocation3 + $0x338] sm:$0xff] %v2016
        %2031 = vst [vmem:[#allocation3 + $0x340] sm:$0xff] %v2017
        %2032 = vst [vmem:[#allocation3 + $0x348] sm:$0xff] %v2018
        %2033 = vst [vmem:[#allocation3 + $0x350] sm:$0xff] %v2019
        %2034 = vst [vmem:[#allocation3 + $0x358] sm:$0xff] %v2020
        %2035 = vst [vmem:[#allocation3 + $0x360] sm:$0xff] %v2021
        %2036 = vst [vmem:[#allocation3 + $0x368] sm:$0xff] %v2022
        %2037 = vst [vmem:[#allocation3 + $0x370] sm:$0xff] %v2023
        %2038 = vst [vmem:[#allocation3 + $0x378] sm:$0xff] %v2024
        %2039 = vrot.lane.b32.xlu0 %v1271, 70
        %v2040 = vpop.permute.xlu0 %2039
        %2041 = vrot.lane.b32.xlu0 %v1272, 70
        %v2042 = vpop.permute.xlu0 %2041
        %2043 = vrot.lane.b32.xlu0 %v1273, 70
        %v2044 = vpop.permute.xlu0 %2043
        %2045 = vrot.lane.b32.xlu0 %v1274, 70
        %v2046 = vpop.permute.xlu0 %2045
        %2047 = vrot.lane.b32.xlu0 %v1275, 70
        %v2048 = vpop.permute.xlu0 %2047
        %2049 = vrot.lane.b32.xlu0 %v1276, 70
        %v2050 = vpop.permute.xlu0 %2049
        %2051 = vrot.lane.b32.xlu0 %v1277, 70
        %v2052 = vpop.permute.xlu0 %2051
        %2053 = vrot.lane.b32.xlu0 %v1278, 70
        %v2054 = vpop.permute.xlu0 %2053
        %2055 = vrot.lane.b32.xlu0 %v1279, 70
        %v2056 = vpop.permute.xlu0 %2055
        %2057 = vrot.lane.b32.xlu0 %v1280, 70
        %v2058 = vpop.permute.xlu0 %2057
        %2059 = vrot.lane.b32.xlu0 %v1281, 70
        %v2060 = vpop.permute.xlu0 %2059
        %2061 = vrot.lane.b32.xlu0 %v1282, 70
        %v2062 = vpop.permute.xlu0 %2061
        %2063 = vrot.lane.b32.xlu0 %v1283, 70
        %v2064 = vpop.permute.xlu0 %2063
        %2065 = vrot.lane.b32.xlu0 %v1284, 70
        %v2066 = vpop.permute.xlu0 %2065
        %vm2067 = vcmask 572416
        %v2068 = vsel %vm2067, %v2040, %v2042
        %v2069 = vsel %vm2067, %v2042, %v2044
        %v2070 = vsel %vm2067, %v2044, %v2046
        %v2071 = vsel %vm2067, %v2046, %v2048
        %v2072 = vsel %vm2067, %v2048, %v2050
        %v2073 = vsel %vm2067, %v2050, %v2052
        %v2074 = vsel %vm2067, %v2054, %v2056
        %v2075 = vsel %vm2067, %v2056, %v2058
        %v2076 = vsel %vm2067, %v2058, %v2060
        %v2077 = vsel %vm2067, %v2060, %v2062
        %v2078 = vsel %vm2067, %v2062, %v2064
        %v2079 = vsel %vm2067, %v2064, %v2066
        %v2096 = vsel %vm2067, %v2052, %v2040
        %v2097 = vsel %vm2067, %v2066, %v2054
        %s2098 = scalar_lea.vmem %s5, 56
        %v2099 = vld [vmem:[%s2098] sm:$0xff]
        %v2101 = vperm.slane %v2099, 0
        %v2102 = vperm.slane %v2099, 1
        %v2103 = vperm.slane %v2099, 2
        %v2104 = vperm.slane %v2099, 3
        %v2105 = vperm.slane %v2099, 4
        %v2106 = vperm.slane %v2099, 5
        %v2107 = vperm.slane %v2099, 6
        %v2115 = vmul.f32 %v2068, %v2101
        %v2116 = vmul.f32 %v2069, %v2102
        %v2117 = vmul.f32 %v2070, %v2103
        %v2118 = vmul.f32 %v2071, %v2104
        %v2119 = vmul.f32 %v2072, %v2105
        %v2120 = vmul.f32 %v2073, %v2106
        %v2121 = vmul.f32 %v2096, %v2107
        %v2122 = vmul.f32 %v2074, %v2101
        %v2123 = vmul.f32 %v2075, %v2102
        %v2124 = vmul.f32 %v2076, %v2103
        %v2125 = vmul.f32 %v2077, %v2104
        %v2126 = vmul.f32 %v2078, %v2105
        %v2127 = vmul.f32 %v2079, %v2106
        %v2128 = vmul.f32 %v2097, %v2107
        %2129 = vst [vmem:[#allocation3 + $0x380] sm:$0xff] %v2115
        %2130 = vst [vmem:[#allocation3 + $0x388] sm:$0xff] %v2116
        %2131 = vst [vmem:[#allocation3 + $0x390] sm:$0xff] %v2117
        %2132 = vst [vmem:[#allocation3 + $0x398] sm:$0xff] %v2118
        %2133 = vst [vmem:[#allocation3 + $0x3a0] sm:$0xff] %v2119
        %2134 = vst [vmem:[#allocation3 + $0x3a8] sm:$0xff] %v2120
        %2135 = vst [vmem:[#allocation3 + $0x3b0] sm:$0xff] %v2121
        %2136 = vst [vmem:[#allocation3 + $0x3b8] sm:$0xff] %v2122
        %2137 = vst [vmem:[#allocation3 + $0x3c0] sm:$0xff] %v2123
        %2138 = vst [vmem:[#allocation3 + $0x3c8] sm:$0xff] %v2124
        %2139 = vst [vmem:[#allocation3 + $0x3d0] sm:$0xff] %v2125
        %2140 = vst [vmem:[#allocation3 + $0x3d8] sm:$0xff] %v2126
        %2141 = vst [vmem:[#allocation3 + $0x3e0] sm:$0xff] %v2127
        %2142 = vst [vmem:[#allocation3 + $0x3e8] sm:$0xff] %v2128
        %v2143 = vld [vmem:[%s4] sm:$0xff]
        %v2144 = vld [vmem:[%s4 + $0x8] sm:$0xff]
        %v2145 = vld [vmem:[#allocation3] sm:$0xff]
        %v2146 = vld [vmem:[#allocation3 + $0x8] sm:$0xff]
        %v2147 = vld [vmem:[#allocation3 + $0x10] sm:$0xff]
        %v2148 = vld [vmem:[#allocation3 + $0x18] sm:$0xff]
        %v2149 = vld [vmem:[#allocation3 + $0x20] sm:$0xff]
        %v2150 = vld [vmem:[#allocation3 + $0x28] sm:$0xff]
        %v2151 = vld [vmem:[#allocation3 + $0x30] sm:$0xff]
        %v2152 = vld [vmem:[#allocation3 + $0x38] sm:$0xff]
        %v2153 = vld [vmem:[#allocation3 + $0x40] sm:$0xff]
        %v2154 = vld [vmem:[#allocation3 + $0x48] sm:$0xff]
        %v2155 = vld [vmem:[#allocation3 + $0x50] sm:$0xff]
        %v2156 = vld [vmem:[#allocation3 + $0x58] sm:$0xff]
        %v2157 = vld [vmem:[#allocation3 + $0x60] sm:$0xff]
        %v2158 = vld [vmem:[#allocation3 + $0x68] sm:$0xff]
        %v2159 = vld [vmem:[#allocation3 + $0x70] sm:$0xff]
        %v2160 = vld [vmem:[#allocation3 + $0x78] sm:$0xff]
        %v2161 = vld [vmem:[#allocation3 + $0x80] sm:$0xff]
        %v2162 = vld [vmem:[#allocation3 + $0x88] sm:$0xff]
        %v2163 = vld [vmem:[#allocation3 + $0x90] sm:$0xff]
        %v2164 = vld [vmem:[#allocation3 + $0x98] sm:$0xff]
        %v2165 = vld [vmem:[#allocation3 + $0xa0] sm:$0xff]
        %v2166 = vld [vmem:[#allocation3 + $0xa8] sm:$0xff]
        %v2167 = vld [vmem:[#allocation3 + $0xb0] sm:$0xff]
        %v2168 = vld [vmem:[#allocation3 + $0xb8] sm:$0xff]
        %v2169 = vld [vmem:[#allocation3 + $0xc0] sm:$0xff]
        %v2170 = vld [vmem:[#allocation3 + $0xc8] sm:$0xff]
        %v2171 = vld [vmem:[#allocation3 + $0xd0] sm:$0xff]
        %v2172 = vld [vmem:[#allocation3 + $0xd8] sm:$0xff]
        %v2173 = vld [vmem:[#allocation3 + $0xe0] sm:$0xff]
        %v2174 = vld [vmem:[#allocation3 + $0xe8] sm:$0xff]
        %v2175 = vld [vmem:[#allocation3 + $0xf0] sm:$0xff]
        %v2176 = vld [vmem:[#allocation3 + $0xf8] sm:$0xff]
        %v2177 = vld [vmem:[#allocation3 + $0x100] sm:$0xff]
        %v2178 = vld [vmem:[#allocation3 + $0x108] sm:$0xff]
        %v2179 = vld [vmem:[#allocation3 + $0x110] sm:$0xff]
        %v2180 = vld [vmem:[#allocation3 + $0x118] sm:$0xff]
        %v2181 = vld [vmem:[#allocation3 + $0x120] sm:$0xff]
        %v2182 = vld [vmem:[#allocation3 + $0x128] sm:$0xff]
        %v2183 = vld [vmem:[#allocation3 + $0x130] sm:$0xff]
        %v2184 = vld [vmem:[#allocation3 + $0x138] sm:$0xff]
        %v2185 = vld [vmem:[#allocation3 + $0x140] sm:$0xff]
        %v2186 = vld [vmem:[#allocation3 + $0x148] sm:$0xff]
        %v2187 = vld [vmem:[#allocation3 + $0x150] sm:$0xff]
        %v2188 = vld [vmem:[#allocation3 + $0x158] sm:$0xff]
        %v2189 = vld [vmem:[#allocation3 + $0x160] sm:$0xff]
        %v2190 = vld [vmem:[#allocation3 + $0x168] sm:$0xff]
        %v2191 = vld [vmem:[#allocation3 + $0x170] sm:$0xff]
        %v2192 = vld [vmem:[#allocation3 + $0x178] sm:$0xff]
        %v2193 = vld [vmem:[#allocation3 + $0x180] sm:$0xff]
        %v2194 = vld [vmem:[#allocation3 + $0x188] sm:$0xff]
        %v2195 = vld [vmem:[#allocation3 + $0x190] sm:$0xff]
        %v2196 = vld [vmem:[#allocation3 + $0x198] sm:$0xff]
        %v2197 = vld [vmem:[#allocation3 + $0x1a0] sm:$0xff]
        %v2198 = vld [vmem:[#allocation3 + $0x1a8] sm:$0xff]
        %v2199 = vld [vmem:[#allocation3 + $0x1b0] sm:$0xff]
        %v2200 = vld [vmem:[#allocation3 + $0x1b8] sm:$0xff]
        %v2201 = vld [vmem:[#allocation3 + $0x1c0] sm:$0xff]
        %v2202 = vld [vmem:[#allocation3 + $0x1c8] sm:$0xff]
        %v2203 = vld [vmem:[#allocation3 + $0x1d0] sm:$0xff]
        %v2204 = vld [vmem:[#allocation3 + $0x1d8] sm:$0xff]
        %v2205 = vld [vmem:[#allocation3 + $0x1e0] sm:$0xff]
        %v2206 = vld [vmem:[#allocation3 + $0x1e8] sm:$0xff]
        %v2207 = vld [vmem:[#allocation3 + $0x1f0] sm:$0xff]
        %v2208 = vld [vmem:[#allocation3 + $0x1f8] sm:$0xff]
        %v2209 = vld [vmem:[#allocation3 + $0x200] sm:$0xff]
        %v2210 = vld [vmem:[#allocation3 + $0x208] sm:$0xff]
        %v2211 = vld [vmem:[#allocation3 + $0x210] sm:$0xff]
        %v2212 = vld [vmem:[#allocation3 + $0x218] sm:$0xff]
        %v2213 = vld [vmem:[#allocation3 + $0x220] sm:$0xff]
        %v2214 = vld [vmem:[#allocation3 + $0x228] sm:$0xff]
        %v2215 = vld [vmem:[#allocation3 + $0x230] sm:$0xff]
        %v2216 = vld [vmem:[#allocation3 + $0x238] sm:$0xff]
        %v2217 = vld [vmem:[#allocation3 + $0x240] sm:$0xff]
        %v2218 = vld [vmem:[#allocation3 + $0x248] sm:$0xff]
        %v2219 = vld [vmem:[#allocation3 + $0x250] sm:$0xff]
        %v2220 = vld [vmem:[#allocation3 + $0x258] sm:$0xff]
        %v2221 = vld [vmem:[#allocation3 + $0x260] sm:$0xff]
        %v2222 = vld [vmem:[#allocation3 + $0x268] sm:$0xff]
        %v2223 = vld [vmem:[#allocation3 + $0x270] sm:$0xff]
        %v2224 = vld [vmem:[#allocation3 + $0x278] sm:$0xff]
        %v2225 = vld [vmem:[#allocation3 + $0x280] sm:$0xff]
        %v2226 = vld [vmem:[#allocation3 + $0x288] sm:$0xff]
        %v2227 = vld [vmem:[#allocation3 + $0x290] sm:$0xff]
        %v2228 = vld [vmem:[#allocation3 + $0x298] sm:$0xff]
        %v2229 = vld [vmem:[#allocation3 + $0x2a0] sm:$0xff]
        %v2230 = vld [vmem:[#allocation3 + $0x2a8] sm:$0xff]
        %v2231 = vld [vmem:[#allocation3 + $0x2b0] sm:$0xff]
        %v2232 = vld [vmem:[#allocation3 + $0x2b8] sm:$0xff]
        %v2233 = vld [vmem:[#allocation3 + $0x2c0] sm:$0xff]
        %v2234 = vld [vmem:[#allocation3 + $0x2c8] sm:$0xff]
        %v2235 = vld [vmem:[#allocation3 + $0x2d0] sm:$0xff]
        %v2236 = vld [vmem:[#allocation3 + $0x2d8] sm:$0xff]
        %v2237 = vld [vmem:[#allocation3 + $0x2e0] sm:$0xff]
        %v2238 = vld [vmem:[#allocation3 + $0x2e8] sm:$0xff]
        %v2239 = vld [vmem:[#allocation3 + $0x2f0] sm:$0xff]
        %v2240 = vld [vmem:[#allocation3 + $0x2f8] sm:$0xff]
        %v2241 = vld [vmem:[#allocation3 + $0x300] sm:$0xff]
        %v2242 = vld [vmem:[#allocation3 + $0x308] sm:$0xff]
        %v2243 = vld [vmem:[#allocation3 + $0x310] sm:$0xff]
        %v2244 = vld [vmem:[#allocation3 + $0x318] sm:$0xff]
        %v2245 = vld [vmem:[#allocation3 + $0x320] sm:$0xff]
        %v2246 = vld [vmem:[#allocation3 + $0x328] sm:$0xff]
        %v2247 = vld [vmem:[#allocation3 + $0x330] sm:$0xff]
        %v2248 = vld [vmem:[#allocation3 + $0x338] sm:$0xff]
        %v2249 = vld [vmem:[#allocation3 + $0x340] sm:$0xff]
        %v2250 = vld [vmem:[#allocation3 + $0x348] sm:$0xff]
        %v2251 = vld [vmem:[#allocation3 + $0x350] sm:$0xff]
        %v2252 = vld [vmem:[#allocation3 + $0x358] sm:$0xff]
        %v2253 = vld [vmem:[#allocation3 + $0x360] sm:$0xff]
        %v2254 = vld [vmem:[#allocation3 + $0x368] sm:$0xff]
        %v2255 = vld [vmem:[#allocation3 + $0x370] sm:$0xff]
        %v2256 = vld [vmem:[#allocation3 + $0x378] sm:$0xff]
        %v2257 = vld [vmem:[#allocation3 + $0x380] sm:$0xff]
        %v2258 = vld [vmem:[#allocation3 + $0x388] sm:$0xff]
        %v2259 = vld [vmem:[#allocation3 + $0x390] sm:$0xff]
        %v2260 = vld [vmem:[#allocation3 + $0x398] sm:$0xff]
        %v2261 = vld [vmem:[#allocation3 + $0x3a0] sm:$0xff]
        %v2262 = vld [vmem:[#allocation3 + $0x3a8] sm:$0xff]
        %v2263 = vld [vmem:[#allocation3 + $0x3b0] sm:$0xff]
        %v2264 = vld [vmem:[#allocation3 + $0x3b8] sm:$0xff]
        %v2265 = vld [vmem:[#allocation3 + $0x3c0] sm:$0xff]
        %v2266 = vld [vmem:[#allocation3 + $0x3c8] sm:$0xff]
        %v2267 = vld [vmem:[#allocation3 + $0x3d0] sm:$0xff]
        %v2268 = vld [vmem:[#allocation3 + $0x3d8] sm:$0xff]
        %v2269 = vld [vmem:[#allocation3 + $0x3e0] sm:$0xff]
        %v2270 = vld [vmem:[#allocation3 + $0x3e8] sm:$0xff]
        %v2271 = vpack.c.bf16 %v2152, %v2145
        %v2272 = vpack.c.bf16 %v2153, %v2146
        %v2273 = vpack.c.bf16 %v2154, %v2147
        %v2274 = vpack.c.bf16 %v2155, %v2148
        %v2275 = vpack.c.bf16 %v2156, %v2149
        %v2276 = vpack.c.bf16 %v2157, %v2150
        %v2277 = vpack.c.bf16 %v2158, %v2151
        %v2278 = vpack.c.bf16 %v2166, %v2159
        %v2279 = vpack.c.bf16 %v2167, %v2160
        %v2280 = vpack.c.bf16 %v2168, %v2161
        %v2281 = vpack.c.bf16 %v2169, %v2162
        %v2282 = vpack.c.bf16 %v2170, %v2163
        %v2283 = vpack.c.bf16 %v2171, %v2164
        %v2284 = vpack.c.bf16 %v2172, %v2165
        %v2285 = vpack.c.bf16 %v2180, %v2173
        %v2286 = vpack.c.bf16 %v2181, %v2174
        %v2287 = vpack.c.bf16 %v2182, %v2175
        %v2288 = vpack.c.bf16 %v2183, %v2176
        %v2289 = vpack.c.bf16 %v2184, %v2177
        %v2290 = vpack.c.bf16 %v2185, %v2178
        %v2291 = vpack.c.bf16 %v2186, %v2179
        %v2292 = vpack.c.bf16 %v2194, %v2187
        %v2293 = vpack.c.bf16 %v2195, %v2188
        %v2294 = vpack.c.bf16 %v2196, %v2189
        %v2295 = vpack.c.bf16 %v2197, %v2190
        %v2296 = vpack.c.bf16 %v2198, %v2191
        %v2297 = vpack.c.bf16 %v2199, %v2192
        %v2298 = vpack.c.bf16 %v2200, %v2193
        %v2299 = vpack.c.bf16 %v2208, %v2201
        %v2300 = vpack.c.bf16 %v2209, %v2202
        %v2301 = vpack.c.bf16 %v2210, %v2203
        %v2302 = vpack.c.bf16 %v2211, %v2204
        %v2303 = vpack.c.bf16 %v2212, %v2205
        %v2304 = vpack.c.bf16 %v2213, %v2206
        %v2305 = vpack.c.bf16 %v2214, %v2207
        %v2306 = vpack.c.bf16 %v2222, %v2215
        %v2307 = vpack.c.bf16 %v2223, %v2216
        %v2308 = vpack.c.bf16 %v2224, %v2217
        %v2309 = vpack.c.bf16 %v2225, %v2218
        %v2310 = vpack.c.bf16 %v2226, %v2219
        %v2311 = vpack.c.bf16 %v2227, %v2220
        %v2312 = vpack.c.bf16 %v2228, %v2221
        %v2313 = vpack.c.bf16 %v2236, %v2229
        %v2314 = vpack.c.bf16 %v2237, %v2230
        %v2315 = vpack.c.bf16 %v2238, %v2231
        %v2316 = vpack.c.bf16 %v2239, %v2232
        %v2317 = vpack.c.bf16 %v2240, %v2233
        %v2318 = vpack.c.bf16 %v2241, %v2234
        %v2319 = vpack.c.bf16 %v2242, %v2235
        %v2320 = vpack.c.bf16 %v2250, %v2243
        %v2321 = vpack.c.bf16 %v2251, %v2244
        %v2322 = vpack.c.bf16 %v2252, %v2245
        %v2323 = vpack.c.bf16 %v2253, %v2246
        %v2324 = vpack.c.bf16 %v2254, %v2247
        %v2325 = vpack.c.bf16 %v2255, %v2248
        %v2326 = vpack.c.bf16 %v2256, %v2249
        %v2327 = vpack.c.bf16 %v2264, %v2257
        %v2328 = vpack.c.bf16 %v2265, %v2258
        %v2329 = vpack.c.bf16 %v2266, %v2259
        %v2330 = vpack.c.bf16 %v2267, %v2260
        %v2331 = vpack.c.bf16 %v2268, %v2261
        %v2332 = vpack.c.bf16 %v2269, %v2262
        %v2333 = vpack.c.bf16 %v2270, %v2263
        %v2334 = vld [vmem:[%s6] sm:$0xff]
        %v2335 = vld [vmem:[%s6 + $0x8] sm:$0xff]
        %2337 = vset.pattern.permute.xlu0 0
        %2338 = vperm.xlu0 %2337, %v2334
        %v2339 = vpop.permute.xlu0 %2338
        %2342 = vset.pattern.permute.xlu0 0
        %2343 = vperm.xlu0 %2342, %v2335
        %v2344 = vpop.permute.xlu0 %2343
        %v2348 = vunpack.c.l.b16 %v2143
        %v2349 = vunpack.c.h.b16 %v2143
        %v2350 = vunpack.c.l.b16 %v2144
        %v2351 = vunpack.c.h.b16 %v2144
        %v2352 = vpack.c.b16 %v2350, %v2348
        %v2353 = vpack.c.b16 %v2351, %v2349
        %vm2355 = vcmask 130048
        %v2357 = vsel %vm2355, %v2353, 0
        %2359 = vmatpush.bf16.msra.mxu0 %v2320
        %2360 = vmatpush.bf16.msra.mxu0 %v2313
        %2361 = vmatpush.bf16.msra.mxu0 %v2306
        %2362 = vmatpush.bf16.msra.mxu0 %v2299
        %2363 = vmatpush.bf16.msra.mxu0 %v2292
        %2364 = vmatpush.bf16.msra.mxu0 %v2285
        %2365 = vmatpush.bf16.msra.mxu0 %v2278
        %2366 = vmatpush.bf16.msra.mxu0 %v2271
        %2367 = vmatmul.bf16.gmra.mxu0 %v2352
        %v2368 = vpop.f32.mrf.mxu0
        %v2369 = vadd.f32 %v2339, %v2368
        %v2370 = vpop.f32.mrf.mxu0
        %v2371 = vadd.f32 %v2344, %v2370
        %2372 = vdwg.mxu0
        %2373 = vmatpush.bf16.msra.mxu0 0
        %2374 = vmatpush.bf16.msra.mxu0 0
        %2375 = vmatpush.bf16.msra.mxu0 0
        %2376 = vmatpush.bf16.msra.mxu0 0
        %2377 = vmatpush.bf16.msra.mxu0 0
        %2378 = vmatpush.bf16.msra.mxu0 0
        %2379 = vmatpush.bf16.msra.mxu0 0
        %2380 = vmatpush.bf16.msra.mxu0 %v2327
        %2381 = vmatmul.bf16.gmra.mxu0 %v2357
        %v2382 = vpop.f32.mrf.mxu0
        %v2383 = vadd.f32 %v2369, %v2382
        %v2384 = vpop.f32.mrf.mxu0
        %v2385 = vadd.f32 %v2371, %v2384
        %2386 = vdwg.mxu0
        %2387 = vmatpush.bf16.msra.mxu0 %v2321
        %2388 = vmatpush.bf16.msra.mxu0 %v2314
        %2389 = vmatpush.bf16.msra.mxu0 %v2307
        %2390 = vmatpush.bf16.msra.mxu0 %v2300
        %2391 = vmatpush.bf16.msra.mxu0 %v2293
        %2392 = vmatpush.bf16.msra.mxu0 %v2286
        %2393 = vmatpush.bf16.msra.mxu0 %v2279
        %2394 = vmatpush.bf16.msra.mxu0 %v2272
        %2395 = vmatmul.bf16.gmra.mxu0 %v2352
        %v2396 = vpop.f32.mrf.mxu0
        %v2397 = vadd.f32 %v2339, %v2396
        %v2398 = vpop.f32.mrf.mxu0
        %v2399 = vadd.f32 %v2344, %v2398
        %2400 = vdwg.mxu0
        %2401 = vmatpush.bf16.msra.mxu0 0
        %2402 = vmatpush.bf16.msra.mxu0 0
        %2403 = vmatpush.bf16.msra.mxu0 0
        %2404 = vmatpush.bf16.msra.mxu0 0
        %2405 = vmatpush.bf16.msra.mxu0 0
        %2406 = vmatpush.bf16.msra.mxu0 0
        %2407 = vmatpush.bf16.msra.mxu0 0
        %2408 = vmatpush.bf16.msra.mxu0 %v2328
        %2409 = vmatmul.bf16.gmra.mxu0 %v2357
        %v2410 = vpop.f32.mrf.mxu0
        %v2411 = vadd.f32 %v2397, %v2410
        %v2412 = vpop.f32.mrf.mxu0
        %v2413 = vadd.f32 %v2399, %v2412
        %2414 = vdwg.mxu0
        %2415 = vmatpush.bf16.msra.mxu0 %v2322
        %2416 = vmatpush.bf16.msra.mxu0 %v2315
        %2417 = vmatpush.bf16.msra.mxu0 %v2308
        %2418 = vmatpush.bf16.msra.mxu0 %v2301
        %2419 = vmatpush.bf16.msra.mxu0 %v2294
        %2420 = vmatpush.bf16.msra.mxu0 %v2287
        %2421 = vmatpush.bf16.msra.mxu0 %v2280
        %2422 = vmatpush.bf16.msra.mxu0 %v2273
        %2423 = vmatmul.bf16.gmra.mxu0 %v2352
        %v2424 = vpop.f32.mrf.mxu0
        %v2425 = vadd.f32 %v2339, %v2424
        %v2426 = vpop.f32.mrf.mxu0
        %v2427 = vadd.f32 %v2344, %v2426
        %2428 = vdwg.mxu0
        %2429 = vmatpush.bf16.msra.mxu0 0
        %2430 = vmatpush.bf16.msra.mxu0 0
        %2431 = vmatpush.bf16.msra.mxu0 0
        %2432 = vmatpush.bf16.msra.mxu0 0
        %2433 = vmatpush.bf16.msra.mxu0 0
        %2434 = vmatpush.bf16.msra.mxu0 0
        %2435 = vmatpush.bf16.msra.mxu0 0
        %2436 = vmatpush.bf16.msra.mxu0 %v2329
        %2437 = vmatmul.bf16.gmra.mxu0 %v2357
        %v2438 = vpop.f32.mrf.mxu0
        %v2439 = vadd.f32 %v2425, %v2438
        %v2440 = vpop.f32.mrf.mxu0
        %v2441 = vadd.f32 %v2427, %v2440
        %2442 = vdwg.mxu0
        %2443 = vmatpush.bf16.msra.mxu0 %v2323
        %2444 = vmatpush.bf16.msra.mxu0 %v2316
        %2445 = vmatpush.bf16.msra.mxu0 %v2309
        %2446 = vmatpush.bf16.msra.mxu0 %v2302
        %2447 = vmatpush.bf16.msra.mxu0 %v2295
        %2448 = vmatpush.bf16.msra.mxu0 %v2288
        %2449 = vmatpush.bf16.msra.mxu0 %v2281
        %2450 = vmatpush.bf16.msra.mxu0 %v2274
        %2451 = vmatmul.bf16.gmra.mxu0 %v2352
        %v2452 = vpop.f32.mrf.mxu0
        %v2453 = vadd.f32 %v2339, %v2452
        %v2454 = vpop.f32.mrf.mxu0
        %v2455 = vadd.f32 %v2344, %v2454
        %2456 = vdwg.mxu0
        %2457 = vmatpush.bf16.msra.mxu0 0
        %2458 = vmatpush.bf16.msra.mxu0 0
        %2459 = vmatpush.bf16.msra.mxu0 0
        %2460 = vmatpush.bf16.msra.mxu0 0
        %2461 = vmatpush.bf16.msra.mxu0 0
        %2462 = vmatpush.bf16.msra.mxu0 0
        %2463 = vmatpush.bf16.msra.mxu0 0
        %2464 = vmatpush.bf16.msra.mxu0 %v2330
        %2465 = vmatmul.bf16.gmra.mxu0 %v2357
        %v2466 = vpop.f32.mrf.mxu0
        %v2467 = vadd.f32 %v2453, %v2466
        %v2468 = vpop.f32.mrf.mxu0
        %v2469 = vadd.f32 %v2455, %v2468
        %2470 = vdwg.mxu0
        %2471 = vmatpush.bf16.msra.mxu0 %v2324
        %2472 = vmatpush.bf16.msra.mxu0 %v2317
        %2473 = vmatpush.bf16.msra.mxu0 %v2310
        %2474 = vmatpush.bf16.msra.mxu0 %v2303
        %2475 = vmatpush.bf16.msra.mxu0 %v2296
        %2476 = vmatpush.bf16.msra.mxu0 %v2289
        %2477 = vmatpush.bf16.msra.mxu0 %v2282
        %2478 = vmatpush.bf16.msra.mxu0 %v2275
        %2479 = vmatmul.bf16.gmra.mxu0 %v2352
        %v2480 = vpop.f32.mrf.mxu0
        %v2481 = vadd.f32 %v2339, %v2480
        %v2482 = vpop.f32.mrf.mxu0
        %v2483 = vadd.f32 %v2344, %v2482
        %2484 = vdwg.mxu0
        %2485 = vmatpush.bf16.msra.mxu0 0
        %2486 = vmatpush.bf16.msra.mxu0 0
        %2487 = vmatpush.bf16.msra.mxu0 0
        %2488 = vmatpush.bf16.msra.mxu0 0
        %2489 = vmatpush.bf16.msra.mxu0 0
        %2490 = vmatpush.bf16.msra.mxu0 0
        %2491 = vmatpush.bf16.msra.mxu0 0
        %2492 = vmatpush.bf16.msra.mxu0 %v2331
        %2493 = vmatmul.bf16.gmra.mxu0 %v2357
        %v2494 = vpop.f32.mrf.mxu0
        %v2495 = vadd.f32 %v2481, %v2494
        %v2496 = vpop.f32.mrf.mxu0
        %v2497 = vadd.f32 %v2483, %v2496
        %2498 = vdwg.mxu0
        %2499 = vmatpush.bf16.msra.mxu0 %v2325
        %2500 = vmatpush.bf16.msra.mxu0 %v2318
        %2501 = vmatpush.bf16.msra.mxu0 %v2311
        %2502 = vmatpush.bf16.msra.mxu0 %v2304
        %2503 = vmatpush.bf16.msra.mxu0 %v2297
        %2504 = vmatpush.bf16.msra.mxu0 %v2290
        %2505 = vmatpush.bf16.msra.mxu0 %v2283
        %2506 = vmatpush.bf16.msra.mxu0 %v2276
        %2507 = vmatmul.bf16.gmra.mxu0 %v2352
        %v2508 = vpop.f32.mrf.mxu0
        %v2509 = vadd.f32 %v2339, %v2508
        %v2510 = vpop.f32.mrf.mxu0
        %v2511 = vadd.f32 %v2344, %v2510
        %2512 = vdwg.mxu0
        %2513 = vmatpush.bf16.msra.mxu0 0
        %2514 = vmatpush.bf16.msra.mxu0 0
        %2515 = vmatpush.bf16.msra.mxu0 0
        %2516 = vmatpush.bf16.msra.mxu0 0
        %2517 = vmatpush.bf16.msra.mxu0 0
        %2518 = vmatpush.bf16.msra.mxu0 0
        %2519 = vmatpush.bf16.msra.mxu0 0
        %2520 = vmatpush.bf16.msra.mxu0 %v2332
        %2521 = vmatmul.bf16.gmra.mxu0 %v2357
        %v2522 = vpop.f32.mrf.mxu0
        %v2523 = vadd.f32 %v2509, %v2522
        %v2524 = vpop.f32.mrf.mxu0
        %v2525 = vadd.f32 %v2511, %v2524
        %2526 = vdwg.mxu0
        %2527 = vmatpush.bf16.msra.mxu0 %v2326
        %2528 = vmatpush.bf16.msra.mxu0 %v2319
        %2529 = vmatpush.bf16.msra.mxu0 %v2312
        %2530 = vmatpush.bf16.msra.mxu0 %v2305
        %2531 = vmatpush.bf16.msra.mxu0 %v2298
        %2532 = vmatpush.bf16.msra.mxu0 %v2291
        %2533 = vmatpush.bf16.msra.mxu0 %v2284
        %2534 = vmatpush.bf16.msra.mxu0 %v2277
        %2535 = vmatmul.bf16.gmra.mxu0 %v2352
        %v2536 = vpop.f32.mrf.mxu0
        %v2537 = vadd.f32 %v2339, %v2536
        %v2538 = vpop.f32.mrf.mxu0
        %v2539 = vadd.f32 %v2344, %v2538
        %2540 = vdwg.mxu0
        %2541 = vmatpush.bf16.msra.mxu0 0
        %2542 = vmatpush.bf16.msra.mxu0 0
        %2543 = vmatpush.bf16.msra.mxu0 0
        %2544 = vmatpush.bf16.msra.mxu0 0
        %2545 = vmatpush.bf16.msra.mxu0 0
        %2546 = vmatpush.bf16.msra.mxu0 0
        %2547 = vmatpush.bf16.msra.mxu0 0
        %2548 = vmatpush.bf16.msra.mxu0 %v2333
        %2549 = vmatmul.bf16.gmra.mxu0 %v2357
        %v2550 = vpop.f32.mrf.mxu0
        %v2551 = vadd.f32 %v2537, %v2550
        %v2552 = vpop.f32.mrf.mxu0
        %v2553 = vadd.f32 %v2539, %v2552
        %2554 = vdwg.mxu0
        %v2555 = vmax.f32 %v2383, 0.0
        %v2556 = vmax.f32 %v2411, 0.0
        %v2557 = vmax.f32 %v2439, 0.0
        %v2558 = vmax.f32 %v2467, 0.0
        %v2559 = vmax.f32 %v2495, 0.0
        %v2560 = vmax.f32 %v2523, 0.0
        %v2561 = vmax.f32 %v2551, 0.0
        %v2562 = vmax.f32 %v2385, 0.0
        %v2563 = vmax.f32 %v2413, 0.0
        %v2564 = vmax.f32 %v2441, 0.0
        %v2565 = vmax.f32 %v2469, 0.0
        %v2566 = vmax.f32 %v2497, 0.0
        %v2567 = vmax.f32 %v2525, 0.0
        %v2568 = vmax.f32 %v2553, 0.0
        %2583 = vrot.lane.b32.xlu0 %v2555, 126
        %v2584 = vpop.permute.xlu0 %2583
        %2585 = vrot.lane.b32.xlu0 %v2556, 126
        %v2586 = vpop.permute.xlu0 %2585
        %2587 = vrot.lane.b32.xlu0 %v2557, 126
        %v2588 = vpop.permute.xlu0 %2587
        %2589 = vrot.lane.b32.xlu0 %v2558, 126
        %v2590 = vpop.permute.xlu0 %2589
        %2591 = vrot.lane.b32.xlu0 %v2559, 126
        %v2592 = vpop.permute.xlu0 %2591
        %2593 = vrot.lane.b32.xlu0 %v2560, 126
        %v2594 = vpop.permute.xlu0 %2593
        %2595 = vrot.lane.b32.xlu0 %v2561, 126
        %v2596 = vpop.permute.xlu0 %2595
        %2597 = vrot.lane.b32.xlu0 %v2562, 126
        %v2598 = vpop.permute.xlu0 %2597
        %2599 = vrot.lane.b32.xlu0 %v2563, 126
        %v2600 = vpop.permute.xlu0 %2599
        %2601 = vrot.lane.b32.xlu0 %v2564, 126
        %v2602 = vpop.permute.xlu0 %2601
        %2603 = vrot.lane.b32.xlu0 %v2565, 126
        %v2604 = vpop.permute.xlu0 %2603
        %2605 = vrot.lane.b32.xlu0 %v2566, 126
        %v2606 = vpop.permute.xlu0 %2605
        %2607 = vrot.lane.b32.xlu0 %v2567, 126
        %v2608 = vpop.permute.xlu0 %2607
        %2609 = vrot.lane.b32.xlu0 %v2568, 126
        %v2610 = vpop.permute.xlu0 %2609
        %v2611 = vsel %vm1756, %v2584, %v2586
        %v2612 = vsel %vm1756, %v2586, %v2588
        %v2613 = vsel %vm1756, %v2588, %v2590
        %v2614 = vsel %vm1756, %v2590, %v2592
        %v2615 = vsel %vm1756, %v2592, %v2594
        %v2616 = vsel %vm1756, %v2594, %v2596
        %v2617 = vsel %vm1756, %v2598, %v2600
        %v2618 = vsel %vm1756, %v2600, %v2602
        %v2619 = vsel %vm1756, %v2602, %v2604
        %v2620 = vsel %vm1756, %v2604, %v2606
        %v2621 = vsel %vm1756, %v2606, %v2608
        %v2622 = vsel %vm1756, %v2608, %v2610
        %v2639 = vsel %vm1756, %v2596, %v2584
        %v2640 = vsel %vm1756, %v2610, %v2598
        %v2641 = vmax.f32 %v2555, %v2611
        %v2642 = vmax.f32 %v2556, %v2612
        %v2643 = vmax.f32 %v2557, %v2613
        %v2644 = vmax.f32 %v2558, %v2614
        %v2645 = vmax.f32 %v2559, %v2615
        %v2646 = vmax.f32 %v2560, %v2616
        %v2647 = vmax.f32 %v2561, %v2639
        %v2648 = vmax.f32 %v2562, %v2617
        %v2649 = vmax.f32 %v2563, %v2618
        %v2650 = vmax.f32 %v2564, %v2619
        %v2651 = vmax.f32 %v2565, %v2620
        %v2652 = vmax.f32 %v2566, %v2621
        %v2653 = vmax.f32 %v2567, %v2622
        %v2654 = vmax.f32 %v2568, %v2640
        %2669 = vrot.lane.b32.xlu0 %v2641, 72
        %v2670 = vpop.permute.xlu0 %2669
        %2671 = vrot.lane.b32.xlu0 %v2642, 72
        %v2672 = vpop.permute.xlu0 %2671
        %2673 = vrot.lane.b32.xlu0 %v2643, 72
        %v2674 = vpop.permute.xlu0 %2673
        %2675 = vrot.lane.b32.xlu0 %v2644, 72
        %v2676 = vpop.permute.xlu0 %2675
        %2677 = vrot.lane.b32.xlu0 %v2645, 72
        %v2678 = vpop.permute.xlu0 %2677
        %2679 = vrot.lane.b32.xlu0 %v2646, 72
        %v2680 = vpop.permute.xlu0 %2679
        %2681 = vrot.lane.b32.xlu0 %v2647, 72
        %v2682 = vpop.permute.xlu0 %2681
        %2683 = vrot.lane.b32.xlu0 %v2648, 72
        %v2684 = vpop.permute.xlu0 %2683
        %2685 = vrot.lane.b32.xlu0 %v2649, 72
        %v2686 = vpop.permute.xlu0 %2685
        %2687 = vrot.lane.b32.xlu0 %v2650, 72
        %v2688 = vpop.permute.xlu0 %2687
        %2689 = vrot.lane.b32.xlu0 %v2651, 72
        %v2690 = vpop.permute.xlu0 %2689
        %2691 = vrot.lane.b32.xlu0 %v2652, 72
        %v2692 = vpop.permute.xlu0 %2691
        %2693 = vrot.lane.b32.xlu0 %v2653, 72
        %v2694 = vpop.permute.xlu0 %2693
        %2695 = vrot.lane.b32.xlu0 %v2654, 72
        %v2696 = vpop.permute.xlu0 %2695
        %v2697 = vsel %vm975, %v2670, %v2672
        %v2698 = vsel %vm975, %v2672, %v2674
        %v2699 = vsel %vm975, %v2674, %v2676
        %v2700 = vsel %vm975, %v2676, %v2678
        %v2701 = vsel %vm975, %v2678, %v2680
        %v2702 = vsel %vm975, %v2680, %v2682
        %v2703 = vsel %vm975, %v2684, %v2686
        %v2704 = vsel %vm975, %v2686, %v2688
        %v2705 = vsel %vm975, %v2688, %v2690
        %v2706 = vsel %vm975, %v2690, %v2692
        %v2707 = vsel %vm975, %v2692, %v2694
        %v2708 = vsel %vm975, %v2694, %v2696
        %v2725 = vsel %vm975, %v2682, %v2670
        %v2726 = vsel %vm975, %v2696, %v2684
        %v2727 = vmax.f32 %v2641, %v2697
        %v2728 = vmax.f32 %v2642, %v2698
        %v2729 = vmax.f32 %v2643, %v2699
        %v2730 = vmax.f32 %v2644, %v2700
        %v2731 = vmax.f32 %v2645, %v2701
        %v2732 = vmax.f32 %v2646, %v2702
        %v2733 = vmax.f32 %v2647, %v2725
        %v2734 = vmax.f32 %v2648, %v2703
        %v2735 = vmax.f32 %v2649, %v2704
        %v2736 = vmax.f32 %v2650, %v2705
        %v2737 = vmax.f32 %v2651, %v2706
        %v2738 = vmax.f32 %v2652, %v2707
        %v2739 = vmax.f32 %v2653, %v2708
        %v2740 = vmax.f32 %v2654, %v2726
        %v2741 = vld [vmem:[%s8] sm:$0x1]
        %v2742 = vld [vmem:[#allocation4] sm:$0xff]
        %v2743 = vld [vmem:[#allocation4 + $0x8] sm:$0xff]
        %v2744 = vld [vmem:[#allocation4 + $0x10] sm:$0xff]
        %v2745 = vld [vmem:[#allocation4 + $0x18] sm:$0xff]
        %v2746 = vld [vmem:[#allocation4 + $0x20] sm:$0xff]
        %v2747 = vld [vmem:[#allocation4 + $0x28] sm:$0xff]
        %v2748 = vld [vmem:[#allocation4 + $0x30] sm:$0xff]
        %v2749 = vld [vmem:[#allocation4 + $0x38] sm:$0xff]
        %v2750 = vld [vmem:[#allocation4 + $0x40] sm:$0xff]
        %v2751 = vld [vmem:[#allocation4 + $0x48] sm:$0xff]
        %v2752 = vld [vmem:[#allocation4 + $0x50] sm:$0xff]
        %v2753 = vld [vmem:[#allocation4 + $0x58] sm:$0xff]
        %v2754 = vld [vmem:[#allocation4 + $0x60] sm:$0xff]
        %v2755 = vld [vmem:[#allocation4 + $0x68] sm:$0xff]
        %v2756 = vmul.f32 %v2727, %v2742
        %v2757 = vmul.f32 %v2728, %v2743
        %v2758 = vmul.f32 %v2729, %v2744
        %v2759 = vmul.f32 %v2730, %v2745
        %v2760 = vmul.f32 %v2731, %v2746
        %v2761 = vmul.f32 %v2732, %v2747
        %v2762 = vmul.f32 %v2733, %v2748
        %v2763 = vmul.f32 %v2734, %v2749
        %v2764 = vmul.f32 %v2735, %v2750
        %v2765 = vmul.f32 %v2736, %v2751
        %v2766 = vmul.f32 %v2737, %v2752
        %v2767 = vmul.f32 %v2738, %v2753
        %v2768 = vmul.f32 %v2739, %v2754
        %v2769 = vmul.f32 %v2740, %v2755
        %v2770 = vadd.f32 %v2756, %v2757
        %v2771 = vadd.f32 %v2770, %v2758
        %v2772 = vadd.f32 %v2771, %v2759
        %v2773 = vadd.f32 %v2772, %v2760
        %v2774 = vadd.f32 %v2773, %v2761
        %v2775 = vadd.f32 %v2774, %v2762
        %2776 = vadd.xlane.f32.xlu0 %v2775
        %v2777 = vpop.xlane.xlu0 %2776
        %v2778 = vadd.f32 %v2763, %v2764
        %v2779 = vadd.f32 %v2778, %v2765
        %v2780 = vadd.f32 %v2779, %v2766
        %v2781 = vadd.f32 %v2780, %v2767
        %v2782 = vadd.f32 %v2781, %v2768
        %v2783 = vadd.f32 %v2782, %v2769
        %2784 = vadd.xlane.f32.xlu0 %v2783
        %v2785 = vpop.xlane.xlu0 %2784
        %v2786 = vadd.f32 %v2777, %v2785
        %v2787 = vrot.slane %v2786, 4
        %v2788 = vadd.f32 %v2786, %v2787
        %v2789 = vrot.slane %v2788, 2
        %v2790 = vadd.f32 %v2788, %v2789
        %v2791 = vrot.slane %v2790, 1
        %v2792 = vadd.f32 %v2790, %v2791
        %vm2793 = vcmp.eq.s32.totalorder %v349, 0
        %v2794 = vsel %vm2793, %v2792, 0.0
        %v2795 = vadd.f32 %v2741, %v2794
        %s2796 = scalar_lea.vmem [#allocation4], 112
        %v2797 = vld [vmem:[%s2796] sm:$0xff]
        %v2798 = vld [vmem:[%s2796 + $0x8] sm:$0xff]
        %v2799 = vld [vmem:[%s2796 + $0x10] sm:$0xff]
        %v2800 = vld [vmem:[%s2796 + $0x18] sm:$0xff]
        %v2801 = vld [vmem:[%s2796 + $0x20] sm:$0xff]
        %v2802 = vld [vmem:[%s2796 + $0x28] sm:$0xff]
        %v2803 = vld [vmem:[%s2796 + $0x30] sm:$0xff]
        %v2804 = vld [vmem:[%s2796 + $0x38] sm:$0xff]
        %v2805 = vld [vmem:[%s2796 + $0x40] sm:$0xff]
        %v2806 = vld [vmem:[%s2796 + $0x48] sm:$0xff]
        %v2807 = vld [vmem:[%s2796 + $0x50] sm:$0xff]
        %v2808 = vld [vmem:[%s2796 + $0x58] sm:$0xff]
        %v2809 = vld [vmem:[%s2796 + $0x60] sm:$0xff]
        %v2810 = vld [vmem:[%s2796 + $0x68] sm:$0xff]
        %v2811 = vmul.f32 %v2727, %v2797
        %v2812 = vmul.f32 %v2728, %v2798
        %v2813 = vmul.f32 %v2729, %v2799
        %v2814 = vmul.f32 %v2730, %v2800
        %v2815 = vmul.f32 %v2731, %v2801
        %v2816 = vmul.f32 %v2732, %v2802
        %v2817 = vmul.f32 %v2733, %v2803
        %v2818 = vmul.f32 %v2734, %v2804
        %v2819 = vmul.f32 %v2735, %v2805
        %v2820 = vmul.f32 %v2736, %v2806
        %v2821 = vmul.f32 %v2737, %v2807
        %v2822 = vmul.f32 %v2738, %v2808
        %v2823 = vmul.f32 %v2739, %v2809
        %v2824 = vmul.f32 %v2740, %v2810
        %v2825 = vadd.f32 %v2811, %v2812
        %v2826 = vadd.f32 %v2825, %v2813
        %v2827 = vadd.f32 %v2826, %v2814
        %v2828 = vadd.f32 %v2827, %v2815
        %v2829 = vadd.f32 %v2828, %v2816
        %v2830 = vadd.f32 %v2829, %v2817
        %2831 = vadd.xlane.f32.xlu0 %v2830
        %v2832 = vpop.xlane.xlu0 %2831
        %v2833 = vadd.f32 %v2818, %v2819
        %v2834 = vadd.f32 %v2833, %v2820
        %v2835 = vadd.f32 %v2834, %v2821
        %v2836 = vadd.f32 %v2835, %v2822
        %v2837 = vadd.f32 %v2836, %v2823
        %v2838 = vadd.f32 %v2837, %v2824
        %2839 = vadd.xlane.f32.xlu0 %v2838
        %v2840 = vpop.xlane.xlu0 %2839
        %v2841 = vadd.f32 %v2832, %v2840
        %v2842 = vrot.slane %v2841, 4
        %v2843 = vadd.f32 %v2841, %v2842
        %v2844 = vrot.slane %v2843, 2
        %v2845 = vadd.f32 %v2843, %v2844
        %v2846 = vrot.slane %v2845, 1
        %v2847 = vadd.f32 %v2845, %v2846
        %vm2848 = vcmp.eq.s32.totalorder %v349, 1
        %v2849 = vsel %vm2848, %v2847, 0.0
        %v2850 = vadd.f32 %v2795, %v2849
        %s2851 = scalar_lea.vmem [#allocation4], 224
        %v2852 = vld [vmem:[%s2851] sm:$0xff]
        %v2853 = vld [vmem:[%s2851 + $0x8] sm:$0xff]
        %v2854 = vld [vmem:[%s2851 + $0x10] sm:$0xff]
        %v2855 = vld [vmem:[%s2851 + $0x18] sm:$0xff]
        %v2856 = vld [vmem:[%s2851 + $0x20] sm:$0xff]
        %v2857 = vld [vmem:[%s2851 + $0x28] sm:$0xff]
        %v2858 = vld [vmem:[%s2851 + $0x30] sm:$0xff]
        %v2859 = vld [vmem:[%s2851 + $0x38] sm:$0xff]
        %v2860 = vld [vmem:[%s2851 + $0x40] sm:$0xff]
        %v2861 = vld [vmem:[%s2851 + $0x48] sm:$0xff]
        %v2862 = vld [vmem:[%s2851 + $0x50] sm:$0xff]
        %v2863 = vld [vmem:[%s2851 + $0x58] sm:$0xff]
        %v2864 = vld [vmem:[%s2851 + $0x60] sm:$0xff]
        %v2865 = vld [vmem:[%s2851 + $0x68] sm:$0xff]
        %v2866 = vmul.f32 %v2727, %v2852
        %v2867 = vmul.f32 %v2728, %v2853
        %v2868 = vmul.f32 %v2729, %v2854
        %v2869 = vmul.f32 %v2730, %v2855
        %v2870 = vmul.f32 %v2731, %v2856
        %v2871 = vmul.f32 %v2732, %v2857
        %v2872 = vmul.f32 %v2733, %v2858
        %v2873 = vmul.f32 %v2734, %v2859
        %v2874 = vmul.f32 %v2735, %v2860
        %v2875 = vmul.f32 %v2736, %v2861
        %v2876 = vmul.f32 %v2737, %v2862
        %v2877 = vmul.f32 %v2738, %v2863
        %v2878 = vmul.f32 %v2739, %v2864
        %v2879 = vmul.f32 %v2740, %v2865
        %v2880 = vadd.f32 %v2866, %v2867
        %v2881 = vadd.f32 %v2880, %v2868
        %v2882 = vadd.f32 %v2881, %v2869
        %v2883 = vadd.f32 %v2882, %v2870
        %v2884 = vadd.f32 %v2883, %v2871
        %v2885 = vadd.f32 %v2884, %v2872
        %2886 = vadd.xlane.f32.xlu0 %v2885
        %v2887 = vpop.xlane.xlu0 %2886
        %v2888 = vadd.f32 %v2873, %v2874
        %v2889 = vadd.f32 %v2888, %v2875
        %v2890 = vadd.f32 %v2889, %v2876
        %v2891 = vadd.f32 %v2890, %v2877
        %v2892 = vadd.f32 %v2891, %v2878
        %v2893 = vadd.f32 %v2892, %v2879
        %2894 = vadd.xlane.f32.xlu0 %v2893
        %v2895 = vpop.xlane.xlu0 %2894
        %v2896 = vadd.f32 %v2887, %v2895
        %v2897 = vrot.slane %v2896, 4
        %v2898 = vadd.f32 %v2896, %v2897
        %v2899 = vrot.slane %v2898, 2
        %v2900 = vadd.f32 %v2898, %v2899
        %v2901 = vrot.slane %v2900, 1
        %v2902 = vadd.f32 %v2900, %v2901
        %vm2903 = vcmp.eq.s32.totalorder %v349, 2
        %v2904 = vsel %vm2903, %v2902, 0.0
        %v2905 = vadd.f32 %v2850, %v2904
        %s2906 = scalar_lea.vmem [#allocation4], 336
        %v2907 = vld [vmem:[%s2906] sm:$0xff]
        %v2908 = vld [vmem:[%s2906 + $0x8] sm:$0xff]
        %v2909 = vld [vmem:[%s2906 + $0x10] sm:$0xff]
        %v2910 = vld [vmem:[%s2906 + $0x18] sm:$0xff]
        %v2911 = vld [vmem:[%s2906 + $0x20] sm:$0xff]
        %v2912 = vld [vmem:[%s2906 + $0x28] sm:$0xff]
        %v2913 = vld [vmem:[%s2906 + $0x30] sm:$0xff]
        %v2914 = vld [vmem:[%s2906 + $0x38] sm:$0xff]
        %v2915 = vld [vmem:[%s2906 + $0x40] sm:$0xff]
        %v2916 = vld [vmem:[%s2906 + $0x48] sm:$0xff]
        %v2917 = vld [vmem:[%s2906 + $0x50] sm:$0xff]
        %v2918 = vld [vmem:[%s2906 + $0x58] sm:$0xff]
        %v2919 = vld [vmem:[%s2906 + $0x60] sm:$0xff]
        %v2920 = vld [vmem:[%s2906 + $0x68] sm:$0xff]
        %v2921 = vmul.f32 %v2727, %v2907
        %v2922 = vmul.f32 %v2728, %v2908
        %v2923 = vmul.f32 %v2729, %v2909
        %v2924 = vmul.f32 %v2730, %v2910
        %v2925 = vmul.f32 %v2731, %v2911
        %v2926 = vmul.f32 %v2732, %v2912
        %v2927 = vmul.f32 %v2733, %v2913
        %v2928 = vmul.f32 %v2734, %v2914
        %v2929 = vmul.f32 %v2735, %v2915
        %v2930 = vmul.f32 %v2736, %v2916
        %v2931 = vmul.f32 %v2737, %v2917
        %v2932 = vmul.f32 %v2738, %v2918
        %v2933 = vmul.f32 %v2739, %v2919
        %v2934 = vmul.f32 %v2740, %v2920
        %v2935 = vadd.f32 %v2921, %v2922
        %v2936 = vadd.f32 %v2935, %v2923
        %v2937 = vadd.f32 %v2936, %v2924
        %v2938 = vadd.f32 %v2937, %v2925
        %v2939 = vadd.f32 %v2938, %v2926
        %v2940 = vadd.f32 %v2939, %v2927
        %2941 = vadd.xlane.f32.xlu0 %v2940
        %v2942 = vpop.xlane.xlu0 %2941
        %v2943 = vadd.f32 %v2928, %v2929
        %v2944 = vadd.f32 %v2943, %v2930
        %v2945 = vadd.f32 %v2944, %v2931
        %v2946 = vadd.f32 %v2945, %v2932
        %v2947 = vadd.f32 %v2946, %v2933
        %v2948 = vadd.f32 %v2947, %v2934
        %2949 = vadd.xlane.f32.xlu0 %v2948
        %v2950 = vpop.xlane.xlu0 %2949
        %v2951 = vadd.f32 %v2942, %v2950
        %v2952 = vrot.slane %v2951, 4
        %v2953 = vadd.f32 %v2951, %v2952
        %v2954 = vrot.slane %v2953, 2
        %v2955 = vadd.f32 %v2953, %v2954
        %v2956 = vrot.slane %v2955, 1
        %v2957 = vadd.f32 %v2955, %v2956
        %vm2958 = vcmp.eq.s32.totalorder %v349, 3
        %v2959 = vsel %vm2958, %v2957, 0.0
        %v2960 = vadd.f32 %v2905, %v2959
        %s2961 = scalar_lea.vmem [#allocation4], 448
        %v2962 = vld [vmem:[%s2961] sm:$0xff]
        %v2963 = vld [vmem:[%s2961 + $0x8] sm:$0xff]
        %v2964 = vld [vmem:[%s2961 + $0x10] sm:$0xff]
        %v2965 = vld [vmem:[%s2961 + $0x18] sm:$0xff]
        %v2966 = vld [vmem:[%s2961 + $0x20] sm:$0xff]
        %v2967 = vld [vmem:[%s2961 + $0x28] sm:$0xff]
        %v2968 = vld [vmem:[%s2961 + $0x30] sm:$0xff]
        %v2969 = vld [vmem:[%s2961 + $0x38] sm:$0xff]
        %v2970 = vld [vmem:[%s2961 + $0x40] sm:$0xff]
        %v2971 = vld [vmem:[%s2961 + $0x48] sm:$0xff]
        %v2972 = vld [vmem:[%s2961 + $0x50] sm:$0xff]
        %v2973 = vld [vmem:[%s2961 + $0x58] sm:$0xff]
        %v2974 = vld [vmem:[%s2961 + $0x60] sm:$0xff]
        %v2975 = vld [vmem:[%s2961 + $0x68] sm:$0xff]
        %v2976 = vmul.f32 %v2727, %v2962
        %v2977 = vmul.f32 %v2728, %v2963
        %v2978 = vmul.f32 %v2729, %v2964
        %v2979 = vmul.f32 %v2730, %v2965
        %v2980 = vmul.f32 %v2731, %v2966
        %v2981 = vmul.f32 %v2732, %v2967
        %v2982 = vmul.f32 %v2733, %v2968
        %v2983 = vmul.f32 %v2734, %v2969
        %v2984 = vmul.f32 %v2735, %v2970
        %v2985 = vmul.f32 %v2736, %v2971
        %v2986 = vmul.f32 %v2737, %v2972
        %v2987 = vmul.f32 %v2738, %v2973
        %v2988 = vmul.f32 %v2739, %v2974
        %v2989 = vmul.f32 %v2740, %v2975
        %v2990 = vadd.f32 %v2976, %v2977
        %v2991 = vadd.f32 %v2990, %v2978
        %v2992 = vadd.f32 %v2991, %v2979
        %v2993 = vadd.f32 %v2992, %v2980
        %v2994 = vadd.f32 %v2993, %v2981
        %v2995 = vadd.f32 %v2994, %v2982
        %2996 = vadd.xlane.f32.xlu0 %v2995
        %v2997 = vpop.xlane.xlu0 %2996
        %v2998 = vadd.f32 %v2983, %v2984
        %v2999 = vadd.f32 %v2998, %v2985
        %v3000 = vadd.f32 %v2999, %v2986
        %v3001 = vadd.f32 %v3000, %v2987
        %v3002 = vadd.f32 %v3001, %v2988
        %v3003 = vadd.f32 %v3002, %v2989
        %3004 = vadd.xlane.f32.xlu0 %v3003
        %v3005 = vpop.xlane.xlu0 %3004
        %v3006 = vadd.f32 %v2997, %v3005
        %v3007 = vrot.slane %v3006, 4
        %v3008 = vadd.f32 %v3006, %v3007
        %v3009 = vrot.slane %v3008, 2
        %v3010 = vadd.f32 %v3008, %v3009
        %v3011 = vrot.slane %v3010, 1
        %v3012 = vadd.f32 %v3010, %v3011
        %vm3013 = vcmp.eq.s32.totalorder %v349, 4
        %v3014 = vsel %vm3013, %v3012, 0.0
        %v3015 = vadd.f32 %v2960, %v3014
        %s3016 = scalar_lea.vmem [#allocation4], 560
        %v3017 = vld [vmem:[%s3016] sm:$0xff]
        %v3018 = vld [vmem:[%s3016 + $0x8] sm:$0xff]
        %v3019 = vld [vmem:[%s3016 + $0x10] sm:$0xff]
        %v3020 = vld [vmem:[%s3016 + $0x18] sm:$0xff]
        %v3021 = vld [vmem:[%s3016 + $0x20] sm:$0xff]
        %v3022 = vld [vmem:[%s3016 + $0x28] sm:$0xff]
        %v3023 = vld [vmem:[%s3016 + $0x30] sm:$0xff]
        %v3024 = vld [vmem:[%s3016 + $0x38] sm:$0xff]
        %v3025 = vld [vmem:[%s3016 + $0x40] sm:$0xff]
        %v3026 = vld [vmem:[%s3016 + $0x48] sm:$0xff]
        %v3027 = vld [vmem:[%s3016 + $0x50] sm:$0xff]
        %v3028 = vld [vmem:[%s3016 + $0x58] sm:$0xff]
        %v3029 = vld [vmem:[%s3016 + $0x60] sm:$0xff]
        %v3030 = vld [vmem:[%s3016 + $0x68] sm:$0xff]
        %v3031 = vmul.f32 %v2727, %v3017
        %v3032 = vmul.f32 %v2728, %v3018
        %v3033 = vmul.f32 %v2729, %v3019
        %v3034 = vmul.f32 %v2730, %v3020
        %v3035 = vmul.f32 %v2731, %v3021
        %v3036 = vmul.f32 %v2732, %v3022
        %v3037 = vmul.f32 %v2733, %v3023
        %v3038 = vmul.f32 %v2734, %v3024
        %v3039 = vmul.f32 %v2735, %v3025
        %v3040 = vmul.f32 %v2736, %v3026
        %v3041 = vmul.f32 %v2737, %v3027
        %v3042 = vmul.f32 %v2738, %v3028
        %v3043 = vmul.f32 %v2739, %v3029
        %v3044 = vmul.f32 %v2740, %v3030
        %v3045 = vadd.f32 %v3031, %v3032
        %v3046 = vadd.f32 %v3045, %v3033
        %v3047 = vadd.f32 %v3046, %v3034
        %v3048 = vadd.f32 %v3047, %v3035
        %v3049 = vadd.f32 %v3048, %v3036
        %v3050 = vadd.f32 %v3049, %v3037
        %3051 = vadd.xlane.f32.xlu0 %v3050
        %v3052 = vpop.xlane.xlu0 %3051
        %v3053 = vadd.f32 %v3038, %v3039
        %v3054 = vadd.f32 %v3053, %v3040
        %v3055 = vadd.f32 %v3054, %v3041
        %v3056 = vadd.f32 %v3055, %v3042
        %v3057 = vadd.f32 %v3056, %v3043
        %v3058 = vadd.f32 %v3057, %v3044
        %3059 = vadd.xlane.f32.xlu0 %v3058
        %v3060 = vpop.xlane.xlu0 %3059
        %v3061 = vadd.f32 %v3052, %v3060
        %v3062 = vrot.slane %v3061, 4
        %v3063 = vadd.f32 %v3061, %v3062
        %v3064 = vrot.slane %v3063, 2
        %v3065 = vadd.f32 %v3063, %v3064
        %v3066 = vrot.slane %v3065, 1
        %v3067 = vadd.f32 %v3065, %v3066
        %vm3068 = vcmp.eq.s32.totalorder %v349, 5
        %v3069 = vsel %vm3068, %v3067, 0.0
        %v3070 = vadd.f32 %v3015, %v3069
        %s3071 = scalar_lea.vmem [#allocation4], 672
        %v3072 = vld [vmem:[%s3071] sm:$0xff]
        %v3073 = vld [vmem:[%s3071 + $0x8] sm:$0xff]
        %v3074 = vld [vmem:[%s3071 + $0x10] sm:$0xff]
        %v3075 = vld [vmem:[%s3071 + $0x18] sm:$0xff]
        %v3076 = vld [vmem:[%s3071 + $0x20] sm:$0xff]
        %v3077 = vld [vmem:[%s3071 + $0x28] sm:$0xff]
        %v3078 = vld [vmem:[%s3071 + $0x30] sm:$0xff]
        %v3079 = vld [vmem:[%s3071 + $0x38] sm:$0xff]
        %v3080 = vld [vmem:[%s3071 + $0x40] sm:$0xff]
        %v3081 = vld [vmem:[%s3071 + $0x48] sm:$0xff]
        %v3082 = vld [vmem:[%s3071 + $0x50] sm:$0xff]
        %v3083 = vld [vmem:[%s3071 + $0x58] sm:$0xff]
        %v3084 = vld [vmem:[%s3071 + $0x60] sm:$0xff]
        %v3085 = vld [vmem:[%s3071 + $0x68] sm:$0xff]
        %v3086 = vmul.f32 %v2727, %v3072
        %v3087 = vmul.f32 %v2728, %v3073
        %v3088 = vmul.f32 %v2729, %v3074
        %v3089 = vmul.f32 %v2730, %v3075
        %v3090 = vmul.f32 %v2731, %v3076
        %v3091 = vmul.f32 %v2732, %v3077
        %v3092 = vmul.f32 %v2733, %v3078
        %v3093 = vmul.f32 %v2734, %v3079
        %v3094 = vmul.f32 %v2735, %v3080
        %v3095 = vmul.f32 %v2736, %v3081
        %v3096 = vmul.f32 %v2737, %v3082
        %v3097 = vmul.f32 %v2738, %v3083
        %v3098 = vmul.f32 %v2739, %v3084
        %v3099 = vmul.f32 %v2740, %v3085
        %v3100 = vadd.f32 %v3086, %v3087
        %v3101 = vadd.f32 %v3100, %v3088
        %v3102 = vadd.f32 %v3101, %v3089
        %v3103 = vadd.f32 %v3102, %v3090
        %v3104 = vadd.f32 %v3103, %v3091
        %v3105 = vadd.f32 %v3104, %v3092
        %3106 = vadd.xlane.f32.xlu0 %v3105
        %v3107 = vpop.xlane.xlu0 %3106
        %v3108 = vadd.f32 %v3093, %v3094
        %v3109 = vadd.f32 %v3108, %v3095
        %v3110 = vadd.f32 %v3109, %v3096
        %v3111 = vadd.f32 %v3110, %v3097
        %v3112 = vadd.f32 %v3111, %v3098
        %v3113 = vadd.f32 %v3112, %v3099
        %3114 = vadd.xlane.f32.xlu0 %v3113
        %v3115 = vpop.xlane.xlu0 %3114
        %v3116 = vadd.f32 %v3107, %v3115
        %v3117 = vrot.slane %v3116, 4
        %v3118 = vadd.f32 %v3116, %v3117
        %v3119 = vrot.slane %v3118, 2
        %v3120 = vadd.f32 %v3118, %v3119
        %v3121 = vrot.slane %v3120, 1
        %v3122 = vadd.f32 %v3120, %v3121
        %vm3123 = vcmp.eq.s32.totalorder %v349, 6
        %v3124 = vsel %vm3123, %v3122, 0.0
        %v3125 = vadd.f32 %v3070, %v3124
        %s3126 = scalar_lea.vmem [#allocation4], 784
        %v3127 = vld [vmem:[%s3126] sm:$0xff]
        %v3128 = vld [vmem:[%s3126 + $0x8] sm:$0xff]
        %v3129 = vld [vmem:[%s3126 + $0x10] sm:$0xff]
        %v3130 = vld [vmem:[%s3126 + $0x18] sm:$0xff]
        %v3131 = vld [vmem:[%s3126 + $0x20] sm:$0xff]
        %v3132 = vld [vmem:[%s3126 + $0x28] sm:$0xff]
        %v3133 = vld [vmem:[%s3126 + $0x30] sm:$0xff]
        %v3134 = vld [vmem:[%s3126 + $0x38] sm:$0xff]
        %v3135 = vld [vmem:[%s3126 + $0x40] sm:$0xff]
        %v3136 = vld [vmem:[%s3126 + $0x48] sm:$0xff]
        %v3137 = vld [vmem:[%s3126 + $0x50] sm:$0xff]
        %v3138 = vld [vmem:[%s3126 + $0x58] sm:$0xff]
        %v3139 = vld [vmem:[%s3126 + $0x60] sm:$0xff]
        %v3140 = vld [vmem:[%s3126 + $0x68] sm:$0xff]
        %v3141 = vmul.f32 %v2727, %v3127
        %v3142 = vmul.f32 %v2728, %v3128
        %v3143 = vmul.f32 %v2729, %v3129
        %v3144 = vmul.f32 %v2730, %v3130
        %v3145 = vmul.f32 %v2731, %v3131
        %v3146 = vmul.f32 %v2732, %v3132
        %v3147 = vmul.f32 %v2733, %v3133
        %v3148 = vmul.f32 %v2734, %v3134
        %v3149 = vmul.f32 %v2735, %v3135
        %v3150 = vmul.f32 %v2736, %v3136
        %v3151 = vmul.f32 %v2737, %v3137
        %v3152 = vmul.f32 %v2738, %v3138
        %v3153 = vmul.f32 %v2739, %v3139
        %v3154 = vmul.f32 %v2740, %v3140
        %v3155 = vadd.f32 %v3141, %v3142
        %v3156 = vadd.f32 %v3155, %v3143
        %v3157 = vadd.f32 %v3156, %v3144
        %v3158 = vadd.f32 %v3157, %v3145
        %v3159 = vadd.f32 %v3158, %v3146
        %v3160 = vadd.f32 %v3159, %v3147
        %3161 = vadd.xlane.f32.xlu0 %v3160
        %v3162 = vpop.xlane.xlu0 %3161
        %v3163 = vadd.f32 %v3148, %v3149
        %v3164 = vadd.f32 %v3163, %v3150
        %v3165 = vadd.f32 %v3164, %v3151
        %v3166 = vadd.f32 %v3165, %v3152
        %v3167 = vadd.f32 %v3166, %v3153
        %v3168 = vadd.f32 %v3167, %v3154
        %3169 = vadd.xlane.f32.xlu0 %v3168
        %v3170 = vpop.xlane.xlu0 %3169
        %v3171 = vadd.f32 %v3162, %v3170
        %v3172 = vrot.slane %v3171, 4
        %v3173 = vadd.f32 %v3171, %v3172
        %v3174 = vrot.slane %v3173, 2
        %v3175 = vadd.f32 %v3173, %v3174
        %v3176 = vrot.slane %v3175, 1
        %v3177 = vadd.f32 %v3175, %v3176
        %vm3178 = vcmp.eq.s32.totalorder %v349, 7
        %v3179 = vsel %vm3178, %v3177, 0.0
        %v3180 = vadd.f32 %v3125, %v3179
        %s3181 = scalar_lea.vmem [#allocation4], 896
        %v3182 = vld [vmem:[%s3181] sm:$0xff]
        %v3183 = vld [vmem:[%s3181 + $0x8] sm:$0xff]
        %v3184 = vld [vmem:[%s3181 + $0x10] sm:$0xff]
        %v3185 = vld [vmem:[%s3181 + $0x18] sm:$0xff]
        %v3186 = vld [vmem:[%s3181 + $0x20] sm:$0xff]
        %v3187 = vld [vmem:[%s3181 + $0x28] sm:$0xff]
        %v3188 = vld [vmem:[%s3181 + $0x30] sm:$0xff]
        %v3189 = vld [vmem:[%s3181 + $0x38] sm:$0xff]
        %v3190 = vld [vmem:[%s3181 + $0x40] sm:$0xff]
        %v3191 = vld [vmem:[%s3181 + $0x48] sm:$0xff]
        %v3192 = vld [vmem:[%s3181 + $0x50] sm:$0xff]
        %v3193 = vld [vmem:[%s3181 + $0x58] sm:$0xff]
        %v3194 = vld [vmem:[%s3181 + $0x60] sm:$0xff]
        %v3195 = vld [vmem:[%s3181 + $0x68] sm:$0xff]
        %v3196 = vmul.f32 %v2727, %v3182
        %v3197 = vmul.f32 %v2728, %v3183
        %v3198 = vmul.f32 %v2729, %v3184
        %v3199 = vmul.f32 %v2730, %v3185
        %v3200 = vmul.f32 %v2731, %v3186
        %v3201 = vmul.f32 %v2732, %v3187
        %v3202 = vmul.f32 %v2733, %v3188
        %v3203 = vmul.f32 %v2734, %v3189
        %v3204 = vmul.f32 %v2735, %v3190
        %v3205 = vmul.f32 %v2736, %v3191
        %v3206 = vmul.f32 %v2737, %v3192
        %v3207 = vmul.f32 %v2738, %v3193
        %v3208 = vmul.f32 %v2739, %v3194
        %v3209 = vmul.f32 %v2740, %v3195
        %v3210 = vadd.f32 %v3196, %v3197
        %v3211 = vadd.f32 %v3210, %v3198
        %v3212 = vadd.f32 %v3211, %v3199
        %v3213 = vadd.f32 %v3212, %v3200
        %v3214 = vadd.f32 %v3213, %v3201
        %v3215 = vadd.f32 %v3214, %v3202
        %3216 = vadd.xlane.f32.xlu0 %v3215
        %v3217 = vpop.xlane.xlu0 %3216
        %v3218 = vadd.f32 %v3203, %v3204
        %v3219 = vadd.f32 %v3218, %v3205
        %v3220 = vadd.f32 %v3219, %v3206
        %v3221 = vadd.f32 %v3220, %v3207
        %v3222 = vadd.f32 %v3221, %v3208
        %v3223 = vadd.f32 %v3222, %v3209
        %3224 = vadd.xlane.f32.xlu0 %v3223
        %v3225 = vpop.xlane.xlu0 %3224
        %v3226 = vadd.f32 %v3217, %v3225
        %v3227 = vrot.slane %v3226, 4
        %v3228 = vadd.f32 %v3226, %v3227
        %v3229 = vrot.slane %v3228, 2
        %v3230 = vadd.f32 %v3228, %v3229
        %v3231 = vrot.slane %v3230, 1
        %v3232 = vadd.f32 %v3230, %v3231
        %vm3233 = vcmp.eq.s32.totalorder %v349, 8
        %v3234 = vsel %vm3233, %v3232, 0.0
        %v3235 = vadd.f32 %v3180, %v3234
        %s3236 = scalar_lea.vmem [#allocation4], 1008
        %v3237 = vld [vmem:[%s3236] sm:$0xff]
        %v3238 = vld [vmem:[%s3236 + $0x8] sm:$0xff]
        %v3239 = vld [vmem:[%s3236 + $0x10] sm:$0xff]
        %v3240 = vld [vmem:[%s3236 + $0x18] sm:$0xff]
        %v3241 = vld [vmem:[%s3236 + $0x20] sm:$0xff]
        %v3242 = vld [vmem:[%s3236 + $0x28] sm:$0xff]
        %v3243 = vld [vmem:[%s3236 + $0x30] sm:$0xff]
        %v3244 = vld [vmem:[%s3236 + $0x38] sm:$0xff]
        %v3245 = vld [vmem:[%s3236 + $0x40] sm:$0xff]
        %v3246 = vld [vmem:[%s3236 + $0x48] sm:$0xff]
        %v3247 = vld [vmem:[%s3236 + $0x50] sm:$0xff]
        %v3248 = vld [vmem:[%s3236 + $0x58] sm:$0xff]
        %v3249 = vld [vmem:[%s3236 + $0x60] sm:$0xff]
        %v3250 = vld [vmem:[%s3236 + $0x68] sm:$0xff]
        %v3251 = vmul.f32 %v2727, %v3237
        %v3252 = vmul.f32 %v2728, %v3238
        %v3253 = vmul.f32 %v2729, %v3239
        %v3254 = vmul.f32 %v2730, %v3240
        %v3255 = vmul.f32 %v2731, %v3241
        %v3256 = vmul.f32 %v2732, %v3242
        %v3257 = vmul.f32 %v2733, %v3243
        %v3258 = vmul.f32 %v2734, %v3244
        %v3259 = vmul.f32 %v2735, %v3245
        %v3260 = vmul.f32 %v2736, %v3246
        %v3261 = vmul.f32 %v2737, %v3247
        %v3262 = vmul.f32 %v2738, %v3248
        %v3263 = vmul.f32 %v2739, %v3249
        %v3264 = vmul.f32 %v2740, %v3250
        %v3265 = vadd.f32 %v3251, %v3252
        %v3266 = vadd.f32 %v3265, %v3253
        %v3267 = vadd.f32 %v3266, %v3254
        %v3268 = vadd.f32 %v3267, %v3255
        %v3269 = vadd.f32 %v3268, %v3256
        %v3270 = vadd.f32 %v3269, %v3257
        %3271 = vadd.xlane.f32.xlu0 %v3270
        %v3272 = vpop.xlane.xlu0 %3271
        %v3273 = vadd.f32 %v3258, %v3259
        %v3274 = vadd.f32 %v3273, %v3260
        %v3275 = vadd.f32 %v3274, %v3261
        %v3276 = vadd.f32 %v3275, %v3262
        %v3277 = vadd.f32 %v3276, %v3263
        %v3278 = vadd.f32 %v3277, %v3264
        %3279 = vadd.xlane.f32.xlu0 %v3278
        %v3280 = vpop.xlane.xlu0 %3279
        %v3281 = vadd.f32 %v3272, %v3280
        %v3282 = vrot.slane %v3281, 4
        %v3283 = vadd.f32 %v3281, %v3282
        %v3284 = vrot.slane %v3283, 2
        %v3285 = vadd.f32 %v3283, %v3284
        %v3286 = vrot.slane %v3285, 1
        %v3287 = vadd.f32 %v3285, %v3286
        %vm3288 = vcmp.eq.s32.totalorder %v349, 9
        %v3289 = vsel %vm3288, %v3287, 0.0
        %v3290 = vadd.f32 %v3235, %v3289
        %vm3291 = vcmask 73728
        %3292 = vst.msk [vmem:[%s341] sm:$0x1] %vm3291, %v3290
        %s3293 = sand.u32 %s226, 1
        %s3294 = scalar_lea.sflag [#allocation6], %s3293
        %s3295 = sand.u32 %s226, 1
        %s3296 = scalar_lea.vmem [#allocation7], %s3295
        // Predicated region
        $region61: #{test_conv_model.1} parent=55 // pred_check
          %p3297 = pneg %p236
        $region62: #{test_conv_model.1} parent=55 // pred_check_branch
          %3299 = sbr.rel (%p3297) target = $region64
        $region63: #{test_conv_model.1} parent=55 // pred_region
          %3301 = vsyncadd %s3294, 0
          %s3302 = scalar_lea.hbm %s9, %s24
          %s3304 = sshll.u32 %s3296, 4
          %s3305 = int_to_ptr.vmem [resolvable:$true] %s3304
          %s3306 = sshll.u32 %s3302, 4
          %s3307 = int_to_ptr.hbm [resolvable:$true] %s3306
          %3309 = dma.vmem_to_hbm [thread:$0]  %s3305, 16, %s3307, %s3294
        $region64: #{test_conv_model.1} parent=55 // pred_fallthru
          _
      $region56: #{test_conv_model.1} parent=5 // pred_fallthru
        _
      %p3310 = scmp.le.s32.totalorder 2, %s19
      // Predicated region
      $region65: #{test_conv_model.1} parent=5 // pred_check
        %p3311 = pneg %p3310
      $region66: #{test_conv_model.1} parent=5 // pred_check_branch
        %3313 = sbr.rel (%p3311) target = $region68
      $region67: #{test_conv_model.1} parent=5 // pred_region
        %s3314 = ssub.s32 %s19, 2
        // Predicated region
        $region69: #{test_conv_model.1} parent=67 // pred_check
          %p3315 = pneg %p242
        $region70: #{test_conv_model.1} parent=67 // pred_check_branch
          %3317 = sbr.rel (%p3315) target = $region72
        $region71: #{test_conv_model.1} parent=67 // pred_region
          %s3318 = sand.u32 %s227, 1
          %s3319 = scalar_lea.sflag [#allocation6], %s3318
          %s3320 = sand.u32 %s227, 1
          %s3321 = scalar_lea.vmem [#allocation7], %s3320
          %3323 = dma.done %s3319, 16
        $region72: #{test_conv_model.1} parent=67 // pred_fallthru
          _
      $region68: #{test_conv_model.1} parent=5 // pred_fallthru
        _
    $region6: #{test_conv_model.1} parent=1 // loop_footer
      %s23 = sadd.s32 1, %s19
    $region7: #{test_conv_model.1} parent=1 // loop_footer_branch
      %18 = sbr.rel target = $region3
    $region8: #{test_conv_model.1} parent=1 // loop_exit
      _
    %3324 = vsyncpa [#allocation5], 1
    %s3325 = scalar_lea.sflag [#allocation5], 1
    %3326 = vsyncpa %s3325, 1
    %3327 = vsyncpa [#allocation6], 1
    %s3328 = scalar_lea.sflag [#allocation6], 1
    %3329 = vsyncpa %s3328, 1

</llo_original>
